<compile_context>
chip_gen: v7x
topology: tpu7x:2x2x1
jax: 0.10.0
libtpu: 0.0.40
codegen_flags: <defaults>
</compile_context>

<pallas_src>
import functools

import jax
import jax.numpy as jnp
import numpy as np
from jax.experimental import pallas as pl
from jax.experimental.pallas import tpu as pltpu

EPS = 1e-5
LANE = 128          # channel padding target (lane width)
ROW_GRAN = 16       # row granule (safe sublane multiple for f32 and bf16)
MAX_TILE_M = 512    # rows per grid step (sized for v7x 64 MiB VMEM w/ headroom)


def _round_up(x, m):
    return (x + m - 1) // m * m


def _pad2d(a, rows, cols):
    return jnp.pad(a, ((0, rows - a.shape[0]), (0, cols - a.shape[1])))


def _compiler_params():
    return pltpu.CompilerParams(
        dimension_semantics=("parallel",),
        vmem_limit_bytes=32 * 1024 * 1024,
    )


def _row_tiling(m_true):
    m_pad = _round_up(m_true, ROW_GRAN)
    tile_m = min(MAX_TILE_M, m_pad)
    m_pad = _round_up(m_pad, tile_m)
    return m_pad, tile_m, m_pad // tile_m


# ----------------------------- kernel bodies ------------------------------- #

def _mm_stats_kernel(x_ref, sc_ref, sh_ref, w_ref, y_ref, st_ref, *,
                     pre_affine, pre_relu, tile_m, m_true, need_mask):
    """y = (optional pre-BN/ReLU of x) @ w, plus per-column [sum, sum_sq].

    The pre-transform (x*sc + sh, optional ReLU) absorbs the previous layer's
    BatchNorm epilogue so intermediates make only one HBM round trip.
    """
    u = x_ref[...]
    if pre_affine:
        u = u * sc_ref[...] + sh_ref[...]
    if pre_relu:
        u = jnp.maximum(u, 0.0)
    if need_mask:
        # zero padded rows so they do not pollute the batch statistics
        row = (jax.lax.broadcasted_iota(jnp.int32, (tile_m, 1), 0)
               + pl.program_id(0) * tile_m)
        u = jnp.where(row < m_true, u, 0.0)
    y = jnp.dot(u.astype(jnp.bfloat16), w_ref[...],
                preferred_element_type=jnp.float32)
    y_ref[...] = y
    st_ref[0, 0:1, :] = jnp.sum(y, axis=0, keepdims=True)
    st_ref[0, 1:2, :] = jnp.sum(y * y, axis=0, keepdims=True)


def _conv9_stats_kernel(x_ref, w_ref, y_ref, st_ref):
    """3x3 conv as 9 stacked tap-slab matmuls accumulated in registers,
    plus per-column [sum, sum_sq] of the output."""
    acc = jnp.dot(x_ref[0], w_ref[0], preferred_element_type=jnp.float32)
    for t in range(1, 9):
        acc = acc + jnp.dot(x_ref[t], w_ref[t],
                            preferred_element_type=jnp.float32)
    y_ref[...] = acc
    st_ref[0, 0:1, :] = jnp.sum(acc, axis=0, keepdims=True)
    st_ref[0, 1:2, :] = jnp.sum(acc * acc, axis=0, keepdims=True)


def _bn_relu_kernel(y_ref, sc_ref, sh_ref, o_ref):
    o_ref[...] = jnp.maximum(y_ref[...] * sc_ref[...] + sh_ref[...],
                             0.0).astype(o_ref.dtype)


def _bn_add_relu_kernel(y_ref, sc_ref, sh_ref, r_ref, scr_ref, shr_ref, o_ref):
    a = y_ref[...] * sc_ref[...] + sh_ref[...]
    b = r_ref[...] * scr_ref[...] + shr_ref[...]
    o_ref[...] = jnp.maximum(a + b, 0.0)


# ------------------------------ pallas wrappers ----------------------------- #

def matmul_bn_stats(x2d, w_bf16, scale_in=None, shift_in=None, *,
                    pre_relu=False, m_true=None):
    """Row-tiled fused [pre-BN/ReLU] -> matmul -> partial-stats pass."""
    rows, k = x2d.shape
    if m_true is None:
        m_true = rows
    c = w_bf16.shape[1]
    m_pad, tile_m, ntiles = _row_tiling(m_true)
    if rows < m_pad:
        x2d = jnp.pad(x2d, ((0, m_pad - rows), (0, 0)))
    pre_affine = scale_in is not None
    if not pre_affine:
        scale_in = jnp.ones((1, k), jnp.float32)
        shift_in = jnp.zeros((1, k), jnp.float32)
    need_mask = pre_affine and (m_pad != m_true)
    kern = functools.partial(
        _mm_stats_kernel, pre_affine=pre_affine, pre_relu=pre_relu,
        tile_m=tile_m, m_true=m_true, need_mask=need_mask)
    y, st = pl.pallas_call(
        kern,
        grid=(ntiles,),
        in_specs=[
            pl.BlockSpec((tile_m, k), lambda i: (i, 0)),
            pl.BlockSpec((1, k), lambda i: (0, 0)),
            pl.BlockSpec((1, k), lambda i: (0, 0)),
            pl.BlockSpec((k, c), lambda i: (0, 0)),
        ],
        out_specs=(
            pl.BlockSpec((tile_m, c), lambda i: (i, 0)),
            pl.BlockSpec((1, 2, c), lambda i: (i, 0, 0)),
        ),
        out_shape=(
            jax.ShapeDtypeStruct((m_pad, c), jnp.float32),
            jax.ShapeDtypeStruct((ntiles, 2, c), jnp.float32),
        ),
        compiler_params=_compiler_params(),
    )(x2d, scale_in, shift_in, w_bf16)
    return y, jnp.sum(st, axis=0)


def bn_relu(y, scale, shift):
    m_pad, c = y.shape
    tile_m = min(MAX_TILE_M, m_pad)
    ntiles = m_pad // tile_m
    return pl.pallas_call(
        _bn_relu_kernel,
        grid=(ntiles,),
        in_specs=[pl.BlockSpec((tile_m, c), lambda i: (i, 0)),
                  pl.BlockSpec((1, c), lambda i: (0, 0)),
                  pl.BlockSpec((1, c), lambda i: (0, 0))],
        out_specs=pl.BlockSpec((tile_m, c), lambda i: (i, 0)),
        out_shape=jax.ShapeDtypeStruct((m_pad, c), jnp.bfloat16),
        compiler_params=_compiler_params(),
    )(y, scale, shift)


def conv3x3_stats(t_nhwc, w3_taps, stride):
    """3x3 conv, padding=1, given stride, over channel-padded NHWC (bf16).

    The zero-padded activation is sliced into 9 shifted tap slabs (strided
    slicing in the wrapper, no kernel-side reshapes); the kernel accumulates
    the 9 tap matmuls on the MXU and emits per-column [sum, sum_sq].
    """
    n, h, w, c = t_nhwc.shape
    ho = (h - 1) // stride + 1
    wo = (w - 1) // stride + 1
    tp = jnp.pad(t_nhwc, ((0, 0), (1, 1), (1, 1), (0, 0)))
    slabs = []
    for dy in range(3):
        for dx in range(3):
            s = tp[:, dy:dy + stride * (ho - 1) + 1:stride,
                   dx:dx + stride * (wo - 1) + 1:stride, :]
            slabs.append(s.reshape(n * ho * wo, c))
    m_true = n * ho * wo
    m_pad, tile_m, ntiles = _row_tiling(m_true)
    x9 = jnp.stack(slabs, axis=0)                      # (9, M, C) bf16
    if m_pad != m_true:
        x9 = jnp.pad(x9, ((0, 0), (0, m_pad - m_true), (0, 0)))
    y, st = pl.pallas_call(
        _conv9_stats_kernel,
        grid=(ntiles,),
        in_specs=[pl.BlockSpec((9, tile_m, c), lambda i: (0, i, 0)),
                  pl.BlockSpec((9, c, c), lambda i: (0, 0, 0))],
        out_specs=(pl.BlockSpec((tile_m, c), lambda i: (i, 0)),
                   pl.BlockSpec((1, 2, c), lambda i: (i, 0, 0))),
        out_shape=(jax.ShapeDtypeStruct((m_pad, c), jnp.float32),
                   jax.ShapeDtypeStruct((ntiles, 2, c), jnp.float32)),
        compiler_params=_compiler_params(),
    )(x9, w3_taps)
    return y, jnp.sum(st, axis=0), ho, wo


def bn_add_relu(y, scale, shift, res, scale_r, shift_r):
    m_pad, c = y.shape
    tile_m = min(MAX_TILE_M, m_pad)
    ntiles = m_pad // tile_m
    return pl.pallas_call(
        _bn_add_relu_kernel,
        grid=(ntiles,),
        in_specs=[pl.BlockSpec((tile_m, c), lambda i: (i, 0)),
                  pl.BlockSpec((1, c), lambda i: (0, 0)),
                  pl.BlockSpec((1, c), lambda i: (0, 0)),
                  pl.BlockSpec((tile_m, c), lambda i: (i, 0)),
                  pl.BlockSpec((1, c), lambda i: (0, 0)),
                  pl.BlockSpec((1, c), lambda i: (0, 0))],
        out_specs=pl.BlockSpec((tile_m, c), lambda i: (i, 0)),
        out_shape=jax.ShapeDtypeStruct((m_pad, c), jnp.float32),
        compiler_params=_compiler_params(),
    )(y, scale, shift, res, scale_r, shift_r)


def _bn_scale_shift(stats, count, gamma, beta):
    """Fold training-mode BatchNorm (batch stats, biased var) into per-channel
    scale/shift: bn(y) = y*scale + shift (single-traversal statistics)."""
    mean = stats[0] / count
    var = jnp.maximum(stats[1] / count - mean * mean, 0.0)
    scale = gamma * jax.lax.rsqrt(var + EPS)
    shift = beta - mean * scale
    return scale.reshape(1, -1), shift.reshape(1, -1)


# ------------------------- parameters / forward pass ----------------------- #

def init_params(key, input_size, output_size):
    """Deterministic synthetic parameters matching the PyTorch module shapes."""
    inter = output_size // 4
    k1, k3, k2, kd = jax.random.split(key, 4)

    def kaiming(k, shape):  # OIHW conv weights
        fan_in = shape[1] * shape[2] * shape[3]
        return jax.random.normal(k, shape, jnp.float32) * np.sqrt(2.0 / fan_in)

    return dict(
        w1=kaiming(k1, (inter, input_size, 1, 1)),
        w3=kaiming(k3, (inter, inter, 3, 3)),
        w2=kaiming(k2, (output_size, inter, 1, 1)),
        wd=kaiming(kd, (output_size, input_size, 1, 1)),
        # BatchNorm affine params at PyTorch default init (gamma=1, beta=0)
        g1=jnp.ones((1, inter), jnp.float32), b1=jnp.zeros((1, inter), jnp.float32),
        g3=jnp.ones((1, inter), jnp.float32), b3=jnp.zeros((1, inter), jnp.float32),
        g2=jnp.ones((1, output_size), jnp.float32), b2=jnp.zeros((1, output_size), jnp.float32),
        gd=jnp.ones((1, output_size), jnp.float32), bd=jnp.zeros((1, output_size), jnp.float32),
    )


def resnet_unit_forward(x_nchw, params, stride):
    n, cin, h, w = x_nchw.shape
    cmid = params["w1"].shape[0]
    cout = params["w2"].shape[0]
    cin_p = _round_up(cin, LANE)
    cmid_p = _round_up(cmid, LANE)
    cout_p = _round_up(cout, LANE)

    # NHWC + channel padding to a lane multiple -> every kernel is lane-dense.
    # TODO(synk): NCHW<->NHWC conversion is left to XLA; folding it into the
    # first/last kernels' DMA would save one more activation round trip.
    x = jnp.transpose(x_nchw, (0, 2, 3, 1)).astype(jnp.float32)
    x = jnp.pad(x, ((0, 0), (0, 0), (0, 0), (0, cin_p - cin)))
    m1 = n * h * w
    x2d_bf = x.astype(jnp.bfloat16).reshape(m1, cin_p)

    # ---- gconv1x1_before: matmul (+stats), then BN+ReLU -> bf16 ----
    w1 = _pad2d(params["w1"].reshape(cmid, cin).T, cin_p, cmid_p).astype(jnp.bfloat16)
    y1, st1 = matmul_bn_stats(x2d_bf, w1)
    sc1, sh1 = _bn_scale_shift(st1, m1,
                               _pad2d(params["g1"], 1, cmid_p),
                               _pad2d(params["b1"], 1, cmid_p))
    t = bn_relu(y1, sc1, sh1)[:m1].reshape(n, h, w, cmid_p)

    # ---- dwconv3x3: 9-tap stacked-slab conv (+stats), no kernel reshapes ----
    w3 = jnp.transpose(params["w3"], (2, 3, 1, 0)).reshape(9, cmid, cmid)
    w3 = jnp.pad(w3, ((0, 0), (0, cmid_p - cmid), (0, cmid_p - cmid))).astype(jnp.bfloat16)
    y2, st2, ho, wo = conv3x3_stats(t, w3, stride)
    m2 = n * ho * wo
    sc2, sh2 = _bn_scale_shift(st2, m2,
                               _pad2d(params["g3"], 1, cmid_p),
                               _pad2d(params["b3"], 1, cmid_p))

    # ---- gconv1x1_after: layer-2 BN+ReLU fused into this matmul (+stats) ----
    w2 = _pad2d(params["w2"].reshape(cout, cmid).T, cmid_p, cout_p).astype(jnp.bfloat16)
    y3, st3 = matmul_bn_stats(y2, w2, sc2, sh2, pre_relu=True, m_true=m2)
    sc3, sh3 = _bn_scale_shift(st3, m2,
                               _pad2d(params["g2"], 1, cout_p),
                               _pad2d(params["b2"], 1, cout_p))

    # ---- residual path (downsample conv+BN iff shapes differ) ----
    if (cin, h, w) != (cout, ho, wo):
        xd = x[:, ::stride, ::stride, :].astype(jnp.bfloat16).reshape(m2, cin_p)
        wd = _pad2d(params["wd"].reshape(cout, cin).T, cin_p, cout_p).astype(jnp.bfloat16)
        yr, st_d = matmul_bn_stats(xd, wd)
        scr, shr = _bn_scale_shift(st_d, m2,
                                   _pad2d(params["gd"], 1, cout_p),
                                   _pad2d(params["bd"], 1, cout_p))
    else:
        yr = x.reshape(m1, cin_p)
        if yr.shape[0] < y3.shape[0]:
            yr = jnp.pad(yr, ((0, y3.shape[0] - yr.shape[0]), (0, 0)))
        scr = jnp.ones((1, cout_p), jnp.float32)
        shr = jnp.zeros((1, cout_p), jnp.float32)

    # ---- final: BN(main) + BN/identity(residual) + ReLU, fused ----
    out = bn_add_relu(y3, sc3, sh3, yr, scr, shr)
    out = out[:m2, :cout].reshape(n, ho, wo, cout)
    return jnp.transpose(out, (0, 3, 1, 2))                      # back to NCHW


# ------------------------------ pure-JAX reference -------------------------- #

def ref_forward(x, params, stride):
    def bn(y):  # training-mode batch statistics, gamma=1 / beta=0
        mean = jnp.mean(y, axis=(0, 2, 3), keepdims=True)
        var = jnp.mean(jnp.square(y - mean), axis=(0, 2, 3), keepdims=True)
        return (y - mean) * jax.lax.rsqrt(var + EPS)

    def conv(a, wgt, s, p):
        return jax.lax.conv_general_dilated(
            a, wgt, (s, s), [(p, p), (p, p)],
            dimension_numbers=("NCHW", "OIHW", "NCHW"),
            precision=jax.lax.Precision.HIGHEST)

    out = jax.nn.relu(bn(conv(x, params["w1"], 1, 0)))
    out = jax.nn.relu(bn(conv(out, params["w3"], stride, 1)))
    out = bn(conv(out, params["w2"], 1, 0))
    if x.shape != out.shape:
        x = bn(conv(x, params["wd"], stride, 0))
    return jax.nn.relu(out + x)


if __name__ == "__main__":
    key = jax.random.PRNGKey(0)
    kx, kp = jax.random.split(key)

    N, Cin, H, W = 2, 8, 16, 16
    Cout, stride = 16, 2           # intermediate = Cout // 4 = 4

    x = jax.random.normal(kx, (N, Cin, H, W), jnp.float32)
    params = init_params(kp, Cin, Cout)

    fwd = jax.jit(functools.partial(resnet_unit_forward, stride=stride))
    out = jax.block_until_ready(fwd(x, params))

    ref = ref_forward(x, params, stride)
    # bf16 MXU inputs (f32 accumulation) vs. f32 HIGHEST-precision reference
    np.testing.assert_allclose(np.asarray(out), np.asarray(ref),
                               atol=8e-2, rtol=8e-2)
    print("KERNEL_OK")
</pallas_src>

<mosaic_0001>
module attributes {stable_mosaic.version = 11 : i64} {
  func.func @_mm_stats_kernel(%arg0: i32, %arg1: memref<512x128xbf16, #tpu.memory_space<vmem>>, %arg2: memref<1x128xf32, #tpu.memory_space<vmem>>, %arg3: memref<1x128xf32, #tpu.memory_space<vmem>>, %arg4: memref<128x128xbf16, #tpu.memory_space<vmem>>, %arg5: memref<512x128xf32, #tpu.memory_space<vmem>>, %arg6: memref<1x2x128xf32, #tpu.memory_space<vmem>>) attributes {dimension_semantics = [#tpu.dimension_semantics<parallel>], iteration_bounds = array<i64: 1>, scalar_prefetch = 0 : i64, scratch_operands = 0 : i64, tpu.core_type = #tpu.core_type<tc>, window_params = [{transform_indices = @transform_0, window_bounds = array<i64: 512, 128>}, {pipeline_mode = #tpu.pipeline_mode<synchronous>, transform_indices = @transform_1, window_bounds = array<i64: 1, 128>}, {pipeline_mode = #tpu.pipeline_mode<synchronous>, transform_indices = @transform_2, window_bounds = array<i64: 1, 128>}, {pipeline_mode = #tpu.pipeline_mode<synchronous>, transform_indices = @transform_3, window_bounds = array<i64: 128, 128>}, {transform_indices = @transform_4, window_bounds = array<i64: 512, 128>}, {transform_indices = @transform_5, window_bounds = array<i64: 1, 2, 128>}]} {
    %c0 = arith.constant 0 : index
    %c0_0 = arith.constant 0 : index
    %0 = vector.load %arg1[%c0, %c0_0] : memref<512x128xbf16, #tpu.memory_space<vmem>>, vector<512x128xbf16>
    %c0_1 = arith.constant 0 : index
    %c0_2 = arith.constant 0 : index
    %1 = vector.load %arg4[%c0_1, %c0_2] : memref<128x128xbf16, #tpu.memory_space<vmem>>, vector<128x128xbf16>
    %cst = arith.constant dense<0.000000e+00> : vector<512x128xf32>
    %2 = tpu.matmul %0, %1, %cst {dimension_numbers = #tpu.dot_dimension_numbers<[1], [0], [0], [1], [0, 0, 1, 1], [], []>} : vector<512x128xbf16>, vector<128x128xbf16>, vector<512x128xf32> -> vector<512x128xf32>
    %c0_3 = arith.constant 0 : index
    %c0_4 = arith.constant 0 : index
    %3 = vector.load %arg5[%c0_3, %c0_4] : memref<512x128xf32, #tpu.memory_space<vmem>>, vector<512x128xf32>
    tpu.vector_store %arg5[%c0_3, %c0_4], %2 {strides = array<i32>} : memref<512x128xf32, #tpu.memory_space<vmem>>, vector<512x128xf32>,
    %cst_5 = arith.constant dense<0.000000e+00> : vector<128xf32>
    %4 = vector.multi_reduction <add>, %2, %cst_5 [0] : vector<512x128xf32> to vector<128xf32>
    %5 = vector.shape_cast %4 : vector<128xf32> to vector<1x128xf32>
    %c0_6 = arith.constant 0 : index
    %c0_7 = arith.constant 0 : index
    %c0_8 = arith.constant 0 : index
    %6 = vector.load %arg6[%c0_6, %c0_7, %c0_8] : memref<1x2x128xf32, #tpu.memory_space<vmem>>, vector<1x1x128xf32>
    %7 = vector.shape_cast %6 : vector<1x1x128xf32> to vector<1x128xf32>
    %8 = vector.shape_cast %5 : vector<1x128xf32> to vector<1x1x128xf32>
    tpu.vector_store %arg6[%c0_6, %c0_7, %c0_8], %8 {strides = array<i32>} : memref<1x2x128xf32, #tpu.memory_space<vmem>>, vector<1x1x128xf32>,
    %9 = arith.mulf %2, %2 : vector<512x128xf32>
    %cst_9 = arith.constant dense<0.000000e+00> : vector<128xf32>
    %10 = vector.multi_reduction <add>, %9, %cst_9 [0] : vector<512x128xf32> to vector<128xf32>
    %11 = vector.shape_cast %10 : vector<128xf32> to vector<1x128xf32>
    %c0_10 = arith.constant 0 : index
    %c1 = arith.constant 1 : index
    %c0_11 = arith.constant 0 : index
    %12 = vector.load %arg6[%c0_10, %c1, %c0_11] : memref<1x2x128xf32, #tpu.memory_space<vmem>>, vector<1x1x128xf32>
    %13 = vector.shape_cast %12 : vector<1x1x128xf32> to vector<1x128xf32>
    %14 = vector.shape_cast %11 : vector<1x128xf32> to vector<1x1x128xf32>
    tpu.vector_store %arg6[%c0_10, %c1, %c0_11], %14 {strides = array<i32>} : memref<1x2x128xf32, #tpu.memory_space<vmem>>, vector<1x1x128xf32>,
    return
  }
  func.func @transform_0(%arg0: i32) -> (i32, i32) {
    %c0_i32 = arith.constant 0 : i32
    %c0_i32_0 = arith.constant 0 : i32
    return %arg0, %c0_i32 : i32, i32
  }
  func.func @transform_1(%arg0: i32) -> (i32, i32) {
    %c0_i32 = arith.constant 0 : i32
    %c0_i32_0 = arith.constant 0 : i32
    %c0_i32_1 = arith.constant 0 : i32
    return %c0_i32, %c0_i32_0 : i32, i32
  }
  func.func @transform_2(%arg0: i32) -> (i32, i32) {
    %c0_i32 = arith.constant 0 : i32
    %c0_i32_0 = arith.constant 0 : i32
    %c0_i32_1 = arith.constant 0 : i32
    return %c0_i32, %c0_i32_0 : i32, i32
  }
  func.func @transform_3(%arg0: i32) -> (i32, i32) {
    %c0_i32 = arith.constant 0 : i32
    %c0_i32_0 = arith.constant 0 : i32
    %c0_i32_1 = arith.constant 0 : i32
    return %c0_i32, %c0_i32_0 : i32, i32
  }
  func.func @transform_4(%arg0: i32) -> (i32, i32) {
    %c0_i32 = arith.constant 0 : i32
    %c0_i32_0 = arith.constant 0 : i32
    return %arg0, %c0_i32 : i32, i32
  }
  func.func @transform_5(%arg0: i32) -> (i32, i32, i32) {
    %c0_i32 = arith.constant 0 : i32
    %c0_i32_0 = arith.constant 0 : i32
    %c0_i32_1 = arith.constant 0 : i32
    return %arg0, %c0_i32, %c0_i32_0 : i32, i32, i32
  }
}

module attributes {stable_mosaic.version = 11 : i64} {
  func.func @_bn_relu_kernel(%arg0: i32, %arg1: memref<512x128xf32, #tpu.memory_space<vmem>>, %arg2: memref<1x128xf32, #tpu.memory_space<vmem>>, %arg3: memref<1x128xf32, #tpu.memory_space<vmem>>, %arg4: memref<512x128xbf16, #tpu.memory_space<vmem>>) attributes {dimension_semantics = [#tpu.dimension_semantics<parallel>], iteration_bounds = array<i64: 1>, scalar_prefetch = 0 : i64, scratch_operands = 0 : i64, tpu.core_type = #tpu.core_type<tc>, window_params = [{transform_indices = @transform_0, window_bounds = array<i64: 512, 128>}, {pipeline_mode = #tpu.pipeline_mode<synchronous>, transform_indices = @transform_1, window_bounds = array<i64: 1, 128>}, {pipeline_mode = #tpu.pipeline_mode<synchronous>, transform_indices = @transform_2, window_bounds = array<i64: 1, 128>}, {transform_indices = @transform_3, window_bounds = array<i64: 512, 128>}]} {
    %c0 = arith.constant 0 : index
    %c0_0 = arith.constant 0 : index
    %0 = vector.load %arg1[%c0, %c0_0] : memref<512x128xf32, #tpu.memory_space<vmem>>, vector<512x128xf32>
    %c0_1 = arith.constant 0 : index
    %c0_2 = arith.constant 0 : index
    %1 = vector.load %arg2[%c0_1, %c0_2] : memref<1x128xf32, #tpu.memory_space<vmem>>, vector<1x128xf32>
    %2 = vector.broadcast %1 : vector<1x128xf32> to vector<512x128xf32>
    %3 = arith.mulf %0, %2 : vector<512x128xf32>
    %c0_3 = arith.constant 0 : index
    %c0_4 = arith.constant 0 : index
    %4 = vector.load %arg3[%c0_3, %c0_4] : memref<1x128xf32, #tpu.memory_space<vmem>>, vector<1x128xf32>
    %5 = vector.broadcast %4 : vector<1x128xf32> to vector<512x128xf32>
    %6 = arith.addf %3, %5 : vector<512x128xf32>
    %cst = arith.constant 0.000000e+00 : f32
    %7 = vector.broadcast %cst : f32 to vector<512x128xf32>
    %8 = arith.maximumf %6, %7 : vector<512x128xf32>
    %9 = arith.truncf %8 : vector<512x128xf32> to vector<512x128xbf16>
    %c0_5 = arith.constant 0 : index
    %c0_6 = arith.constant 0 : index
    %10 = vector.load %arg4[%c0_5, %c0_6] : memref<512x128xbf16, #tpu.memory_space<vmem>>, vector<512x128xbf16>
    tpu.vector_store %arg4[%c0_5, %c0_6], %9 {strides = array<i32>} : memref<512x128xbf16, #tpu.memory_space<vmem>>, vector<512x128xbf16>,
    return
  }
  func.func @transform_0(%arg0: i32) -> (i32, i32) {
    %c0_i32 = arith.constant 0 : i32
    %c0_i32_0 = arith.constant 0 : i32
    return %arg0, %c0_i32 : i32, i32
  }
  func.func @transform_1(%arg0: i32) -> (i32, i32) {
    %c0_i32 = arith.constant 0 : i32
    %c0_i32_0 = arith.constant 0 : i32
    %c0_i32_1 = arith.constant 0 : i32
    return %c0_i32, %c0_i32_0 : i32, i32
  }
  func.func @transform_2(%arg0: i32) -> (i32, i32) {
    %c0_i32 = arith.constant 0 : i32
    %c0_i32_0 = arith.constant 0 : i32
    %c0_i32_1 = arith.constant 0 : i32
    return %c0_i32, %c0_i32_0 : i32, i32
  }
  func.func @transform_3(%arg0: i32) -> (i32, i32) {
    %c0_i32 = arith.constant 0 : i32
    %c0_i32_0 = arith.constant 0 : i32
    return %arg0, %c0_i32 : i32, i32
  }
}

module attributes {stable_mosaic.version = 11 : i64} {
  func.func @_conv9_stats_kernel(%arg0: i32, %arg1: memref<9x128x128xbf16, #tpu.memory_space<vmem>>, %arg2: memref<9x128x128xbf16, #tpu.memory_space<vmem>>, %arg3: memref<128x128xf32, #tpu.memory_space<vmem>>, %arg4: memref<1x2x128xf32, #tpu.memory_space<vmem>>) attributes {dimension_semantics = [#tpu.dimension_semantics<parallel>], iteration_bounds = array<i64: 1>, scalar_prefetch = 0 : i64, scratch_operands = 0 : i64, tpu.core_type = #tpu.core_type<tc>, window_params = [{transform_indices = @transform_0, window_bounds = array<i64: 9, 128, 128>}, {pipeline_mode = #tpu.pipeline_mode<synchronous>, transform_indices = @transform_1, window_bounds = array<i64: 9, 128, 128>}, {transform_indices = @transform_2, window_bounds = array<i64: 128, 128>}, {transform_indices = @transform_3, window_bounds = array<i64: 1, 2, 128>}]} {
    %c0 = arith.constant 0 : index
    %c0_0 = arith.constant 0 : index
    %c0_1 = arith.constant 0 : index
    %0 = vector.load %arg1[%c0, %c0_0, %c0_1] : memref<9x128x128xbf16, #tpu.memory_space<vmem>>, vector<1x128x128xbf16>
    %1 = vector.shape_cast %0 : vector<1x128x128xbf16> to vector<128x128xbf16>
    %c0_2 = arith.constant 0 : index
    %c0_3 = arith.constant 0 : index
    %c0_4 = arith.constant 0 : index
    %2 = vector.load %arg2[%c0_2, %c0_3, %c0_4] : memref<9x128x128xbf16, #tpu.memory_space<vmem>>, vector<1x128x128xbf16>
    %3 = vector.shape_cast %2 : vector<1x128x128xbf16> to vector<128x128xbf16>
    %cst = arith.constant dense<0.000000e+00> : vector<128x128xf32>
    %4 = tpu.matmul %1, %3, %cst {dimension_numbers = #tpu.dot_dimension_numbers<[1], [0], [0], [1], [0, 0, 1, 1], [], []>} : vector<128x128xbf16>, vector<128x128xbf16>, vector<128x128xf32> -> vector<128x128xf32>
    %c1 = arith.constant 1 : index
    %c0_5 = arith.constant 0 : index
    %c0_6 = arith.constant 0 : index
    %5 = vector.load %arg1[%c1, %c0_5, %c0_6] : memref<9x128x128xbf16, #tpu.memory_space<vmem>>, vector<1x128x128xbf16>
    %6 = vector.shape_cast %5 : vector<1x128x128xbf16> to vector<128x128xbf16>
    %c1_7 = arith.constant 1 : index
    %c0_8 = arith.constant 0 : index
    %c0_9 = arith.constant 0 : index
    %7 = vector.load %arg2[%c1_7, %c0_8, %c0_9] : memref<9x128x128xbf16, #tpu.memory_space<vmem>>, vector<1x128x128xbf16>
    %8 = vector.shape_cast %7 : vector<1x128x128xbf16> to vector<128x128xbf16>
    %cst_10 = arith.constant dense<0.000000e+00> : vector<128x128xf32>
    %9 = tpu.matmul %6, %8, %cst_10 {dimension_numbers = #tpu.dot_dimension_numbers<[1], [0], [0], [1], [0, 0, 1, 1], [], []>} : vector<128x128xbf16>, vector<128x128xbf16>, vector<128x128xf32> -> vector<128x128xf32>
    %10 = arith.addf %4, %9 : vector<128x128xf32>
    %c2 = arith.constant 2 : index
    %c0_11 = arith.constant 0 : index
    %c0_12 = arith.constant 0 : index
    %11 = vector.load %arg1[%c2, %c0_11, %c0_12] : memref<9x128x128xbf16, #tpu.memory_space<vmem>>, vector<1x128x128xbf16>
    %12 = vector.shape_cast %11 : vector<1x128x128xbf16> to vector<128x128xbf16>
    %c2_13 = arith.constant 2 : index
    %c0_14 = arith.constant 0 : index
    %c0_15 = arith.constant 0 : index
    %13 = vector.load %arg2[%c2_13, %c0_14, %c0_15] : memref<9x128x128xbf16, #tpu.memory_space<vmem>>, vector<1x128x128xbf16>
    %14 = vector.shape_cast %13 : vector<1x128x128xbf16> to vector<128x128xbf16>
    %cst_16 = arith.constant dense<0.000000e+00> : vector<128x128xf32>
    %15 = tpu.matmul %12, %14, %cst_16 {dimension_numbers = #tpu.dot_dimension_numbers<[1], [0], [0], [1], [0, 0, 1, 1], [], []>} : vector<128x128xbf16>, vector<128x128xbf16>, vector<128x128xf32> -> vector<128x128xf32>
    %16 = arith.addf %10, %15 : vector<128x128xf32>
    %c3 = arith.constant 3 : index
    %c0_17 = arith.constant 0 : index
    %c0_18 = arith.constant 0 : index
    %17 = vector.load %arg1[%c3, %c0_17, %c0_18] : memref<9x128x128xbf16, #tpu.memory_space<vmem>>, vector<1x128x128xbf16>
    %18 = vector.shape_cast %17 : vector<1x128x128xbf16> to vector<128x128xbf16>
    %c3_19 = arith.constant 3 : index
    %c0_20 = arith.constant 0 : index
    %c0_21 = arith.constant 0 : index
    %19 = vector.load %arg2[%c3_19, %c0_20, %c0_21] : memref<9x128x128xbf16, #tpu.memory_space<vmem>>, vector<1x128x128xbf16>
    %20 = vector.shape_cast %19 : vector<1x128x128xbf16> to vector<128x128xbf16>
    %cst_22 = arith.constant dense<0.000000e+00> : vector<128x128xf32>
    %21 = tpu.matmul %18, %20, %cst_22 {dimension_numbers = #tpu.dot_dimension_numbers<[1], [0], [0], [1], [0, 0, 1, 1], [], []>} : vector<128x128xbf16>, vector<128x128xbf16>, vector<128x128xf32> -> vector<128x128xf32>
    %22 = arith.addf %16, %21 : vector<128x128xf32>
    %c4 = arith.constant 4 : index
    %c0_23 = arith.constant 0 : index
    %c0_24 = arith.constant 0 : index
    %23 = vector.load %arg1[%c4, %c0_23, %c0_24] : memref<9x128x128xbf16, #tpu.memory_space<vmem>>, vector<1x128x128xbf16>
    %24 = vector.shape_cast %23 : vector<1x128x128xbf16> to vector<128x128xbf16>
    %c4_25 = arith.constant 4 : index
    %c0_26 = arith.constant 0 : index
    %c0_27 = arith.constant 0 : index
    %25 = vector.load %arg2[%c4_25, %c0_26, %c0_27] : memref<9x128x128xbf16, #tpu.memory_space<vmem>>, vector<1x128x128xbf16>
    %26 = vector.shape_cast %25 : vector<1x128x128xbf16> to vector<128x128xbf16>
    %cst_28 = arith.constant dense<0.000000e+00> : vector<128x128xf32>
    %27 = tpu.matmul %24, %26, %cst_28 {dimension_numbers = #tpu.dot_dimension_numbers<[1], [0], [0], [1], [0, 0, 1, 1], [], []>} : vector<128x128xbf16>, vector<128x128xbf16>, vector<128x128xf32> -> vector<128x128xf32>
    %28 = arith.addf %22, %27 : vector<128x128xf32>
    %c5 = arith.constant 5 : index
    %c0_29 = arith.constant 0 : index
    %c0_30 = arith.constant 0 : index
    %29 = vector.load %arg1[%c5, %c0_29, %c0_30] : memref<9x128x128xbf16, #tpu.memory_space<vmem>>, vector<1x128x128xbf16>
    %30 = vector.shape_cast %29 : vector<1x128x128xbf16> to vector<128x128xbf16>
    %c5_31 = arith.constant 5 : index
    %c0_32 = arith.constant 0 : index
    %c0_33 = arith.constant 0 : index
    %31 = vector.load %arg2[%c5_31, %c0_32, %c0_33] : memref<9x128x128xbf16, #tpu.memory_space<vmem>>, vector<1x128x128xbf16>
    %32 = vector.shape_cast %31 : vector<1x128x128xbf16> to vector<128x128xbf16>
    %cst_34 = arith.constant dense<0.000000e+00> : vector<128x128xf32>
    %33 = tpu.matmul %30, %32, %cst_34 {dimension_numbers = #tpu.dot_dimension_numbers<[1], [0], [0], [1], [0, 0, 1, 1], [], []>} : vector<128x128xbf16>, vector<128x128xbf16>, vector<128x128xf32> -> vector<128x128xf32>
    %34 = arith.addf %28, %33 : vector<128x128xf32>
    %c6 = arith.constant 6 : index
    %c0_35 = arith.constant 0 : index
    %c0_36 = arith.constant 0 : index
    %35 = vector.load %arg1[%c6, %c0_35, %c0_36] : memref<9x128x128xbf16, #tpu.memory_space<vmem>>, vector<1x128x128xbf16>
    %36 = vector.shape_cast %35 : vector<1x128x128xbf16> to vector<128x128xbf16>
    %c6_37 = arith.constant 6 : index
    %c0_38 = arith.constant 0 : index
    %c0_39 = arith.constant 0 : index
    %37 = vector.load %arg2[%c6_37, %c0_38, %c0_39] : memref<9x128x128xbf16, #tpu.memory_space<vmem>>, vector<1x128x128xbf16>
    %38 = vector.shape_cast %37 : vector<1x128x128xbf16> to vector<128x128xbf16>
    %cst_40 = arith.constant dense<0.000000e+00> : vector<128x128xf32>
    %39 = tpu.matmul %36, %38, %cst_40 {dimension_numbers = #tpu.dot_dimension_numbers<[1], [0], [0], [1], [0, 0, 1, 1], [], []>} : vector<128x128xbf16>, vector<128x128xbf16>, vector<128x128xf32> -> vector<128x128xf32>
    %40 = arith.addf %34, %39 : vector<128x128xf32>
    %c7 = arith.constant 7 : index
    %c0_41 = arith.constant 0 : index
    %c0_42 = arith.constant 0 : index
    %41 = vector.load %arg1[%c7, %c0_41, %c0_42] : memref<9x128x128xbf16, #tpu.memory_space<vmem>>, vector<1x128x128xbf16>
    %42 = vector.shape_cast %41 : vector<1x128x128xbf16> to vector<128x128xbf16>
    %c7_43 = arith.constant 7 : index
    %c0_44 = arith.constant 0 : index
    %c0_45 = arith.constant 0 : index
    %43 = vector.load %arg2[%c7_43, %c0_44, %c0_45] : memref<9x128x128xbf16, #tpu.memory_space<vmem>>, vector<1x128x128xbf16>
    %44 = vector.shape_cast %43 : vector<1x128x128xbf16> to vector<128x128xbf16>
    %cst_46 = arith.constant dense<0.000000e+00> : vector<128x128xf32>
    %45 = tpu.matmul %42, %44, %cst_46 {dimension_numbers = #tpu.dot_dimension_numbers<[1], [0], [0], [1], [0, 0, 1, 1], [], []>} : vector<128x128xbf16>, vector<128x128xbf16>, vector<128x128xf32> -> vector<128x128xf32>
    %46 = arith.addf %40, %45 : vector<128x128xf32>
    %c8 = arith.constant 8 : index
    %c0_47 = arith.constant 0 : index
    %c0_48 = arith.constant 0 : index
    %47 = vector.load %arg1[%c8, %c0_47, %c0_48] : memref<9x128x128xbf16, #tpu.memory_space<vmem>>, vector<1x128x128xbf16>
    %48 = vector.shape_cast %47 : vector<1x128x128xbf16> to vector<128x128xbf16>
    %c8_49 = arith.constant 8 : index
    %c0_50 = arith.constant 0 : index
    %c0_51 = arith.constant 0 : index
    %49 = vector.load %arg2[%c8_49, %c0_50, %c0_51] : memref<9x128x128xbf16, #tpu.memory_space<vmem>>, vector<1x128x128xbf16>
    %50 = vector.shape_cast %49 : vector<1x128x128xbf16> to vector<128x128xbf16>
    %cst_52 = arith.constant dense<0.000000e+00> : vector<128x128xf32>
    %51 = tpu.matmul %48, %50, %cst_52 {dimension_numbers = #tpu.dot_dimension_numbers<[1], [0], [0], [1], [0, 0, 1, 1], [], []>} : vector<128x128xbf16>, vector<128x128xbf16>, vector<128x128xf32> -> vector<128x128xf32>
    %52 = arith.addf %46, %51 : vector<128x128xf32>
    %c0_53 = arith.constant 0 : index
    %c0_54 = arith.constant 0 : index
    %53 = vector.load %arg3[%c0_53, %c0_54] : memref<128x128xf32, #tpu.memory_space<vmem>>, vector<128x128xf32>
    tpu.vector_store %arg3[%c0_53, %c0_54], %52 {strides = array<i32>} : memref<128x128xf32, #tpu.memory_space<vmem>>, vector<128x128xf32>,
    %cst_55 = arith.constant dense<0.000000e+00> : vector<128xf32>
    %54 = vector.multi_reduction <add>, %52, %cst_55 [0] : vector<128x128xf32> to vector<128xf32>
    %55 = vector.shape_cast %54 : vector<128xf32> to vector<1x128xf32>
    %c0_56 = arith.constant 0 : index
    %c0_57 = arith.constant 0 : index
    %c0_58 = arith.constant 0 : index
    %56 = vector.load %arg4[%c0_56, %c0_57, %c0_58] : memref<1x2x128xf32, #tpu.memory_space<vmem>>, vector<1x1x128xf32>
    %57 = vector.shape_cast %56 : vector<1x1x128xf32> to vector<1x128xf32>
    %58 = vector.shape_cast %55 : vector<1x128xf32> to vector<1x1x128xf32>
    tpu.vector_store %arg4[%c0_56, %c0_57, %c0_58], %58 {strides = array<i32>} : memref<1x2x128xf32, #tpu.memory_space<vmem>>, vector<1x1x128xf32>,
    %59 = arith.mulf %52, %52 : vector<128x128xf32>
    %cst_59 = arith.constant dense<0.000000e+00> : vector<128xf32>
    %60 = vector.multi_reduction <add>, %59, %cst_59 [0] : vector<128x128xf32> to vector<128xf32>
    %61 = vector.shape_cast %60 : vector<128xf32> to vector<1x128xf32>
    %c0_60 = arith.constant 0 : index
    %c1_61 = arith.constant 1 : index
    %c0_62 = arith.constant 0 : index
    %62 = vector.load %arg4[%c0_60, %c1_61, %c0_62] : memref<1x2x128xf32, #tpu.memory_space<vmem>>, vector<1x1x128xf32>
    %63 = vector.shape_cast %62 : vector<1x1x128xf32> to vector<1x128xf32>
    %64 = vector.shape_cast %61 : vector<1x128xf32> to vector<1x1x128xf32>
    tpu.vector_store %arg4[%c0_60, %c1_61, %c0_62], %64 {strides = array<i32>} : memref<1x2x128xf32, #tpu.memory_space<vmem>>, vector<1x1x128xf32>,
    return
  }
  func.func @transform_0(%arg0: i32) -> (i32, i32, i32) {
    %c0_i32 = arith.constant 0 : i32
    %c0_i32_0 = arith.constant 0 : i32
    %c0_i32_1 = arith.constant 0 : i32
    return %c0_i32, %arg0, %c0_i32_0 : i32, i32, i32
  }
  func.func @transform_1(%arg0: i32) -> (i32, i32, i32) {
    %c0_i32 = arith.constant 0 : i32
    %c0_i32_0 = arith.constant 0 : i32
    %c0_i32_1 = arith.constant 0 : i32
    %c0_i32_2 = arith.constant 0 : i32
    return %c0_i32, %c0_i32_0, %c0_i32_1 : i32, i32, i32
  }
  func.func @transform_2(%arg0: i32) -> (i32, i32) {
    %c0_i32 = arith.constant 0 : i32
    %c0_i32_0 = arith.constant 0 : i32
    return %arg0, %c0_i32 : i32, i32
  }
  func.func @transform_3(%arg0: i32) -> (i32, i32, i32) {
    %c0_i32 = arith.constant 0 : i32
    %c0_i32_0 = arith.constant 0 : i32
    %c0_i32_1 = arith.constant 0 : i32
    return %arg0, %c0_i32, %c0_i32_0 : i32, i32, i32
  }
}

module attributes {stable_mosaic.version = 11 : i64} {
  func.func @_mm_stats_kernel(%arg0: i32, %arg1: memref<128x128xf32, #tpu.memory_space<vmem>>, %arg2: memref<1x128xf32, #tpu.memory_space<vmem>>, %arg3: memref<1x128xf32, #tpu.memory_space<vmem>>, %arg4: memref<128x128xbf16, #tpu.memory_space<vmem>>, %arg5: memref<128x128xf32, #tpu.memory_space<vmem>>, %arg6: memref<1x2x128xf32, #tpu.memory_space<vmem>>) attributes {dimension_semantics = [#tpu.dimension_semantics<parallel>], iteration_bounds = array<i64: 1>, scalar_prefetch = 0 : i64, scratch_operands = 0 : i64, tpu.core_type = #tpu.core_type<tc>, window_params = [{transform_indices = @transform_0, window_bounds = array<i64: 128, 128>}, {pipeline_mode = #tpu.pipeline_mode<synchronous>, transform_indices = @transform_1, window_bounds = array<i64: 1, 128>}, {pipeline_mode = #tpu.pipeline_mode<synchronous>, transform_indices = @transform_2, window_bounds = array<i64: 1, 128>}, {pipeline_mode = #tpu.pipeline_mode<synchronous>, transform_indices = @transform_3, window_bounds = array<i64: 128, 128>}, {transform_indices = @transform_4, window_bounds = array<i64: 128, 128>}, {transform_indices = @transform_5, window_bounds = array<i64: 1, 2, 128>}]} {
    %c0 = arith.constant 0 : index
    %c0_0 = arith.constant 0 : index
    %0 = vector.load %arg1[%c0, %c0_0] : memref<128x128xf32, #tpu.memory_space<vmem>>, vector<128x128xf32>
    %c0_1 = arith.constant 0 : index
    %c0_2 = arith.constant 0 : index
    %1 = vector.load %arg2[%c0_1, %c0_2] : memref<1x128xf32, #tpu.memory_space<vmem>>, vector<1x128xf32>
    %2 = vector.broadcast %1 : vector<1x128xf32> to vector<128x128xf32>
    %3 = arith.mulf %0, %2 : vector<128x128xf32>
    %c0_3 = arith.constant 0 : index
    %c0_4 = arith.constant 0 : index
    %4 = vector.load %arg3[%c0_3, %c0_4] : memref<1x128xf32, #tpu.memory_space<vmem>>, vector<1x128xf32>
    %5 = vector.broadcast %4 : vector<1x128xf32> to vector<128x128xf32>
    %6 = arith.addf %3, %5 : vector<128x128xf32>
    %cst = arith.constant 0.000000e+00 : f32
    %7 = vector.broadcast %cst : f32 to vector<128x128xf32>
    %8 = arith.maximumf %6, %7 : vector<128x128xf32>
    %9 = arith.truncf %8 : vector<128x128xf32> to vector<128x128xbf16>
    %c0_5 = arith.constant 0 : index
    %c0_6 = arith.constant 0 : index
    %10 = vector.load %arg4[%c0_5, %c0_6] : memref<128x128xbf16, #tpu.memory_space<vmem>>, vector<128x128xbf16>
    %cst_7 = arith.constant dense<0.000000e+00> : vector<128x128xf32>
    %11 = tpu.matmul %9, %10, %cst_7 {dimension_numbers = #tpu.dot_dimension_numbers<[1], [0], [0], [1], [0, 0, 1, 1], [], []>} : vector<128x128xbf16>, vector<128x128xbf16>, vector<128x128xf32> -> vector<128x128xf32>
    %c0_8 = arith.constant 0 : index
    %c0_9 = arith.constant 0 : index
    %12 = vector.load %arg5[%c0_8, %c0_9] : memref<128x128xf32, #tpu.memory_space<vmem>>, vector<128x128xf32>
    tpu.vector_store %arg5[%c0_8, %c0_9], %11 {strides = array<i32>} : memref<128x128xf32, #tpu.memory_space<vmem>>, vector<128x128xf32>,
    %cst_10 = arith.constant dense<0.000000e+00> : vector<128xf32>
    %13 = vector.multi_reduction <add>, %11, %cst_10 [0] : vector<128x128xf32> to vector<128xf32>
    %14 = vector.shape_cast %13 : vector<128xf32> to vector<1x128xf32>
    %c0_11 = arith.constant 0 : index
    %c0_12 = arith.constant 0 : index
    %c0_13 = arith.constant 0 : index
    %15 = vector.load %arg6[%c0_11, %c0_12, %c0_13] : memref<1x2x128xf32, #tpu.memory_space<vmem>>, vector<1x1x128xf32>
    %16 = vector.shape_cast %15 : vector<1x1x128xf32> to vector<1x128xf32>
    %17 = vector.shape_cast %14 : vector<1x128xf32> to vector<1x1x128xf32>
    tpu.vector_store %arg6[%c0_11, %c0_12, %c0_13], %17 {strides = array<i32>} : memref<1x2x128xf32, #tpu.memory_space<vmem>>, vector<1x1x128xf32>,
    %18 = arith.mulf %11, %11 : vector<128x128xf32>
    %cst_14 = arith.constant dense<0.000000e+00> : vector<128xf32>
    %19 = vector.multi_reduction <add>, %18, %cst_14 [0] : vector<128x128xf32> to vector<128xf32>
    %20 = vector.shape_cast %19 : vector<128xf32> to vector<1x128xf32>
    %c0_15 = arith.constant 0 : index
    %c1 = arith.constant 1 : index
    %c0_16 = arith.constant 0 : index
    %21 = vector.load %arg6[%c0_15, %c1, %c0_16] : memref<1x2x128xf32, #tpu.memory_space<vmem>>, vector<1x1x128xf32>
    %22 = vector.shape_cast %21 : vector<1x1x128xf32> to vector<1x128xf32>
    %23 = vector.shape_cast %20 : vector<1x128xf32> to vector<1x1x128xf32>
    tpu.vector_store %arg6[%c0_15, %c1, %c0_16], %23 {strides = array<i32>} : memref<1x2x128xf32, #tpu.memory_space<vmem>>, vector<1x1x128xf32>,
    return
  }
  func.func @transform_0(%arg0: i32) -> (i32, i32) {
    %c0_i32 = arith.constant 0 : i32
    %c0_i32_0 = arith.constant 0 : i32
    return %arg0, %c0_i32 : i32, i32
  }
  func.func @transform_1(%arg0: i32) -> (i32, i32) {
    %c0_i32 = arith.constant 0 : i32
    %c0_i32_0 = arith.constant 0 : i32
    %c0_i32_1 = arith.constant 0 : i32
    return %c0_i32, %c0_i32_0 : i32, i32
  }
  func.func @transform_2(%arg0: i32) -> (i32, i32) {
    %c0_i32 = arith.constant 0 : i32
    %c0_i32_0 = arith.constant 0 : i32
    %c0_i32_1 = arith.constant 0 : i32
    return %c0_i32, %c0_i32_0 : i32, i32
  }
  func.func @transform_3(%arg0: i32) -> (i32, i32) {
    %c0_i32 = arith.constant 0 : i32
    %c0_i32_0 = arith.constant 0 : i32
    %c0_i32_1 = arith.constant 0 : i32
    return %c0_i32, %c0_i32_0 : i32, i32
  }
  func.func @transform_4(%arg0: i32) -> (i32, i32) {
    %c0_i32 = arith.constant 0 : i32
    %c0_i32_0 = arith.constant 0 : i32
    return %arg0, %c0_i32 : i32, i32
  }
  func.func @transform_5(%arg0: i32) -> (i32, i32, i32) {
    %c0_i32 = arith.constant 0 : i32
    %c0_i32_0 = arith.constant 0 : i32
    %c0_i32_1 = arith.constant 0 : i32
    return %arg0, %c0_i32, %c0_i32_0 : i32, i32, i32
  }
}

module attributes {stable_mosaic.version = 11 : i64} {
  func.func @_mm_stats_kernel(%arg0: i32, %arg1: memref<128x128xbf16, #tpu.memory_space<vmem>>, %arg2: memref<1x128xf32, #tpu.memory_space<vmem>>, %arg3: memref<1x128xf32, #tpu.memory_space<vmem>>, %arg4: memref<128x128xbf16, #tpu.memory_space<vmem>>, %arg5: memref<128x128xf32, #tpu.memory_space<vmem>>, %arg6: memref<1x2x128xf32, #tpu.memory_space<vmem>>) attributes {dimension_semantics = [#tpu.dimension_semantics<parallel>], iteration_bounds = array<i64: 1>, scalar_prefetch = 0 : i64, scratch_operands = 0 : i64, tpu.core_type = #tpu.core_type<tc>, window_params = [{transform_indices = @transform_0, window_bounds = array<i64: 128, 128>}, {pipeline_mode = #tpu.pipeline_mode<synchronous>, transform_indices = @transform_1, window_bounds = array<i64: 1, 128>}, {pipeline_mode = #tpu.pipeline_mode<synchronous>, transform_indices = @transform_2, window_bounds = array<i64: 1, 128>}, {pipeline_mode = #tpu.pipeline_mode<synchronous>, transform_indices = @transform_3, window_bounds = array<i64: 128, 128>}, {transform_indices = @transform_4, window_bounds = array<i64: 128, 128>}, {transform_indices = @transform_5, window_bounds = array<i64: 1, 2, 128>}]} {
    %c0 = arith.constant 0 : index
    %c0_0 = arith.constant 0 : index
    %0 = vector.load %arg1[%c0, %c0_0] : memref<128x128xbf16, #tpu.memory_space<vmem>>, vector<128x128xbf16>
    %c0_1 = arith.constant 0 : index
    %c0_2 = arith.constant 0 : index
    %1 = vector.load %arg4[%c0_1, %c0_2] : memref<128x128xbf16, #tpu.memory_space<vmem>>, vector<128x128xbf16>
    %cst = arith.constant dense<0.000000e+00> : vector<128x128xf32>
    %2 = tpu.matmul %0, %1, %cst {dimension_numbers = #tpu.dot_dimension_numbers<[1], [0], [0], [1], [0, 0, 1, 1], [], []>} : vector<128x128xbf16>, vector<128x128xbf16>, vector<128x128xf32> -> vector<128x128xf32>
    %c0_3 = arith.constant 0 : index
    %c0_4 = arith.constant 0 : index
    %3 = vector.load %arg5[%c0_3, %c0_4] : memref<128x128xf32, #tpu.memory_space<vmem>>, vector<128x128xf32>
    tpu.vector_store %arg5[%c0_3, %c0_4], %2 {strides = array<i32>} : memref<128x128xf32, #tpu.memory_space<vmem>>, vector<128x128xf32>,
    %cst_5 = arith.constant dense<0.000000e+00> : vector<128xf32>
    %4 = vector.multi_reduction <add>, %2, %cst_5 [0] : vector<128x128xf32> to vector<128xf32>
    %5 = vector.shape_cast %4 : vector<128xf32> to vector<1x128xf32>
    %c0_6 = arith.constant 0 : index
    %c0_7 = arith.constant 0 : index
    %c0_8 = arith.constant 0 : index
    %6 = vector.load %arg6[%c0_6, %c0_7, %c0_8] : memref<1x2x128xf32, #tpu.memory_space<vmem>>, vector<1x1x128xf32>
    %7 = vector.shape_cast %6 : vector<1x1x128xf32> to vector<1x128xf32>
    %8 = vector.shape_cast %5 : vector<1x128xf32> to vector<1x1x128xf32>
    tpu.vector_store %arg6[%c0_6, %c0_7, %c0_8], %8 {strides = array<i32>} : memref<1x2x128xf32, #tpu.memory_space<vmem>>, vector<1x1x128xf32>,
    %9 = arith.mulf %2, %2 : vector<128x128xf32>
    %cst_9 = arith.constant dense<0.000000e+00> : vector<128xf32>
    %10 = vector.multi_reduction <add>, %9, %cst_9 [0] : vector<128x128xf32> to vector<128xf32>
    %11 = vector.shape_cast %10 : vector<128xf32> to vector<1x128xf32>
    %c0_10 = arith.constant 0 : index
    %c1 = arith.constant 1 : index
    %c0_11 = arith.constant 0 : index
    %12 = vector.load %arg6[%c0_10, %c1, %c0_11] : memref<1x2x128xf32, #tpu.memory_space<vmem>>, vector<1x1x128xf32>
    %13 = vector.shape_cast %12 : vector<1x1x128xf32> to vector<1x128xf32>
    %14 = vector.shape_cast %11 : vector<1x128xf32> to vector<1x1x128xf32>
    tpu.vector_store %arg6[%c0_10, %c1, %c0_11], %14 {strides = array<i32>} : memref<1x2x128xf32, #tpu.memory_space<vmem>>, vector<1x1x128xf32>,
    return
  }
  func.func @transform_0(%arg0: i32) -> (i32, i32) {
    %c0_i32 = arith.constant 0 : i32
    %c0_i32_0 = arith.constant 0 : i32
    return %arg0, %c0_i32 : i32, i32
  }
  func.func @transform_1(%arg0: i32) -> (i32, i32) {
    %c0_i32 = arith.constant 0 : i32
    %c0_i32_0 = arith.constant 0 : i32
    %c0_i32_1 = arith.constant 0 : i32
    return %c0_i32, %c0_i32_0 : i32, i32
  }
  func.func @transform_2(%arg0: i32) -> (i32, i32) {
    %c0_i32 = arith.constant 0 : i32
    %c0_i32_0 = arith.constant 0 : i32
    %c0_i32_1 = arith.constant 0 : i32
    return %c0_i32, %c0_i32_0 : i32, i32
  }
  func.func @transform_3(%arg0: i32) -> (i32, i32) {
    %c0_i32 = arith.constant 0 : i32
    %c0_i32_0 = arith.constant 0 : i32
    %c0_i32_1 = arith.constant 0 : i32
    return %c0_i32, %c0_i32_0 : i32, i32
  }
  func.func @transform_4(%arg0: i32) -> (i32, i32) {
    %c0_i32 = arith.constant 0 : i32
    %c0_i32_0 = arith.constant 0 : i32
    return %arg0, %c0_i32 : i32, i32
  }
  func.func @transform_5(%arg0: i32) -> (i32, i32, i32) {
    %c0_i32 = arith.constant 0 : i32
    %c0_i32_0 = arith.constant 0 : i32
    %c0_i32_1 = arith.constant 0 : i32
    return %arg0, %c0_i32, %c0_i32_0 : i32, i32, i32
  }
}

module attributes {stable_mosaic.version = 11 : i64} {
  func.func @_bn_add_relu_kernel(%arg0: i32, %arg1: memref<128x128xf32, #tpu.memory_space<vmem>>, %arg2: memref<1x128xf32, #tpu.memory_space<vmem>>, %arg3: memref<1x128xf32, #tpu.memory_space<vmem>>, %arg4: memref<128x128xf32, #tpu.memory_space<vmem>>, %arg5: memref<1x128xf32, #tpu.memory_space<vmem>>, %arg6: memref<1x128xf32, #tpu.memory_space<vmem>>, %arg7: memref<128x128xf32, #tpu.memory_space<vmem>>) attributes {dimension_semantics = [#tpu.dimension_semantics<parallel>], iteration_bounds = array<i64: 1>, scalar_prefetch = 0 : i64, scratch_operands = 0 : i64, tpu.core_type = #tpu.core_type<tc>, window_params = [{transform_indices = @transform_0, window_bounds = array<i64: 128, 128>}, {pipeline_mode = #tpu.pipeline_mode<synchronous>, transform_indices = @transform_1, window_bounds = array<i64: 1, 128>}, {pipeline_mode = #tpu.pipeline_mode<synchronous>, transform_indices = @transform_2, window_bounds = array<i64: 1, 128>}, {transform_indices = @transform_3, window_bounds = array<i64: 128, 128>}, {pipeline_mode = #tpu.pipeline_mode<synchronous>, transform_indices = @transform_4, window_bounds = array<i64: 1, 128>}, {pipeline_mode = #tpu.pipeline_mode<synchronous>, transform_indices = @transform_5, window_bounds = array<i64: 1, 128>}, {transform_indices = @transform_6, window_bounds = array<i64: 128, 128>}]} {
    %c0 = arith.constant 0 : index
    %c0_0 = arith.constant 0 : index
    %0 = vector.load %arg1[%c0, %c0_0] : memref<128x128xf32, #tpu.memory_space<vmem>>, vector<128x128xf32>
    %c0_1 = arith.constant 0 : index
    %c0_2 = arith.constant 0 : index
    %1 = vector.load %arg2[%c0_1, %c0_2] : memref<1x128xf32, #tpu.memory_space<vmem>>, vector<1x128xf32>
    %2 = vector.broadcast %1 : vector<1x128xf32> to vector<128x128xf32>
    %3 = arith.mulf %0, %2 : vector<128x128xf32>
    %c0_3 = arith.constant 0 : index
    %c0_4 = arith.constant 0 : index
    %4 = vector.load %arg3[%c0_3, %c0_4] : memref<1x128xf32, #tpu.memory_space<vmem>>, vector<1x128xf32>
    %5 = vector.broadcast %4 : vector<1x128xf32> to vector<128x128xf32>
    %6 = arith.addf %3, %5 : vector<128x128xf32>
    %c0_5 = arith.constant 0 : index
    %c0_6 = arith.constant 0 : index
    %7 = vector.load %arg4[%c0_5, %c0_6] : memref<128x128xf32, #tpu.memory_space<vmem>>, vector<128x128xf32>
    %c0_7 = arith.constant 0 : index
    %c0_8 = arith.constant 0 : index
    %8 = vector.load %arg5[%c0_7, %c0_8] : memref<1x128xf32, #tpu.memory_space<vmem>>, vector<1x128xf32>
    %9 = vector.broadcast %8 : vector<1x128xf32> to vector<128x128xf32>
    %10 = arith.mulf %7, %9 : vector<128x128xf32>
    %c0_9 = arith.constant 0 : index
    %c0_10 = arith.constant 0 : index
    %11 = vector.load %arg6[%c0_9, %c0_10] : memref<1x128xf32, #tpu.memory_space<vmem>>, vector<1x128xf32>
    %12 = vector.broadcast %11 : vector<1x128xf32> to vector<128x128xf32>
    %13 = arith.addf %10, %12 : vector<128x128xf32>
    %14 = arith.addf %6, %13 : vector<128x128xf32>
    %cst = arith.constant 0.000000e+00 : f32
    %15 = vector.broadcast %cst : f32 to vector<128x128xf32>
    %16 = arith.maximumf %14, %15 : vector<128x128xf32>
    %c0_11 = arith.constant 0 : index
    %c0_12 = arith.constant 0 : index
    %17 = vector.load %arg7[%c0_11, %c0_12] : memref<128x128xf32, #tpu.memory_space<vmem>>, vector<128x128xf32>
    tpu.vector_store %arg7[%c0_11, %c0_12], %16 {strides = array<i32>} : memref<128x128xf32, #tpu.memory_space<vmem>>, vector<128x128xf32>,
    return
  }
  func.func @transform_0(%arg0: i32) -> (i32, i32) {
    %c0_i32 = arith.constant 0 : i32
    %c0_i32_0 = arith.constant 0 : i32
    return %arg0, %c0_i32 : i32, i32
  }
  func.func @transform_1(%arg0: i32) -> (i32, i32) {
    %c0_i32 = arith.constant 0 : i32
    %c0_i32_0 = arith.constant 0 : i32
    %c0_i32_1 = arith.constant 0 : i32
    return %c0_i32, %c0_i32_0 : i32, i32
  }
  func.func @transform_2(%arg0: i32) -> (i32, i32) {
    %c0_i32 = arith.constant 0 : i32
    %c0_i32_0 = arith.constant 0 : i32
    %c0_i32_1 = arith.constant 0 : i32
    return %c0_i32, %c0_i32_0 : i32, i32
  }
  func.func @transform_3(%arg0: i32) -> (i32, i32) {
    %c0_i32 = arith.constant 0 : i32
    %c0_i32_0 = arith.constant 0 : i32
    return %arg0, %c0_i32 : i32, i32
  }
  func.func @transform_4(%arg0: i32) -> (i32, i32) {
    %c0_i32 = arith.constant 0 : i32
    %c0_i32_0 = arith.constant 0 : i32
    %c0_i32_1 = arith.constant 0 : i32
    return %c0_i32, %c0_i32_0 : i32, i32
  }
  func.func @transform_5(%arg0: i32) -> (i32, i32) {
    %c0_i32 = arith.constant 0 : i32
    %c0_i32_0 = arith.constant 0 : i32
    %c0_i32_1 = arith.constant 0 : i32
    return %c0_i32, %c0_i32_0 : i32, i32
  }
  func.func @transform_6(%arg0: i32) -> (i32, i32) {
    %c0_i32 = arith.constant 0 : i32
    %c0_i32_0 = arith.constant 0 : i32
    return %arg0, %c0_i32 : i32, i32
  }
}

</mosaic_0001>

<llo_original>
// kernel: resnet_unit_forward.7
$region0: #{resnet_unit_forward.7}
  #allocation0 [shape = 'u32[]', space=smem, size = 0x4, offset = 0x4, fixed_abs, tag = 'smem constant byte address 0x4 - core index']
  #allocation1 [shape = 'u32[144,128]{1,0:T(1,128)}', space=vmem, size = 0x12000, scoped, tag = 'internal scratch']
  %s0 = inlined_call_operand.vmem [shape: f32[512,128], index: 0, kind: input, shape index: {}]
  %s1 = inlined_call_operand.vmem [shape: f32[1,128], index: 1, kind: input, shape index: {}]
  %s2 = inlined_call_operand.vmem [shape: f32[1,128], index: 2, kind: input, shape index: {}]
  %s3 = inlined_call_operand.vmem [shape: bf16[512,128], index: 3, kind: output, shape index: {}]
  %s4 = sld [smem:[#allocation0]]
  $region22: #{resnet_unit_forward.7} parent=0
    _
  %s6 = ssub.s32 1, %s4
  %s7 = scalar_select 0, %s6, %s4
  // Predicated region
  $region2: #{resnet_unit_forward.7} parent=0 // pred_check
    _
  $region3: #{resnet_unit_forward.7} parent=0 // pred_check_branch
    %9 = sbr.rel (0) target = $region5
  $region4: #{resnet_unit_forward.7} parent=0 // pred_region
    _
  $region5: #{resnet_unit_forward.7} parent=0 // pred_fallthru
    _
  // Predicated region
  $region6: #{resnet_unit_forward.7} parent=0 // pred_check
    _
  $region7: #{resnet_unit_forward.7} parent=0 // pred_check_branch
    %11 = sbr.rel (0) target = $region9
  $region8: #{resnet_unit_forward.7} parent=0 // pred_region
    _
  $region9: #{resnet_unit_forward.7} parent=0 // pred_fallthru
    _
  // Predicated region
  $region10: #{resnet_unit_forward.7} parent=0 // pred_check
    _
  $region11: #{resnet_unit_forward.7} parent=0 // pred_check_branch
    %13 = sbr.rel (0) target = $region13
  $region12: #{resnet_unit_forward.7} parent=0 // pred_region
    _
  $region13: #{resnet_unit_forward.7} parent=0 // pred_fallthru
    _
  %v14 = vld [vmem:[%s0] sm:$0xff]
  %v15 = vld [vmem:[%s0 + $0x8] sm:$0xff]
  %v16 = vld [vmem:[%s0 + $0x10] sm:$0xff]
  %v17 = vld [vmem:[%s0 + $0x18] sm:$0xff]
  %v18 = vld [vmem:[%s0 + $0x20] sm:$0xff]
  %v19 = vld [vmem:[%s0 + $0x28] sm:$0xff]
  %v20 = vld [vmem:[%s0 + $0x30] sm:$0xff]
  %v21 = vld [vmem:[%s0 + $0x38] sm:$0xff]
  %v22 = vld [vmem:[%s0 + $0x40] sm:$0xff]
  %v23 = vld [vmem:[%s0 + $0x48] sm:$0xff]
  %v24 = vld [vmem:[%s0 + $0x50] sm:$0xff]
  %v25 = vld [vmem:[%s0 + $0x58] sm:$0xff]
  %v26 = vld [vmem:[%s0 + $0x60] sm:$0xff]
  %v27 = vld [vmem:[%s0 + $0x68] sm:$0xff]
  %v28 = vld [vmem:[%s0 + $0x70] sm:$0xff]
  %v29 = vld [vmem:[%s0 + $0x78] sm:$0xff]
  %v30 = vld [vmem:[%s0 + $0x80] sm:$0xff]
  %v31 = vld [vmem:[%s0 + $0x88] sm:$0xff]
  %v32 = vld [vmem:[%s0 + $0x90] sm:$0xff]
  %v33 = vld [vmem:[%s0 + $0x98] sm:$0xff]
  %v34 = vld [vmem:[%s0 + $0xa0] sm:$0xff]
  %v35 = vld [vmem:[%s0 + $0xa8] sm:$0xff]
  %v36 = vld [vmem:[%s0 + $0xb0] sm:$0xff]
  %v37 = vld [vmem:[%s0 + $0xb8] sm:$0xff]
  %v38 = vld [vmem:[%s0 + $0xc0] sm:$0xff]
  %v39 = vld [vmem:[%s0 + $0xc8] sm:$0xff]
  %v40 = vld [vmem:[%s0 + $0xd0] sm:$0xff]
  %v41 = vld [vmem:[%s0 + $0xd8] sm:$0xff]
  %v42 = vld [vmem:[%s0 + $0xe0] sm:$0xff]
  %v43 = vld [vmem:[%s0 + $0xe8] sm:$0xff]
  %v44 = vld [vmem:[%s0 + $0xf0] sm:$0xff]
  %v45 = vld [vmem:[%s0 + $0xf8] sm:$0xff]
  %v46 = vld [vmem:[%s0 + $0x100] sm:$0xff]
  %v47 = vld [vmem:[%s0 + $0x108] sm:$0xff]
  %v48 = vld [vmem:[%s0 + $0x110] sm:$0xff]
  %v49 = vld [vmem:[%s0 + $0x118] sm:$0xff]
  %v50 = vld [vmem:[%s0 + $0x120] sm:$0xff]
  %v51 = vld [vmem:[%s0 + $0x128] sm:$0xff]
  %v52 = vld [vmem:[%s0 + $0x130] sm:$0xff]
  %v53 = vld [vmem:[%s0 + $0x138] sm:$0xff]
  %v54 = vld [vmem:[%s0 + $0x140] sm:$0xff]
  %v55 = vld [vmem:[%s0 + $0x148] sm:$0xff]
  %v56 = vld [vmem:[%s0 + $0x150] sm:$0xff]
  %v57 = vld [vmem:[%s0 + $0x158] sm:$0xff]
  %v58 = vld [vmem:[%s0 + $0x160] sm:$0xff]
  %v59 = vld [vmem:[%s0 + $0x168] sm:$0xff]
  %v60 = vld [vmem:[%s0 + $0x170] sm:$0xff]
  %v61 = vld [vmem:[%s0 + $0x178] sm:$0xff]
  %v62 = vld [vmem:[%s0 + $0x180] sm:$0xff]
  %v63 = vld [vmem:[%s0 + $0x188] sm:$0xff]
  %v64 = vld [vmem:[%s0 + $0x190] sm:$0xff]
  %v65 = vld [vmem:[%s0 + $0x198] sm:$0xff]
  %v66 = vld [vmem:[%s0 + $0x1a0] sm:$0xff]
  %v67 = vld [vmem:[%s0 + $0x1a8] sm:$0xff]
  %v68 = vld [vmem:[%s0 + $0x1b0] sm:$0xff]
  %v69 = vld [vmem:[%s0 + $0x1b8] sm:$0xff]
  %v70 = vld [vmem:[%s0 + $0x1c0] sm:$0xff]
  %v71 = vld [vmem:[%s0 + $0x1c8] sm:$0xff]
  %v72 = vld [vmem:[%s0 + $0x1d0] sm:$0xff]
  %v73 = vld [vmem:[%s0 + $0x1d8] sm:$0xff]
  %v74 = vld [vmem:[%s0 + $0x1e0] sm:$0xff]
  %v75 = vld [vmem:[%s0 + $0x1e8] sm:$0xff]
  %v76 = vld [vmem:[%s0 + $0x1f0] sm:$0xff]
  %v77 = vld [vmem:[%s0 + $0x1f8] sm:$0xff]
  %v78 = vld [vmem:[%s1] sm:$0x1]
  %v80 = vlaneseq
  %v81 = vshrl.u32 %v80, 7
  %v82 = vsub.s32 0, %v81
  %v83 = vrot.slane %v78, %v82
  %v85 = vmul.f32 %v14, %v83
  %v86 = vmul.f32 %v15, %v83
  %v87 = vmul.f32 %v16, %v83
  %v88 = vmul.f32 %v17, %v83
  %v89 = vmul.f32 %v18, %v83
  %v90 = vmul.f32 %v19, %v83
  %v91 = vmul.f32 %v20, %v83
  %v92 = vmul.f32 %v21, %v83
  %v93 = vmul.f32 %v22, %v83
  %v94 = vmul.f32 %v23, %v83
  %v95 = vmul.f32 %v24, %v83
  %v96 = vmul.f32 %v25, %v83
  %v97 = vmul.f32 %v26, %v83
  %v98 = vmul.f32 %v27, %v83
  %v99 = vmul.f32 %v28, %v83
  %v100 = vmul.f32 %v29, %v83
  %v101 = vmul.f32 %v30, %v83
  %v102 = vmul.f32 %v31, %v83
  %v103 = vmul.f32 %v32, %v83
  %v104 = vmul.f32 %v33, %v83
  %v105 = vmul.f32 %v34, %v83
  %v106 = vmul.f32 %v35, %v83
  %v107 = vmul.f32 %v36, %v83
  %v108 = vmul.f32 %v37, %v83
  %v109 = vmul.f32 %v38, %v83
  %v110 = vmul.f32 %v39, %v83
  %v111 = vmul.f32 %v40, %v83
  %v112 = vmul.f32 %v41, %v83
  %v113 = vmul.f32 %v42, %v83
  %v114 = vmul.f32 %v43, %v83
  %v115 = vmul.f32 %v44, %v83
  %v116 = vmul.f32 %v45, %v83
  %v117 = vmul.f32 %v46, %v83
  %v118 = vmul.f32 %v47, %v83
  %v119 = vmul.f32 %v48, %v83
  %v120 = vmul.f32 %v49, %v83
  %v121 = vmul.f32 %v50, %v83
  %v122 = vmul.f32 %v51, %v83
  %v123 = vmul.f32 %v52, %v83
  %v124 = vmul.f32 %v53, %v83
  %v125 = vmul.f32 %v54, %v83
  %v126 = vmul.f32 %v55, %v83
  %v127 = vmul.f32 %v56, %v83
  %v128 = vmul.f32 %v57, %v83
  %v129 = vmul.f32 %v58, %v83
  %v130 = vmul.f32 %v59, %v83
  %v131 = vmul.f32 %v60, %v83
  %v132 = vmul.f32 %v61, %v83
  %v133 = vmul.f32 %v62, %v83
  %v134 = vmul.f32 %v63, %v83
  %v135 = vmul.f32 %v64, %v83
  %v136 = vmul.f32 %v65, %v83
  %v137 = vmul.f32 %v66, %v83
  %v138 = vmul.f32 %v67, %v83
  %v139 = vmul.f32 %v68, %v83
  %v140 = vmul.f32 %v69, %v83
  %v141 = vmul.f32 %v70, %v83
  %v142 = vmul.f32 %v71, %v83
  %v143 = vmul.f32 %v72, %v83
  %v144 = vmul.f32 %v73, %v83
  %v145 = vmul.f32 %v74, %v83
  %v146 = vmul.f32 %v75, %v83
  %v147 = vmul.f32 %v76, %v83
  %v148 = vmul.f32 %v77, %v83
  %v149 = vld [vmem:[%s2] sm:$0x1]
  %v151 = vlaneseq
  %v152 = vshrl.u32 %v151, 7
  %v153 = vsub.s32 0, %v152
  %v154 = vrot.slane %v149, %v153
  %v156 = vadd.f32 %v85, %v154
  %v157 = vadd.f32 %v86, %v154
  %v158 = vadd.f32 %v87, %v154
  %v159 = vadd.f32 %v88, %v154
  %v160 = vadd.f32 %v89, %v154
  %v161 = vadd.f32 %v90, %v154
  %v162 = vadd.f32 %v91, %v154
  %v163 = vadd.f32 %v92, %v154
  %v164 = vadd.f32 %v93, %v154
  %v165 = vadd.f32 %v94, %v154
  %v166 = vadd.f32 %v95, %v154
  %v167 = vadd.f32 %v96, %v154
  %v168 = vadd.f32 %v97, %v154
  %v169 = vadd.f32 %v98, %v154
  %v170 = vadd.f32 %v99, %v154
  %v171 = vadd.f32 %v100, %v154
  %v172 = vadd.f32 %v101, %v154
  %v173 = vadd.f32 %v102, %v154
  %v174 = vadd.f32 %v103, %v154
  %v175 = vadd.f32 %v104, %v154
  %v176 = vadd.f32 %v105, %v154
  %v177 = vadd.f32 %v106, %v154
  %v178 = vadd.f32 %v107, %v154
  %v179 = vadd.f32 %v108, %v154
  %v180 = vadd.f32 %v109, %v154
  %v181 = vadd.f32 %v110, %v154
  %v182 = vadd.f32 %v111, %v154
  %v183 = vadd.f32 %v112, %v154
  %v184 = vadd.f32 %v113, %v154
  %v185 = vadd.f32 %v114, %v154
  %v186 = vadd.f32 %v115, %v154
  %v187 = vadd.f32 %v116, %v154
  %v188 = vadd.f32 %v117, %v154
  %v189 = vadd.f32 %v118, %v154
  %v190 = vadd.f32 %v119, %v154
  %v191 = vadd.f32 %v120, %v154
  %v192 = vadd.f32 %v121, %v154
  %v193 = vadd.f32 %v122, %v154
  %v194 = vadd.f32 %v123, %v154
  %v195 = vadd.f32 %v124, %v154
  %v196 = vadd.f32 %v125, %v154
  %v197 = vadd.f32 %v126, %v154
  %v198 = vadd.f32 %v127, %v154
  %v199 = vadd.f32 %v128, %v154
  %v200 = vadd.f32 %v129, %v154
  %v201 = vadd.f32 %v130, %v154
  %v202 = vadd.f32 %v131, %v154
  %v203 = vadd.f32 %v132, %v154
  %v204 = vadd.f32 %v133, %v154
  %v205 = vadd.f32 %v134, %v154
  %v206 = vadd.f32 %v135, %v154
  %v207 = vadd.f32 %v136, %v154
  %v208 = vadd.f32 %v137, %v154
  %v209 = vadd.f32 %v138, %v154
  %v210 = vadd.f32 %v139, %v154
  %v211 = vadd.f32 %v140, %v154
  %v212 = vadd.f32 %v141, %v154
  %v213 = vadd.f32 %v142, %v154
  %v214 = vadd.f32 %v143, %v154
  %v215 = vadd.f32 %v144, %v154
  %v216 = vadd.f32 %v145, %v154
  %v217 = vadd.f32 %v146, %v154
  %v218 = vadd.f32 %v147, %v154
  %v219 = vadd.f32 %v148, %v154
  %v220 = vmax.f32 %v156, 0.0
  %v221 = vmax.f32 %v157, 0.0
  %v222 = vmax.f32 %v158, 0.0
  %v223 = vmax.f32 %v159, 0.0
  %v224 = vmax.f32 %v160, 0.0
  %v225 = vmax.f32 %v161, 0.0
  %v226 = vmax.f32 %v162, 0.0
  %v227 = vmax.f32 %v163, 0.0
  %v228 = vmax.f32 %v164, 0.0
  %v229 = vmax.f32 %v165, 0.0
  %v230 = vmax.f32 %v166, 0.0
  %v231 = vmax.f32 %v167, 0.0
  %v232 = vmax.f32 %v168, 0.0
  %v233 = vmax.f32 %v169, 0.0
  %v234 = vmax.f32 %v170, 0.0
  %v235 = vmax.f32 %v171, 0.0
  %v236 = vmax.f32 %v172, 0.0
  %v237 = vmax.f32 %v173, 0.0
  %v238 = vmax.f32 %v174, 0.0
  %v239 = vmax.f32 %v175, 0.0
  %v240 = vmax.f32 %v176, 0.0
  %v241 = vmax.f32 %v177, 0.0
  %v242 = vmax.f32 %v178, 0.0
  %v243 = vmax.f32 %v179, 0.0
  %v244 = vmax.f32 %v180, 0.0
  %v245 = vmax.f32 %v181, 0.0
  %v246 = vmax.f32 %v182, 0.0
  %v247 = vmax.f32 %v183, 0.0
  %v248 = vmax.f32 %v184, 0.0
  %v249 = vmax.f32 %v185, 0.0
  %v250 = vmax.f32 %v186, 0.0
  %v251 = vmax.f32 %v187, 0.0
  %v252 = vmax.f32 %v188, 0.0
  %v253 = vmax.f32 %v189, 0.0
  %v254 = vmax.f32 %v190, 0.0
  %v255 = vmax.f32 %v191, 0.0
  %v256 = vmax.f32 %v192, 0.0
  %v257 = vmax.f32 %v193, 0.0
  %v258 = vmax.f32 %v194, 0.0
  %v259 = vmax.f32 %v195, 0.0
  %v260 = vmax.f32 %v196, 0.0
  %v261 = vmax.f32 %v197, 0.0
  %v262 = vmax.f32 %v198, 0.0
  %v263 = vmax.f32 %v199, 0.0
  %v264 = vmax.f32 %v200, 0.0
  %v265 = vmax.f32 %v201, 0.0
  %v266 = vmax.f32 %v202, 0.0
  %v267 = vmax.f32 %v203, 0.0
  %v268 = vmax.f32 %v204, 0.0
  %v269 = vmax.f32 %v205, 0.0
  %v270 = vmax.f32 %v206, 0.0
  %v271 = vmax.f32 %v207, 0.0
  %v272 = vmax.f32 %v208, 0.0
  %v273 = vmax.f32 %v209, 0.0
  %v274 = vmax.f32 %v210, 0.0
  %v275 = vmax.f32 %v211, 0.0
  %v276 = vmax.f32 %v212, 0.0
  %v277 = vmax.f32 %v213, 0.0
  %v278 = vmax.f32 %v214, 0.0
  %v279 = vmax.f32 %v215, 0.0
  %v280 = vmax.f32 %v216, 0.0
  %v281 = vmax.f32 %v217, 0.0
  %v282 = vmax.f32 %v218, 0.0
  %v283 = vmax.f32 %v219, 0.0
  %v284 = vpack.c.bf16 %v221, %v220
  %v285 = vpack.c.bf16 %v223, %v222
  %v286 = vpack.c.bf16 %v225, %v224
  %v287 = vpack.c.bf16 %v227, %v226
  %v288 = vpack.c.bf16 %v229, %v228
  %v289 = vpack.c.bf16 %v231, %v230
  %v290 = vpack.c.bf16 %v233, %v232
  %v291 = vpack.c.bf16 %v235, %v234
  %v292 = vpack.c.bf16 %v237, %v236
  %v293 = vpack.c.bf16 %v239, %v238
  %v294 = vpack.c.bf16 %v241, %v240
  %v295 = vpack.c.bf16 %v243, %v242
  %v296 = vpack.c.bf16 %v245, %v244
  %v297 = vpack.c.bf16 %v247, %v246
  %v298 = vpack.c.bf16 %v249, %v248
  %v299 = vpack.c.bf16 %v251, %v250
  %v300 = vpack.c.bf16 %v253, %v252
  %v301 = vpack.c.bf16 %v255, %v254
  %v302 = vpack.c.bf16 %v257, %v256
  %v303 = vpack.c.bf16 %v259, %v258
  %v304 = vpack.c.bf16 %v261, %v260
  %v305 = vpack.c.bf16 %v263, %v262
  %v306 = vpack.c.bf16 %v265, %v264
  %v307 = vpack.c.bf16 %v267, %v266
  %v308 = vpack.c.bf16 %v269, %v268
  %v309 = vpack.c.bf16 %v271, %v270
  %v310 = vpack.c.bf16 %v273, %v272
  %v311 = vpack.c.bf16 %v275, %v274
  %v312 = vpack.c.bf16 %v277, %v276
  %v313 = vpack.c.bf16 %v279, %v278
  %v314 = vpack.c.bf16 %v281, %v280
  %v315 = vpack.c.bf16 %v283, %v282
  %v348 = vunpack.c.l.b16 %v284
  %v349 = vunpack.c.h.b16 %v284
  %v350 = vunpack.c.l.b16 %v285
  %v351 = vunpack.c.h.b16 %v285
  %v352 = vunpack.c.l.b16 %v286
  %v353 = vunpack.c.h.b16 %v286
  %v354 = vunpack.c.l.b16 %v287
  %v355 = vunpack.c.h.b16 %v287
  %v356 = vunpack.c.l.b16 %v288
  %v357 = vunpack.c.h.b16 %v288
  %v358 = vunpack.c.l.b16 %v289
  %v359 = vunpack.c.h.b16 %v289
  %v360 = vunpack.c.l.b16 %v290
  %v361 = vunpack.c.h.b16 %v290
  %v362 = vunpack.c.l.b16 %v291
  %v363 = vunpack.c.h.b16 %v291
  %v364 = vunpack.c.l.b16 %v292
  %v365 = vunpack.c.h.b16 %v292
  %v366 = vunpack.c.l.b16 %v293
  %v367 = vunpack.c.h.b16 %v293
  %v368 = vunpack.c.l.b16 %v294
  %v369 = vunpack.c.h.b16 %v294
  %v370 = vunpack.c.l.b16 %v295
  %v371 = vunpack.c.h.b16 %v295
  %v372 = vunpack.c.l.b16 %v296
  %v373 = vunpack.c.h.b16 %v296
  %v374 = vunpack.c.l.b16 %v297
  %v375 = vunpack.c.h.b16 %v297
  %v376 = vunpack.c.l.b16 %v298
  %v377 = vunpack.c.h.b16 %v298
  %v378 = vunpack.c.l.b16 %v299
  %v379 = vunpack.c.h.b16 %v299
  %v380 = vunpack.c.l.b16 %v300
  %v381 = vunpack.c.h.b16 %v300
  %v382 = vunpack.c.l.b16 %v301
  %v383 = vunpack.c.h.b16 %v301
  %v384 = vunpack.c.l.b16 %v302
  %v385 = vunpack.c.h.b16 %v302
  %v386 = vunpack.c.l.b16 %v303
  %v387 = vunpack.c.h.b16 %v303
  %v388 = vunpack.c.l.b16 %v304
  %v389 = vunpack.c.h.b16 %v304
  %v390 = vunpack.c.l.b16 %v305
  %v391 = vunpack.c.h.b16 %v305
  %v392 = vunpack.c.l.b16 %v306
  %v393 = vunpack.c.h.b16 %v306
  %v394 = vunpack.c.l.b16 %v307
  %v395 = vunpack.c.h.b16 %v307
  %v396 = vunpack.c.l.b16 %v308
  %v397 = vunpack.c.h.b16 %v308
  %v398 = vunpack.c.l.b16 %v309
  %v399 = vunpack.c.h.b16 %v309
  %v400 = vunpack.c.l.b16 %v310
  %v401 = vunpack.c.h.b16 %v310
  %v402 = vunpack.c.l.b16 %v311
  %v403 = vunpack.c.h.b16 %v311
  %v404 = vunpack.c.l.b16 %v312
  %v405 = vunpack.c.h.b16 %v312
  %v406 = vunpack.c.l.b16 %v313
  %v407 = vunpack.c.h.b16 %v313
  %v408 = vunpack.c.l.b16 %v314
  %v409 = vunpack.c.h.b16 %v314
  %v410 = vunpack.c.l.b16 %v315
  %v411 = vunpack.c.h.b16 %v315
  %v412 = vpack.c.b16 %v348, %v348
  %v413 = vpack.c.b16 %v349, %v349
  %v414 = vpack.c.b16 %v350, %v350
  %v415 = vpack.c.b16 %v351, %v351
  %v416 = vpack.c.b16 %v352, %v352
  %v417 = vpack.c.b16 %v353, %v353
  %v418 = vpack.c.b16 %v354, %v354
  %v419 = vpack.c.b16 %v355, %v355
  %v420 = vpack.c.b16 %v356, %v356
  %v421 = vpack.c.b16 %v357, %v357
  %v422 = vpack.c.b16 %v358, %v358
  %v423 = vpack.c.b16 %v359, %v359
  %v424 = vpack.c.b16 %v360, %v360
  %v425 = vpack.c.b16 %v361, %v361
  %v426 = vpack.c.b16 %v362, %v362
  %v427 = vpack.c.b16 %v363, %v363
  %v428 = vpack.c.b16 %v364, %v364
  %v429 = vpack.c.b16 %v365, %v365
  %v430 = vpack.c.b16 %v366, %v366
  %v431 = vpack.c.b16 %v367, %v367
  %v432 = vpack.c.b16 %v368, %v368
  %v433 = vpack.c.b16 %v369, %v369
  %v434 = vpack.c.b16 %v370, %v370
  %v435 = vpack.c.b16 %v371, %v371
  %v436 = vpack.c.b16 %v372, %v372
  %v437 = vpack.c.b16 %v373, %v373
  %v438 = vpack.c.b16 %v374, %v374
  %v439 = vpack.c.b16 %v375, %v375
  %v440 = vpack.c.b16 %v376, %v376
  %v441 = vpack.c.b16 %v377, %v377
  %v442 = vpack.c.b16 %v378, %v378
  %v443 = vpack.c.b16 %v379, %v379
  %v444 = vpack.c.b16 %v380, %v380
  %v445 = vpack.c.b16 %v381, %v381
  %v446 = vpack.c.b16 %v382, %v382
  %v447 = vpack.c.b16 %v383, %v383
  %v448 = vpack.c.b16 %v384, %v384
  %v449 = vpack.c.b16 %v385, %v385
  %v450 = vpack.c.b16 %v386, %v386
  %v451 = vpack.c.b16 %v387, %v387
  %v452 = vpack.c.b16 %v388, %v388
  %v453 = vpack.c.b16 %v389, %v389
  %v454 = vpack.c.b16 %v390, %v390
  %v455 = vpack.c.b16 %v391, %v391
  %v456 = vpack.c.b16 %v392, %v392
  %v457 = vpack.c.b16 %v393, %v393
  %v458 = vpack.c.b16 %v394, %v394
  %v459 = vpack.c.b16 %v395, %v395
  %v460 = vpack.c.b16 %v396, %v396
  %v461 = vpack.c.b16 %v397, %v397
  %v462 = vpack.c.b16 %v398, %v398
  %v463 = vpack.c.b16 %v399, %v399
  %v464 = vpack.c.b16 %v400, %v400
  %v465 = vpack.c.b16 %v401, %v401
  %v466 = vpack.c.b16 %v402, %v402
  %v467 = vpack.c.b16 %v403, %v403
  %v468 = vpack.c.b16 %v404, %v404
  %v469 = vpack.c.b16 %v405, %v405
  %v470 = vpack.c.b16 %v406, %v406
  %v471 = vpack.c.b16 %v407, %v407
  %v472 = vpack.c.b16 %v408, %v408
  %v473 = vpack.c.b16 %v409, %v409
  %v474 = vpack.c.b16 %v410, %v410
  %v475 = vpack.c.b16 %v411, %v411
  %540 = vst [vmem:[%s3] sm:$0xf] %v412
  %541 = vst [vmem:[%s3 + $0x4] sm:$0xf] %v413
  %542 = vst [vmem:[%s3 + $0x8] sm:$0xf] %v414
  %543 = vst [vmem:[%s3 + $0xc] sm:$0xf] %v415
  %544 = vst [vmem:[%s3 + $0x10] sm:$0xf] %v416
  %545 = vst [vmem:[%s3 + $0x14] sm:$0xf] %v417
  %546 = vst [vmem:[%s3 + $0x18] sm:$0xf] %v418
  %547 = vst [vmem:[%s3 + $0x1c] sm:$0xf] %v419
  %548 = vst [vmem:[%s3 + $0x20] sm:$0xf] %v420
  %549 = vst [vmem:[%s3 + $0x24] sm:$0xf] %v421
  %550 = vst [vmem:[%s3 + $0x28] sm:$0xf] %v422
  %551 = vst [vmem:[%s3 + $0x2c] sm:$0xf] %v423
  %552 = vst [vmem:[%s3 + $0x30] sm:$0xf] %v424
  %553 = vst [vmem:[%s3 + $0x34] sm:$0xf] %v425
  %554 = vst [vmem:[%s3 + $0x38] sm:$0xf] %v426
  %555 = vst [vmem:[%s3 + $0x3c] sm:$0xf] %v427
  %556 = vst [vmem:[%s3 + $0x40] sm:$0xf] %v428
  %557 = vst [vmem:[%s3 + $0x44] sm:$0xf] %v429
  %558 = vst [vmem:[%s3 + $0x48] sm:$0xf] %v430
  %559 = vst [vmem:[%s3 + $0x4c] sm:$0xf] %v431
  %560 = vst [vmem:[%s3 + $0x50] sm:$0xf] %v432
  %561 = vst [vmem:[%s3 + $0x54] sm:$0xf] %v433
  %562 = vst [vmem:[%s3 + $0x58] sm:$0xf] %v434
  %563 = vst [vmem:[%s3 + $0x5c] sm:$0xf] %v435
  %564 = vst [vmem:[%s3 + $0x60] sm:$0xf] %v436
  %565 = vst [vmem:[%s3 + $0x64] sm:$0xf] %v437
  %566 = vst [vmem:[%s3 + $0x68] sm:$0xf] %v438
  %567 = vst [vmem:[%s3 + $0x6c] sm:$0xf] %v439
  %568 = vst [vmem:[%s3 + $0x70] sm:$0xf] %v440
  %569 = vst [vmem:[%s3 + $0x74] sm:$0xf] %v441
  %570 = vst [vmem:[%s3 + $0x78] sm:$0xf] %v442
  %571 = vst [vmem:[%s3 + $0x7c] sm:$0xf] %v443
  %572 = vst [vmem:[%s3 + $0x80] sm:$0xf] %v444
  %573 = vst [vmem:[%s3 + $0x84] sm:$0xf] %v445
  %574 = vst [vmem:[%s3 + $0x88] sm:$0xf] %v446
  %575 = vst [vmem:[%s3 + $0x8c] sm:$0xf] %v447
  %576 = vst [vmem:[%s3 + $0x90] sm:$0xf] %v448
  %577 = vst [vmem:[%s3 + $0x94] sm:$0xf] %v449
  %578 = vst [vmem:[%s3 + $0x98] sm:$0xf] %v450
  %579 = vst [vmem:[%s3 + $0x9c] sm:$0xf] %v451
  %580 = vst [vmem:[%s3 + $0xa0] sm:$0xf] %v452
  %581 = vst [vmem:[%s3 + $0xa4] sm:$0xf] %v453
  %582 = vst [vmem:[%s3 + $0xa8] sm:$0xf] %v454
  %583 = vst [vmem:[%s3 + $0xac] sm:$0xf] %v455
  %584 = vst [vmem:[%s3 + $0xb0] sm:$0xf] %v456
  %585 = vst [vmem:[%s3 + $0xb4] sm:$0xf] %v457
  %586 = vst [vmem:[%s3 + $0xb8] sm:$0xf] %v458
  %587 = vst [vmem:[%s3 + $0xbc] sm:$0xf] %v459
  %588 = vst [vmem:[%s3 + $0xc0] sm:$0xf] %v460
  %589 = vst [vmem:[%s3 + $0xc4] sm:$0xf] %v461
  %590 = vst [vmem:[%s3 + $0xc8] sm:$0xf] %v462
  %591 = vst [vmem:[%s3 + $0xcc] sm:$0xf] %v463
  %592 = vst [vmem:[%s3 + $0xd0] sm:$0xf] %v464
  %593 = vst [vmem:[%s3 + $0xd4] sm:$0xf] %v465
  %594 = vst [vmem:[%s3 + $0xd8] sm:$0xf] %v466
  %595 = vst [vmem:[%s3 + $0xdc] sm:$0xf] %v467
  %596 = vst [vmem:[%s3 + $0xe0] sm:$0xf] %v468
  %597 = vst [vmem:[%s3 + $0xe4] sm:$0xf] %v469
  %598 = vst [vmem:[%s3 + $0xe8] sm:$0xf] %v470
  %599 = vst [vmem:[%s3 + $0xec] sm:$0xf] %v471
  %600 = vst [vmem:[%s3 + $0xf0] sm:$0xf] %v472
  %601 = vst [vmem:[%s3 + $0xf4] sm:$0xf] %v473
  %602 = vst [vmem:[%s3 + $0xf8] sm:$0xf] %v474
  %603 = vst [vmem:[%s3 + $0xfc] sm:$0xf] %v475
  // Predicated region
  $region14: #{resnet_unit_forward.7} parent=0 // pred_check
    _
  $region15: #{resnet_unit_forward.7} parent=0 // pred_check_branch
    %605 = sbr.rel (0) target = $region17
  $region16: #{resnet_unit_forward.7} parent=0 // pred_region
    _
  $region17: #{resnet_unit_forward.7} parent=0 // pred_fallthru
    _
  // Predicated region
  $region18: #{resnet_unit_forward.7} parent=0 // pred_check
    _
  $region19: #{resnet_unit_forward.7} parent=0 // pred_check_branch
    %607 = sbr.rel (0) target = $region21
  $region20: #{resnet_unit_forward.7} parent=0 // pred_region
    _
  $region21: #{resnet_unit_forward.7} parent=0 // pred_fallthru
    _

// kernel: resnet_unit_forward.6
$region0: #{resnet_unit_forward.6}
  #allocation0 [shape = 'u32[]', space=smem, size = 0x4, offset = 0x4, fixed_abs, tag = 'smem constant byte address 0x4 - core index']
  #allocation1 [shape = 'u32[144,128]{1,0:T(1,128)}', space=vmem, size = 0x12000, scoped, tag = 'internal scratch']
  %s0 = inlined_call_operand.vmem [shape: bf16[512,128], index: 0, kind: input, shape index: {}]
  %s1 = inlined_call_operand.vmem [shape: f32[1,128], index: 1, kind: input, shape index: {}]
  %s2 = inlined_call_operand.vmem [shape: f32[1,128], index: 2, kind: input, shape index: {}]
  %s3 = inlined_call_operand.vmem [shape: bf16[128,128], index: 3, kind: input, shape index: {}]
  %s4 = inlined_call_operand.vmem [shape: f32[512,128], index: 4, kind: output, shape index: {0}]
  %s5 = inlined_call_operand.vmem [shape: f32[1,2,128], index: 5, kind: output, shape index: {1}]
  %6 = xla_tuple %s4, %s5
  %s7 = sld [smem:[#allocation0]]
  $region34: #{resnet_unit_forward.6} parent=0
    _
  %s9 = ssub.s32 1, %s7
  %s10 = scalar_select 0, %s9, %s7
  // Predicated region
  $region2: #{resnet_unit_forward.6} parent=0 // pred_check
    _
  $region3: #{resnet_unit_forward.6} parent=0 // pred_check_branch
    %12 = sbr.rel (0) target = $region5
  $region4: #{resnet_unit_forward.6} parent=0 // pred_region
    _
  $region5: #{resnet_unit_forward.6} parent=0 // pred_fallthru
    _
  // Predicated region
  $region6: #{resnet_unit_forward.6} parent=0 // pred_check
    _
  $region7: #{resnet_unit_forward.6} parent=0 // pred_check_branch
    %14 = sbr.rel (0) target = $region9
  $region8: #{resnet_unit_forward.6} parent=0 // pred_region
    _
  $region9: #{resnet_unit_forward.6} parent=0 // pred_fallthru
    _
  // Predicated region
  $region10: #{resnet_unit_forward.6} parent=0 // pred_check
    _
  $region11: #{resnet_unit_forward.6} parent=0 // pred_check_branch
    %16 = sbr.rel (0) target = $region13
  $region12: #{resnet_unit_forward.6} parent=0 // pred_region
    _
  $region13: #{resnet_unit_forward.6} parent=0 // pred_fallthru
    _
  // Predicated region
  $region14: #{resnet_unit_forward.6} parent=0 // pred_check
    _
  $region15: #{resnet_unit_forward.6} parent=0 // pred_check_branch
    %18 = sbr.rel (0) target = $region17
  $region16: #{resnet_unit_forward.6} parent=0 // pred_region
    _
  $region17: #{resnet_unit_forward.6} parent=0 // pred_fallthru
    _
  %v20 = vld [vmem:[%s0] sm:$0xf]
  %v21 = vld [vmem:[%s0 + $0x4] sm:$0xf]
  %v22 = vld [vmem:[%s0 + $0x8] sm:$0xf]
  %v23 = vld [vmem:[%s0 + $0xc] sm:$0xf]
  %v24 = vld [vmem:[%s0 + $0x10] sm:$0xf]
  %v25 = vld [vmem:[%s0 + $0x14] sm:$0xf]
  %v26 = vld [vmem:[%s0 + $0x18] sm:$0xf]
  %v27 = vld [vmem:[%s0 + $0x1c] sm:$0xf]
  %v28 = vld [vmem:[%s0 + $0x20] sm:$0xf]
  %v29 = vld [vmem:[%s0 + $0x24] sm:$0xf]
  %v30 = vld [vmem:[%s0 + $0x28] sm:$0xf]
  %v31 = vld [vmem:[%s0 + $0x2c] sm:$0xf]
  %v32 = vld [vmem:[%s0 + $0x30] sm:$0xf]
  %v33 = vld [vmem:[%s0 + $0x34] sm:$0xf]
  %v34 = vld [vmem:[%s0 + $0x38] sm:$0xf]
  %v35 = vld [vmem:[%s0 + $0x3c] sm:$0xf]
  %v36 = vld [vmem:[%s0 + $0x40] sm:$0xf]
  %v37 = vld [vmem:[%s0 + $0x44] sm:$0xf]
  %v38 = vld [vmem:[%s0 + $0x48] sm:$0xf]
  %v39 = vld [vmem:[%s0 + $0x4c] sm:$0xf]
  %v40 = vld [vmem:[%s0 + $0x50] sm:$0xf]
  %v41 = vld [vmem:[%s0 + $0x54] sm:$0xf]
  %v42 = vld [vmem:[%s0 + $0x58] sm:$0xf]
  %v43 = vld [vmem:[%s0 + $0x5c] sm:$0xf]
  %v44 = vld [vmem:[%s0 + $0x60] sm:$0xf]
  %v45 = vld [vmem:[%s0 + $0x64] sm:$0xf]
  %v46 = vld [vmem:[%s0 + $0x68] sm:$0xf]
  %v47 = vld [vmem:[%s0 + $0x6c] sm:$0xf]
  %v48 = vld [vmem:[%s0 + $0x70] sm:$0xf]
  %v49 = vld [vmem:[%s0 + $0x74] sm:$0xf]
  %v50 = vld [vmem:[%s0 + $0x78] sm:$0xf]
  %v51 = vld [vmem:[%s0 + $0x7c] sm:$0xf]
  %v52 = vld [vmem:[%s0 + $0x80] sm:$0xf]
  %v53 = vld [vmem:[%s0 + $0x84] sm:$0xf]
  %v54 = vld [vmem:[%s0 + $0x88] sm:$0xf]
  %v55 = vld [vmem:[%s0 + $0x8c] sm:$0xf]
  %v56 = vld [vmem:[%s0 + $0x90] sm:$0xf]
  %v57 = vld [vmem:[%s0 + $0x94] sm:$0xf]
  %v58 = vld [vmem:[%s0 + $0x98] sm:$0xf]
  %v59 = vld [vmem:[%s0 + $0x9c] sm:$0xf]
  %v60 = vld [vmem:[%s0 + $0xa0] sm:$0xf]
  %v61 = vld [vmem:[%s0 + $0xa4] sm:$0xf]
  %v62 = vld [vmem:[%s0 + $0xa8] sm:$0xf]
  %v63 = vld [vmem:[%s0 + $0xac] sm:$0xf]
  %v64 = vld [vmem:[%s0 + $0xb0] sm:$0xf]
  %v65 = vld [vmem:[%s0 + $0xb4] sm:$0xf]
  %v66 = vld [vmem:[%s0 + $0xb8] sm:$0xf]
  %v67 = vld [vmem:[%s0 + $0xbc] sm:$0xf]
  %v68 = vld [vmem:[%s0 + $0xc0] sm:$0xf]
  %v69 = vld [vmem:[%s0 + $0xc4] sm:$0xf]
  %v70 = vld [vmem:[%s0 + $0xc8] sm:$0xf]
  %v71 = vld [vmem:[%s0 + $0xcc] sm:$0xf]
  %v72 = vld [vmem:[%s0 + $0xd0] sm:$0xf]
  %v73 = vld [vmem:[%s0 + $0xd4] sm:$0xf]
  %v74 = vld [vmem:[%s0 + $0xd8] sm:$0xf]
  %v75 = vld [vmem:[%s0 + $0xdc] sm:$0xf]
  %v76 = vld [vmem:[%s0 + $0xe0] sm:$0xf]
  %v77 = vld [vmem:[%s0 + $0xe4] sm:$0xf]
  %v78 = vld [vmem:[%s0 + $0xe8] sm:$0xf]
  %v79 = vld [vmem:[%s0 + $0xec] sm:$0xf]
  %v80 = vld [vmem:[%s0 + $0xf0] sm:$0xf]
  %v81 = vld [vmem:[%s0 + $0xf4] sm:$0xf]
  %v82 = vld [vmem:[%s0 + $0xf8] sm:$0xf]
  %v83 = vld [vmem:[%s0 + $0xfc] sm:$0xf]
  %v84 = vld [vmem:[%s3] sm:$0xf]
  %v85 = vld [vmem:[%s3 + $0x4] sm:$0xf]
  %v86 = vld [vmem:[%s3 + $0x8] sm:$0xf]
  %v87 = vld [vmem:[%s3 + $0xc] sm:$0xf]
  %v88 = vld [vmem:[%s3 + $0x10] sm:$0xf]
  %v89 = vld [vmem:[%s3 + $0x14] sm:$0xf]
  %v90 = vld [vmem:[%s3 + $0x18] sm:$0xf]
  %v91 = vld [vmem:[%s3 + $0x1c] sm:$0xf]
  %v92 = vld [vmem:[%s3 + $0x20] sm:$0xf]
  %v93 = vld [vmem:[%s3 + $0x24] sm:$0xf]
  %v94 = vld [vmem:[%s3 + $0x28] sm:$0xf]
  %v95 = vld [vmem:[%s3 + $0x2c] sm:$0xf]
  %v96 = vld [vmem:[%s3 + $0x30] sm:$0xf]
  %v97 = vld [vmem:[%s3 + $0x34] sm:$0xf]
  %v98 = vld [vmem:[%s3 + $0x38] sm:$0xf]
  %v99 = vld [vmem:[%s3 + $0x3c] sm:$0xf]
  %v164 = vunpack.c.l.b16 %v20
  %v165 = vunpack.c.l.b16 %v21
  %v166 = vunpack.c.l.b16 %v22
  %v167 = vunpack.c.l.b16 %v23
  %v168 = vunpack.c.l.b16 %v24
  %v169 = vunpack.c.l.b16 %v25
  %v170 = vunpack.c.l.b16 %v26
  %v171 = vunpack.c.l.b16 %v27
  %v172 = vunpack.c.l.b16 %v28
  %v173 = vunpack.c.l.b16 %v29
  %v174 = vunpack.c.l.b16 %v30
  %v175 = vunpack.c.l.b16 %v31
  %v176 = vunpack.c.l.b16 %v32
  %v177 = vunpack.c.l.b16 %v33
  %v178 = vunpack.c.l.b16 %v34
  %v179 = vunpack.c.l.b16 %v35
  %v180 = vunpack.c.l.b16 %v36
  %v181 = vunpack.c.l.b16 %v37
  %v182 = vunpack.c.l.b16 %v38
  %v183 = vunpack.c.l.b16 %v39
  %v184 = vunpack.c.l.b16 %v40
  %v185 = vunpack.c.l.b16 %v41
  %v186 = vunpack.c.l.b16 %v42
  %v187 = vunpack.c.l.b16 %v43
  %v188 = vunpack.c.l.b16 %v44
  %v189 = vunpack.c.l.b16 %v45
  %v190 = vunpack.c.l.b16 %v46
  %v191 = vunpack.c.l.b16 %v47
  %v192 = vunpack.c.l.b16 %v48
  %v193 = vunpack.c.l.b16 %v49
  %v194 = vunpack.c.l.b16 %v50
  %v195 = vunpack.c.l.b16 %v51
  %v196 = vunpack.c.l.b16 %v52
  %v197 = vunpack.c.l.b16 %v53
  %v198 = vunpack.c.l.b16 %v54
  %v199 = vunpack.c.l.b16 %v55
  %v200 = vunpack.c.l.b16 %v56
  %v201 = vunpack.c.l.b16 %v57
  %v202 = vunpack.c.l.b16 %v58
  %v203 = vunpack.c.l.b16 %v59
  %v204 = vunpack.c.l.b16 %v60
  %v205 = vunpack.c.l.b16 %v61
  %v206 = vunpack.c.l.b16 %v62
  %v207 = vunpack.c.l.b16 %v63
  %v208 = vunpack.c.l.b16 %v64
  %v209 = vunpack.c.l.b16 %v65
  %v210 = vunpack.c.l.b16 %v66
  %v211 = vunpack.c.l.b16 %v67
  %v212 = vunpack.c.l.b16 %v68
  %v213 = vunpack.c.l.b16 %v69
  %v214 = vunpack.c.l.b16 %v70
  %v215 = vunpack.c.l.b16 %v71
  %v216 = vunpack.c.l.b16 %v72
  %v217 = vunpack.c.l.b16 %v73
  %v218 = vunpack.c.l.b16 %v74
  %v219 = vunpack.c.l.b16 %v75
  %v220 = vunpack.c.l.b16 %v76
  %v221 = vunpack.c.l.b16 %v77
  %v222 = vunpack.c.l.b16 %v78
  %v223 = vunpack.c.l.b16 %v79
  %v224 = vunpack.c.l.b16 %v80
  %v225 = vunpack.c.l.b16 %v81
  %v226 = vunpack.c.l.b16 %v82
  %v227 = vunpack.c.l.b16 %v83
  %v228 = vpack.c.b16 %v165, %v164
  %v229 = vpack.c.b16 %v167, %v166
  %v230 = vpack.c.b16 %v169, %v168
  %v231 = vpack.c.b16 %v171, %v170
  %v232 = vpack.c.b16 %v173, %v172
  %v233 = vpack.c.b16 %v175, %v174
  %v234 = vpack.c.b16 %v177, %v176
  %v235 = vpack.c.b16 %v179, %v178
  %v236 = vpack.c.b16 %v181, %v180
  %v237 = vpack.c.b16 %v183, %v182
  %v238 = vpack.c.b16 %v185, %v184
  %v239 = vpack.c.b16 %v187, %v186
  %v240 = vpack.c.b16 %v189, %v188
  %v241 = vpack.c.b16 %v191, %v190
  %v242 = vpack.c.b16 %v193, %v192
  %v243 = vpack.c.b16 %v195, %v194
  %v244 = vpack.c.b16 %v197, %v196
  %v245 = vpack.c.b16 %v199, %v198
  %v246 = vpack.c.b16 %v201, %v200
  %v247 = vpack.c.b16 %v203, %v202
  %v248 = vpack.c.b16 %v205, %v204
  %v249 = vpack.c.b16 %v207, %v206
  %v250 = vpack.c.b16 %v209, %v208
  %v251 = vpack.c.b16 %v211, %v210
  %v252 = vpack.c.b16 %v213, %v212
  %v253 = vpack.c.b16 %v215, %v214
  %v254 = vpack.c.b16 %v217, %v216
  %v255 = vpack.c.b16 %v219, %v218
  %v256 = vpack.c.b16 %v221, %v220
  %v257 = vpack.c.b16 %v223, %v222
  %v258 = vpack.c.b16 %v225, %v224
  %v259 = vpack.c.b16 %v227, %v226
  %v308 = vunpack.c.l.b16 %v84
  %v309 = vunpack.c.l.b16 %v85
  %v310 = vunpack.c.l.b16 %v86
  %v311 = vunpack.c.l.b16 %v87
  %v312 = vunpack.c.l.b16 %v88
  %v313 = vunpack.c.l.b16 %v89
  %v314 = vunpack.c.l.b16 %v90
  %v315 = vunpack.c.l.b16 %v91
  %v316 = vunpack.c.l.b16 %v92
  %v317 = vunpack.c.l.b16 %v93
  %v318 = vunpack.c.l.b16 %v94
  %v319 = vunpack.c.l.b16 %v95
  %v320 = vunpack.c.l.b16 %v96
  %v321 = vunpack.c.l.b16 %v97
  %v322 = vunpack.c.l.b16 %v98
  %v323 = vunpack.c.l.b16 %v99
  %v324 = vpack.c.b16 %v309, %v308
  %v325 = vpack.c.b16 %v311, %v310
  %v326 = vpack.c.b16 %v313, %v312
  %v327 = vpack.c.b16 %v315, %v314
  %v328 = vpack.c.b16 %v317, %v316
  %v329 = vpack.c.b16 %v319, %v318
  %v330 = vpack.c.b16 %v321, %v320
  %v331 = vpack.c.b16 %v323, %v322
  %340 = vmatprep.subr.bf16.mxu0 0
  %341 = vmatpush1.bf16.msra.mxu0 %v324
  %342 = vmatprep.subr.bf16.mxu0 0
  %343 = vmatpush1.bf16.msra.mxu0 %v325
  %344 = vmatprep.subr.bf16.mxu0 0
  %345 = vmatpush1.bf16.msra.mxu0 %v326
  %346 = vmatprep.subr.bf16.mxu0 0
  %347 = vmatpush1.bf16.msra.mxu0 %v327
  %348 = vmatprep.subr.bf16.mxu0 0
  %349 = vmatpush1.bf16.msra.mxu0 %v328
  %350 = vmatprep.subr.bf16.mxu0 0
  %351 = vmatpush1.bf16.msra.mxu0 %v329
  %352 = vmatprep.subr.bf16.mxu0 0
  %353 = vmatpush1.bf16.msra.mxu0 %v330
  %354 = vmatprep.subr.bf16.mxu0 0
  %355 = vmatpush1.bf16.msra.mxu0 %v331
  %356 = vmatprep.subr.bf16.mxu0 0
  %357 = vmatpush1.bf16.msra.mxu0 0
  %358 = vmatprep.subr.bf16.mxu0 0
  %359 = vmatpush1.bf16.msra.mxu0 0
  %360 = vmatprep.subr.bf16.mxu0 0
  %361 = vmatpush1.bf16.msra.mxu0 0
  %362 = vmatprep.subr.bf16.mxu0 0
  %363 = vmatpush1.bf16.msra.mxu0 0
  %364 = vmatprep.subr.bf16.mxu0 0
  %365 = vmatpush1.bf16.msra.mxu0 0
  %366 = vmatprep.subr.bf16.mxu0 0
  %367 = vmatpush1.bf16.msra.mxu0 0
  %368 = vmatprep.subr.bf16.mxu0 0
  %369 = vmatpush1.bf16.msra.mxu0 0
  %370 = vmatprep.subr.bf16.mxu0 0
  %371 = vmatpush1.bf16.msra.mxu0 0
  %372 = vmatprep.mubr.bf16.mxu0 0
  %373 = vmatmul.mubr.bf16.gmra.mrb[0].mxu0 %v228
  %v374 = vpop.f32.mrb[0].mxu0
  %v375 = vadd.f32 0.0, %v374
  %v376 = vpop.f32.mrb[0].mxu0
  %v377 = vpop.f32.mrb[0].mxu0
  %v378 = vadd.f32 0.0, %v377
  %v379 = vpop.f32.mrb[0].mxu0
  %380 = vmatprep.mubr.bf16.mxu0 0
  %381 = vmatmul.mubr.bf16.gmra.mrb[0].mxu0 %v229
  %v382 = vpop.f32.mrb[0].mxu0
  %v383 = vadd.f32 0.0, %v382
  %v384 = vpop.f32.mrb[0].mxu0
  %v385 = vpop.f32.mrb[0].mxu0
  %v386 = vadd.f32 0.0, %v385
  %v387 = vpop.f32.mrb[0].mxu0
  %388 = vmatprep.mubr.bf16.mxu0 0
  %389 = vmatmul.mubr.bf16.gmra.mrb[0].mxu0 %v230
  %v390 = vpop.f32.mrb[0].mxu0
  %v391 = vadd.f32 0.0, %v390
  %v392 = vpop.f32.mrb[0].mxu0
  %v393 = vpop.f32.mrb[0].mxu0
  %v394 = vadd.f32 0.0, %v393
  %v395 = vpop.f32.mrb[0].mxu0
  %396 = vmatprep.mubr.bf16.mxu0 0
  %397 = vmatmul.mubr.bf16.gmra.mrb[0].mxu0 %v231
  %v398 = vpop.f32.mrb[0].mxu0
  %v399 = vadd.f32 0.0, %v398
  %v400 = vpop.f32.mrb[0].mxu0
  %v401 = vpop.f32.mrb[0].mxu0
  %v402 = vadd.f32 0.0, %v401
  %v403 = vpop.f32.mrb[0].mxu0
  %404 = vmatprep.mubr.bf16.mxu0 0
  %405 = vmatmul.mubr.bf16.gmra.mrb[0].mxu0 %v232
  %v406 = vpop.f32.mrb[0].mxu0
  %v407 = vadd.f32 0.0, %v406
  %v408 = vpop.f32.mrb[0].mxu0
  %v409 = vpop.f32.mrb[0].mxu0
  %v410 = vadd.f32 0.0, %v409
  %v411 = vpop.f32.mrb[0].mxu0
  %412 = vmatprep.mubr.bf16.mxu0 0
  %413 = vmatmul.mubr.bf16.gmra.mrb[0].mxu0 %v233
  %v414 = vpop.f32.mrb[0].mxu0
  %v415 = vadd.f32 0.0, %v414
  %v416 = vpop.f32.mrb[0].mxu0
  %v417 = vpop.f32.mrb[0].mxu0
  %v418 = vadd.f32 0.0, %v417
  %v419 = vpop.f32.mrb[0].mxu0
  %420 = vmatprep.mubr.bf16.mxu0 0
  %421 = vmatmul.mubr.bf16.gmra.mrb[0].mxu0 %v234
  %v422 = vpop.f32.mrb[0].mxu0
  %v423 = vadd.f32 0.0, %v422
  %v424 = vpop.f32.mrb[0].mxu0
  %v425 = vpop.f32.mrb[0].mxu0
  %v426 = vadd.f32 0.0, %v425
  %v427 = vpop.f32.mrb[0].mxu0
  %428 = vmatprep.mubr.bf16.mxu0 0
  %429 = vmatmul.mubr.bf16.gmra.mrb[0].mxu0 %v235
  %v430 = vpop.f32.mrb[0].mxu0
  %v431 = vadd.f32 0.0, %v430
  %v432 = vpop.f32.mrb[0].mxu0
  %v433 = vpop.f32.mrb[0].mxu0
  %v434 = vadd.f32 0.0, %v433
  %v435 = vpop.f32.mrb[0].mxu0
  %436 = vmatprep.mubr.bf16.mxu0 0
  %437 = vmatmul.mubr.bf16.gmra.mrb[0].mxu0 %v236
  %v438 = vpop.f32.mrb[0].mxu0
  %v439 = vadd.f32 0.0, %v438
  %v440 = vpop.f32.mrb[0].mxu0
  %v441 = vpop.f32.mrb[0].mxu0
  %v442 = vadd.f32 0.0, %v441
  %v443 = vpop.f32.mrb[0].mxu0
  %444 = vmatprep.mubr.bf16.mxu0 0
  %445 = vmatmul.mubr.bf16.gmra.mrb[0].mxu0 %v237
  %v446 = vpop.f32.mrb[0].mxu0
  %v447 = vadd.f32 0.0, %v446
  %v448 = vpop.f32.mrb[0].mxu0
  %v449 = vpop.f32.mrb[0].mxu0
  %v450 = vadd.f32 0.0, %v449
  %v451 = vpop.f32.mrb[0].mxu0
  %452 = vmatprep.mubr.bf16.mxu0 0
  %453 = vmatmul.mubr.bf16.gmra.mrb[0].mxu0 %v238
  %v454 = vpop.f32.mrb[0].mxu0
  %v455 = vadd.f32 0.0, %v454
  %v456 = vpop.f32.mrb[0].mxu0
  %v457 = vpop.f32.mrb[0].mxu0
  %v458 = vadd.f32 0.0, %v457
  %v459 = vpop.f32.mrb[0].mxu0
  %460 = vmatprep.mubr.bf16.mxu0 0
  %461 = vmatmul.mubr.bf16.gmra.mrb[0].mxu0 %v239
  %v462 = vpop.f32.mrb[0].mxu0
  %v463 = vadd.f32 0.0, %v462
  %v464 = vpop.f32.mrb[0].mxu0
  %v465 = vpop.f32.mrb[0].mxu0
  %v466 = vadd.f32 0.0, %v465
  %v467 = vpop.f32.mrb[0].mxu0
  %468 = vmatprep.mubr.bf16.mxu0 0
  %469 = vmatmul.mubr.bf16.gmra.mrb[0].mxu0 %v240
  %v470 = vpop.f32.mrb[0].mxu0
  %v471 = vadd.f32 0.0, %v470
  %v472 = vpop.f32.mrb[0].mxu0
  %v473 = vpop.f32.mrb[0].mxu0
  %v474 = vadd.f32 0.0, %v473
  %v475 = vpop.f32.mrb[0].mxu0
  %476 = vmatprep.mubr.bf16.mxu0 0
  %477 = vmatmul.mubr.bf16.gmra.mrb[0].mxu0 %v241
  %v478 = vpop.f32.mrb[0].mxu0
  %v479 = vadd.f32 0.0, %v478
  %v480 = vpop.f32.mrb[0].mxu0
  %v481 = vpop.f32.mrb[0].mxu0
  %v482 = vadd.f32 0.0, %v481
  %v483 = vpop.f32.mrb[0].mxu0
  %484 = vmatprep.mubr.bf16.mxu0 0
  %485 = vmatmul.mubr.bf16.gmra.mrb[0].mxu0 %v242
  %v486 = vpop.f32.mrb[0].mxu0
  %v487 = vadd.f32 0.0, %v486
  %v488 = vpop.f32.mrb[0].mxu0
  %v489 = vpop.f32.mrb[0].mxu0
  %v490 = vadd.f32 0.0, %v489
  %v491 = vpop.f32.mrb[0].mxu0
  %492 = vmatprep.mubr.bf16.mxu0 0
  %493 = vmatmul.mubr.bf16.gmra.mrb[0].mxu0 %v243
  %v494 = vpop.f32.mrb[0].mxu0
  %v495 = vadd.f32 0.0, %v494
  %v496 = vpop.f32.mrb[0].mxu0
  %v497 = vpop.f32.mrb[0].mxu0
  %v498 = vadd.f32 0.0, %v497
  %v499 = vpop.f32.mrb[0].mxu0
  %500 = vmatprep.mubr.bf16.mxu0 0
  %501 = vmatmul.mubr.bf16.gmra.mrb[0].mxu0 %v244
  %v502 = vpop.f32.mrb[0].mxu0
  %v503 = vadd.f32 0.0, %v502
  %v504 = vpop.f32.mrb[0].mxu0
  %v505 = vpop.f32.mrb[0].mxu0
  %v506 = vadd.f32 0.0, %v505
  %v507 = vpop.f32.mrb[0].mxu0
  %508 = vmatprep.mubr.bf16.mxu0 0
  %509 = vmatmul.mubr.bf16.gmra.mrb[0].mxu0 %v245
  %v510 = vpop.f32.mrb[0].mxu0
  %v511 = vadd.f32 0.0, %v510
  %v512 = vpop.f32.mrb[0].mxu0
  %v513 = vpop.f32.mrb[0].mxu0
  %v514 = vadd.f32 0.0, %v513
  %v515 = vpop.f32.mrb[0].mxu0
  %516 = vmatprep.mubr.bf16.mxu0 0
  %517 = vmatmul.mubr.bf16.gmra.mrb[0].mxu0 %v246
  %v518 = vpop.f32.mrb[0].mxu0
  %v519 = vadd.f32 0.0, %v518
  %v520 = vpop.f32.mrb[0].mxu0
  %v521 = vpop.f32.mrb[0].mxu0
  %v522 = vadd.f32 0.0, %v521
  %v523 = vpop.f32.mrb[0].mxu0
  %524 = vmatprep.mubr.bf16.mxu0 0
  %525 = vmatmul.mubr.bf16.gmra.mrb[0].mxu0 %v247
  %v526 = vpop.f32.mrb[0].mxu0
  %v527 = vadd.f32 0.0, %v526
  %v528 = vpop.f32.mrb[0].mxu0
  %v529 = vpop.f32.mrb[0].mxu0
  %v530 = vadd.f32 0.0, %v529
  %v531 = vpop.f32.mrb[0].mxu0
  %532 = vmatprep.mubr.bf16.mxu0 0
  %533 = vmatmul.mubr.bf16.gmra.mrb[0].mxu0 %v248
  %v534 = vpop.f32.mrb[0].mxu0
  %v535 = vadd.f32 0.0, %v534
  %v536 = vpop.f32.mrb[0].mxu0
  %v537 = vpop.f32.mrb[0].mxu0
  %v538 = vadd.f32 0.0, %v537
  %v539 = vpop.f32.mrb[0].mxu0
  %540 = vmatprep.mubr.bf16.mxu0 0
  %541 = vmatmul.mubr.bf16.gmra.mrb[0].mxu0 %v249
  %v542 = vpop.f32.mrb[0].mxu0
  %v543 = vadd.f32 0.0, %v542
  %v544 = vpop.f32.mrb[0].mxu0
  %v545 = vpop.f32.mrb[0].mxu0
  %v546 = vadd.f32 0.0, %v545
  %v547 = vpop.f32.mrb[0].mxu0
  %548 = vmatprep.mubr.bf16.mxu0 0
  %549 = vmatmul.mubr.bf16.gmra.mrb[0].mxu0 %v250
  %v550 = vpop.f32.mrb[0].mxu0
  %v551 = vadd.f32 0.0, %v550
  %v552 = vpop.f32.mrb[0].mxu0
  %v553 = vpop.f32.mrb[0].mxu0
  %v554 = vadd.f32 0.0, %v553
  %v555 = vpop.f32.mrb[0].mxu0
  %556 = vmatprep.mubr.bf16.mxu0 0
  %557 = vmatmul.mubr.bf16.gmra.mrb[0].mxu0 %v251
  %v558 = vpop.f32.mrb[0].mxu0
  %v559 = vadd.f32 0.0, %v558
  %v560 = vpop.f32.mrb[0].mxu0
  %v561 = vpop.f32.mrb[0].mxu0
  %v562 = vadd.f32 0.0, %v561
  %v563 = vpop.f32.mrb[0].mxu0
  %564 = vmatprep.mubr.bf16.mxu0 0
  %565 = vmatmul.mubr.bf16.gmra.mrb[0].mxu0 %v252
  %v566 = vpop.f32.mrb[0].mxu0
  %v567 = vadd.f32 0.0, %v566
  %v568 = vpop.f32.mrb[0].mxu0
  %v569 = vpop.f32.mrb[0].mxu0
  %v570 = vadd.f32 0.0, %v569
  %v571 = vpop.f32.mrb[0].mxu0
  %572 = vmatprep.mubr.bf16.mxu0 0
  %573 = vmatmul.mubr.bf16.gmra.mrb[0].mxu0 %v253
  %v574 = vpop.f32.mrb[0].mxu0
  %v575 = vadd.f32 0.0, %v574
  %v576 = vpop.f32.mrb[0].mxu0
  %v577 = vpop.f32.mrb[0].mxu0
  %v578 = vadd.f32 0.0, %v577
  %v579 = vpop.f32.mrb[0].mxu0
  %580 = vmatprep.mubr.bf16.mxu0 0
  %581 = vmatmul.mubr.bf16.gmra.mrb[0].mxu0 %v254
  %v582 = vpop.f32.mrb[0].mxu0
  %v583 = vadd.f32 0.0, %v582
  %v584 = vpop.f32.mrb[0].mxu0
  %v585 = vpop.f32.mrb[0].mxu0
  %v586 = vadd.f32 0.0, %v585
  %v587 = vpop.f32.mrb[0].mxu0
  %588 = vmatprep.mubr.bf16.mxu0 0
  %589 = vmatmul.mubr.bf16.gmra.mrb[0].mxu0 %v255
  %v590 = vpop.f32.mrb[0].mxu0
  %v591 = vadd.f32 0.0, %v590
  %v592 = vpop.f32.mrb[0].mxu0
  %v593 = vpop.f32.mrb[0].mxu0
  %v594 = vadd.f32 0.0, %v593
  %v595 = vpop.f32.mrb[0].mxu0
  %596 = vmatprep.mubr.bf16.mxu0 0
  %597 = vmatmul.mubr.bf16.gmra.mrb[0].mxu0 %v256
  %v598 = vpop.f32.mrb[0].mxu0
  %v599 = vadd.f32 0.0, %v598
  %v600 = vpop.f32.mrb[0].mxu0
  %v601 = vpop.f32.mrb[0].mxu0
  %v602 = vadd.f32 0.0, %v601
  %v603 = vpop.f32.mrb[0].mxu0
  %604 = vmatprep.mubr.bf16.mxu0 0
  %605 = vmatmul.mubr.bf16.gmra.mrb[0].mxu0 %v257
  %v606 = vpop.f32.mrb[0].mxu0
  %v607 = vadd.f32 0.0, %v606
  %v608 = vpop.f32.mrb[0].mxu0
  %v609 = vpop.f32.mrb[0].mxu0
  %v610 = vadd.f32 0.0, %v609
  %v611 = vpop.f32.mrb[0].mxu0
  %612 = vmatprep.mubr.bf16.mxu0 0
  %613 = vmatmul.mubr.bf16.gmra.mrb[0].mxu0 %v258
  %v614 = vpop.f32.mrb[0].mxu0
  %v615 = vadd.f32 0.0, %v614
  %v616 = vpop.f32.mrb[0].mxu0
  %v617 = vpop.f32.mrb[0].mxu0
  %v618 = vadd.f32 0.0, %v617
  %v619 = vpop.f32.mrb[0].mxu0
  %620 = vmatprep.mubr.bf16.mxu0 0
  %621 = vmatmul.mubr.bf16.gmra.mrb[0].mxu0 %v259
  %v622 = vpop.f32.mrb[0].mxu0
  %v623 = vadd.f32 0.0, %v622
  %v624 = vpop.f32.mrb[0].mxu0
  %v625 = vpop.f32.mrb[0].mxu0
  %v626 = vadd.f32 0.0, %v625
  %v627 = vpop.f32.mrb[0].mxu0
  %628 = vdwg.mxu0
  %629 = vst [vmem:[%s4] sm:$0xff] %v375
  %630 = vst [vmem:[%s4 + $0x8] sm:$0xff] %v378
  %631 = vst [vmem:[%s4 + $0x10] sm:$0xff] %v383
  %632 = vst [vmem:[%s4 + $0x18] sm:$0xff] %v386
  %633 = vst [vmem:[%s4 + $0x20] sm:$0xff] %v391
  %634 = vst [vmem:[%s4 + $0x28] sm:$0xff] %v394
  %635 = vst [vmem:[%s4 + $0x30] sm:$0xff] %v399
  %636 = vst [vmem:[%s4 + $0x38] sm:$0xff] %v402
  %637 = vst [vmem:[%s4 + $0x40] sm:$0xff] %v407
  %638 = vst [vmem:[%s4 + $0x48] sm:$0xff] %v410
  %639 = vst [vmem:[%s4 + $0x50] sm:$0xff] %v415
  %640 = vst [vmem:[%s4 + $0x58] sm:$0xff] %v418
  %641 = vst [vmem:[%s4 + $0x60] sm:$0xff] %v423
  %642 = vst [vmem:[%s4 + $0x68] sm:$0xff] %v426
  %643 = vst [vmem:[%s4 + $0x70] sm:$0xff] %v431
  %644 = vst [vmem:[%s4 + $0x78] sm:$0xff] %v434
  %645 = vst [vmem:[%s4 + $0x80] sm:$0xff] %v439
  %646 = vst [vmem:[%s4 + $0x88] sm:$0xff] %v442
  %647 = vst [vmem:[%s4 + $0x90] sm:$0xff] %v447
  %648 = vst [vmem:[%s4 + $0x98] sm:$0xff] %v450
  %649 = vst [vmem:[%s4 + $0xa0] sm:$0xff] %v455
  %650 = vst [vmem:[%s4 + $0xa8] sm:$0xff] %v458
  %651 = vst [vmem:[%s4 + $0xb0] sm:$0xff] %v463
  %652 = vst [vmem:[%s4 + $0xb8] sm:$0xff] %v466
  %653 = vst [vmem:[%s4 + $0xc0] sm:$0xff] %v471
  %654 = vst [vmem:[%s4 + $0xc8] sm:$0xff] %v474
  %655 = vst [vmem:[%s4 + $0xd0] sm:$0xff] %v479
  %656 = vst [vmem:[%s4 + $0xd8] sm:$0xff] %v482
  %657 = vst [vmem:[%s4 + $0xe0] sm:$0xff] %v487
  %658 = vst [vmem:[%s4 + $0xe8] sm:$0xff] %v490
  %659 = vst [vmem:[%s4 + $0xf0] sm:$0xff] %v495
  %660 = vst [vmem:[%s4 + $0xf8] sm:$0xff] %v498
  %661 = vst [vmem:[%s4 + $0x100] sm:$0xff] %v503
  %662 = vst [vmem:[%s4 + $0x108] sm:$0xff] %v506
  %663 = vst [vmem:[%s4 + $0x110] sm:$0xff] %v511
  %664 = vst [vmem:[%s4 + $0x118] sm:$0xff] %v514
  %665 = vst [vmem:[%s4 + $0x120] sm:$0xff] %v519
  %666 = vst [vmem:[%s4 + $0x128] sm:$0xff] %v522
  %667 = vst [vmem:[%s4 + $0x130] sm:$0xff] %v527
  %668 = vst [vmem:[%s4 + $0x138] sm:$0xff] %v530
  %669 = vst [vmem:[%s4 + $0x140] sm:$0xff] %v535
  %670 = vst [vmem:[%s4 + $0x148] sm:$0xff] %v538
  %671 = vst [vmem:[%s4 + $0x150] sm:$0xff] %v543
  %672 = vst [vmem:[%s4 + $0x158] sm:$0xff] %v546
  %673 = vst [vmem:[%s4 + $0x160] sm:$0xff] %v551
  %674 = vst [vmem:[%s4 + $0x168] sm:$0xff] %v554
  %675 = vst [vmem:[%s4 + $0x170] sm:$0xff] %v559
  %676 = vst [vmem:[%s4 + $0x178] sm:$0xff] %v562
  %677 = vst [vmem:[%s4 + $0x180] sm:$0xff] %v567
  %678 = vst [vmem:[%s4 + $0x188] sm:$0xff] %v570
  %679 = vst [vmem:[%s4 + $0x190] sm:$0xff] %v575
  %680 = vst [vmem:[%s4 + $0x198] sm:$0xff] %v578
  %681 = vst [vmem:[%s4 + $0x1a0] sm:$0xff] %v583
  %682 = vst [vmem:[%s4 + $0x1a8] sm:$0xff] %v586
  %683 = vst [vmem:[%s4 + $0x1b0] sm:$0xff] %v591
  %684 = vst [vmem:[%s4 + $0x1b8] sm:$0xff] %v594
  %685 = vst [vmem:[%s4 + $0x1c0] sm:$0xff] %v599
  %686 = vst [vmem:[%s4 + $0x1c8] sm:$0xff] %v602
  %687 = vst [vmem:[%s4 + $0x1d0] sm:$0xff] %v607
  %688 = vst [vmem:[%s4 + $0x1d8] sm:$0xff] %v610
  %689 = vst [vmem:[%s4 + $0x1e0] sm:$0xff] %v615
  %690 = vst [vmem:[%s4 + $0x1e8] sm:$0xff] %v618
  %691 = vst [vmem:[%s4 + $0x1f0] sm:$0xff] %v623
  %692 = vst [vmem:[%s4 + $0x1f8] sm:$0xff] %v626
  %v693 = vadd.f32 %v375, %v378
  %v694 = vadd.f32 %v693, %v383
  %v695 = vadd.f32 %v694, %v386
  %v696 = vadd.f32 %v695, %v391
  %v697 = vadd.f32 %v696, %v394
  %v698 = vadd.f32 %v697, %v399
  %v699 = vadd.f32 %v698, %v402
  %v700 = vadd.f32 %v699, %v407
  %v701 = vadd.f32 %v700, %v410
  %v702 = vadd.f32 %v701, %v415
  %v703 = vadd.f32 %v702, %v418
  %v704 = vadd.f32 %v703, %v423
  %v705 = vadd.f32 %v704, %v426
  %v706 = vadd.f32 %v705, %v431
  %v707 = vadd.f32 %v706, %v434
  %v708 = vadd.f32 %v707, %v439
  %v709 = vadd.f32 %v708, %v442
  %v710 = vadd.f32 %v709, %v447
  %v711 = vadd.f32 %v710, %v450
  %v712 = vadd.f32 %v711, %v455
  %v713 = vadd.f32 %v712, %v458
  %v714 = vadd.f32 %v713, %v463
  %v715 = vadd.f32 %v714, %v466
  %v716 = vadd.f32 %v715, %v471
  %v717 = vadd.f32 %v716, %v474
  %v718 = vadd.f32 %v717, %v479
  %v719 = vadd.f32 %v718, %v482
  %v720 = vadd.f32 %v719, %v487
  %v721 = vadd.f32 %v720, %v490
  %v722 = vadd.f32 %v721, %v495
  %v723 = vadd.f32 %v722, %v498
  %v724 = vadd.f32 %v723, %v503
  %v725 = vadd.f32 %v724, %v506
  %v726 = vadd.f32 %v725, %v511
  %v727 = vadd.f32 %v726, %v514
  %v728 = vadd.f32 %v727, %v519
  %v729 = vadd.f32 %v728, %v522
  %v730 = vadd.f32 %v729, %v527
  %v731 = vadd.f32 %v730, %v530
  %v732 = vadd.f32 %v731, %v535
  %v733 = vadd.f32 %v732, %v538
  %v734 = vadd.f32 %v733, %v543
  %v735 = vadd.f32 %v734, %v546
  %v736 = vadd.f32 %v735, %v551
  %v737 = vadd.f32 %v736, %v554
  %v738 = vadd.f32 %v737, %v559
  %v739 = vadd.f32 %v738, %v562
  %v740 = vadd.f32 %v739, %v567
  %v741 = vadd.f32 %v740, %v570
  %v742 = vadd.f32 %v741, %v575
  %v743 = vadd.f32 %v742, %v578
  %v744 = vadd.f32 %v743, %v583
  %v745 = vadd.f32 %v744, %v586
  %v746 = vadd.f32 %v745, %v591
  %v747 = vadd.f32 %v746, %v594
  %v748 = vadd.f32 %v747, %v599
  %v749 = vadd.f32 %v748, %v602
  %v750 = vadd.f32 %v749, %v607
  %v751 = vadd.f32 %v750, %v610
  %v752 = vadd.f32 %v751, %v615
  %v753 = vadd.f32 %v752, %v618
  %v754 = vadd.f32 %v753, %v623
  %v755 = vadd.f32 %v754, %v626
  %v756 = vrot.slane %v755, 4
  %v757 = vadd.f32 %v755, %v756
  %v758 = vrot.slane %v757, 2
  %v759 = vadd.f32 %v757, %v758
  %v760 = vrot.slane %v759, 1
  %v761 = vadd.f32 %v759, %v760
  %762 = vst [vmem:[%s5] sm:$0x1] %v761
  %v763 = vmul.f32 %v375, %v375
  %v764 = vmul.f32 %v378, %v378
  %v765 = vmul.f32 %v383, %v383
  %v766 = vmul.f32 %v386, %v386
  %v767 = vmul.f32 %v391, %v391
  %v768 = vmul.f32 %v394, %v394
  %v769 = vmul.f32 %v399, %v399
  %v770 = vmul.f32 %v402, %v402
  %v771 = vmul.f32 %v407, %v407
  %v772 = vmul.f32 %v410, %v410
  %v773 = vmul.f32 %v415, %v415
  %v774 = vmul.f32 %v418, %v418
  %v775 = vmul.f32 %v423, %v423
  %v776 = vmul.f32 %v426, %v426
  %v777 = vmul.f32 %v431, %v431
  %v778 = vmul.f32 %v434, %v434
  %v779 = vmul.f32 %v439, %v439
  %v780 = vmul.f32 %v442, %v442
  %v781 = vmul.f32 %v447, %v447
  %v782 = vmul.f32 %v450, %v450
  %v783 = vmul.f32 %v455, %v455
  %v784 = vmul.f32 %v458, %v458
  %v785 = vmul.f32 %v463, %v463
  %v786 = vmul.f32 %v466, %v466
  %v787 = vmul.f32 %v471, %v471
  %v788 = vmul.f32 %v474, %v474
  %v789 = vmul.f32 %v479, %v479
  %v790 = vmul.f32 %v482, %v482
  %v791 = vmul.f32 %v487, %v487
  %v792 = vmul.f32 %v490, %v490
  %v793 = vmul.f32 %v495, %v495
  %v794 = vmul.f32 %v498, %v498
  %v795 = vmul.f32 %v503, %v503
  %v796 = vmul.f32 %v506, %v506
  %v797 = vmul.f32 %v511, %v511
  %v798 = vmul.f32 %v514, %v514
  %v799 = vmul.f32 %v519, %v519
  %v800 = vmul.f32 %v522, %v522
  %v801 = vmul.f32 %v527, %v527
  %v802 = vmul.f32 %v530, %v530
  %v803 = vmul.f32 %v535, %v535
  %v804 = vmul.f32 %v538, %v538
  %v805 = vmul.f32 %v543, %v543
  %v806 = vmul.f32 %v546, %v546
  %v807 = vmul.f32 %v551, %v551
  %v808 = vmul.f32 %v554, %v554
  %v809 = vmul.f32 %v559, %v559
  %v810 = vmul.f32 %v562, %v562
  %v811 = vmul.f32 %v567, %v567
  %v812 = vmul.f32 %v570, %v570
  %v813 = vmul.f32 %v575, %v575
  %v814 = vmul.f32 %v578, %v578
  %v815 = vmul.f32 %v583, %v583
  %v816 = vmul.f32 %v586, %v586
  %v817 = vmul.f32 %v591, %v591
  %v818 = vmul.f32 %v594, %v594
  %v819 = vmul.f32 %v599, %v599
  %v820 = vmul.f32 %v602, %v602
  %v821 = vmul.f32 %v607, %v607
  %v822 = vmul.f32 %v610, %v610
  %v823 = vmul.f32 %v615, %v615
  %v824 = vmul.f32 %v618, %v618
  %v825 = vmul.f32 %v623, %v623
  %v826 = vmul.f32 %v626, %v626
  %v827 = vadd.f32 %v763, %v764
  %v828 = vadd.f32 %v827, %v765
  %v829 = vadd.f32 %v828, %v766
  %v830 = vadd.f32 %v829, %v767
  %v831 = vadd.f32 %v830, %v768
  %v832 = vadd.f32 %v831, %v769
  %v833 = vadd.f32 %v832, %v770
  %v834 = vadd.f32 %v833, %v771
  %v835 = vadd.f32 %v834, %v772
  %v836 = vadd.f32 %v835, %v773
  %v837 = vadd.f32 %v836, %v774
  %v838 = vadd.f32 %v837, %v775
  %v839 = vadd.f32 %v838, %v776
  %v840 = vadd.f32 %v839, %v777
  %v841 = vadd.f32 %v840, %v778
  %v842 = vadd.f32 %v841, %v779
  %v843 = vadd.f32 %v842, %v780
  %v844 = vadd.f32 %v843, %v781
  %v845 = vadd.f32 %v844, %v782
  %v846 = vadd.f32 %v845, %v783
  %v847 = vadd.f32 %v846, %v784
  %v848 = vadd.f32 %v847, %v785
  %v849 = vadd.f32 %v848, %v786
  %v850 = vadd.f32 %v849, %v787
  %v851 = vadd.f32 %v850, %v788
  %v852 = vadd.f32 %v851, %v789
  %v853 = vadd.f32 %v852, %v790
  %v854 = vadd.f32 %v853, %v791
  %v855 = vadd.f32 %v854, %v792
  %v856 = vadd.f32 %v855, %v793
  %v857 = vadd.f32 %v856, %v794
  %v858 = vadd.f32 %v857, %v795
  %v859 = vadd.f32 %v858, %v796
  %v860 = vadd.f32 %v859, %v797
  %v861 = vadd.f32 %v860, %v798
  %v862 = vadd.f32 %v861, %v799
  %v863 = vadd.f32 %v862, %v800
  %v864 = vadd.f32 %v863, %v801
  %v865 = vadd.f32 %v864, %v802
  %v866 = vadd.f32 %v865, %v803
  %v867 = vadd.f32 %v866, %v804
  %v868 = vadd.f32 %v867, %v805
  %v869 = vadd.f32 %v868, %v806
  %v870 = vadd.f32 %v869, %v807
  %v871 = vadd.f32 %v870, %v808
  %v872 = vadd.f32 %v871, %v809
  %v873 = vadd.f32 %v872, %v810
  %v874 = vadd.f32 %v873, %v811
  %v875 = vadd.f32 %v874, %v812
  %v876 = vadd.f32 %v875, %v813
  %v877 = vadd.f32 %v876, %v814
  %v878 = vadd.f32 %v877, %v815
  %v879 = vadd.f32 %v878, %v816
  %v880 = vadd.f32 %v879, %v817
  %v881 = vadd.f32 %v880, %v818
  %v882 = vadd.f32 %v881, %v819
  %v883 = vadd.f32 %v882, %v820
  %v884 = vadd.f32 %v883, %v821
  %v885 = vadd.f32 %v884, %v822
  %v886 = vadd.f32 %v885, %v823
  %v887 = vadd.f32 %v886, %v824
  %v888 = vadd.f32 %v887, %v825
  %v889 = vadd.f32 %v888, %v826
  %v890 = vrot.slane %v889, 4
  %v891 = vadd.f32 %v889, %v890
  %v892 = vrot.slane %v891, 2
  %v893 = vadd.f32 %v891, %v892
  %v894 = vrot.slane %v893, 1
  %v895 = vadd.f32 %v893, %v894
  %896 = vst [vmem:[%s5 + $0x1] sm:$0x1] %v895
  // Predicated region
  $region18: #{resnet_unit_forward.6} parent=0 // pred_check
    _
  $region19: #{resnet_unit_forward.6} parent=0 // pred_check_branch
    %898 = sbr.rel (0) target = $region21
  $region20: #{resnet_unit_forward.6} parent=0 // pred_region
    _
  $region21: #{resnet_unit_forward.6} parent=0 // pred_fallthru
    _
  // Predicated region
  $region22: #{resnet_unit_forward.6} parent=0 // pred_check
    _
  $region23: #{resnet_unit_forward.6} parent=0 // pred_check_branch
    %900 = sbr.rel (0) target = $region25
  $region24: #{resnet_unit_forward.6} parent=0 // pred_region
    _
  $region25: #{resnet_unit_forward.6} parent=0 // pred_fallthru
    _
  // Predicated region
  $region26: #{resnet_unit_forward.6} parent=0 // pred_check
    _
  $region27: #{resnet_unit_forward.6} parent=0 // pred_check_branch
    %902 = sbr.rel (0) target = $region29
  $region28: #{resnet_unit_forward.6} parent=0 // pred_region
    _
  $region29: #{resnet_unit_forward.6} parent=0 // pred_fallthru
    _
  // Predicated region
  $region30: #{resnet_unit_forward.6} parent=0 // pred_check
    _
  $region31: #{resnet_unit_forward.6} parent=0 // pred_check_branch
    %904 = sbr.rel (0) target = $region33
  $region32: #{resnet_unit_forward.6} parent=0 // pred_region
    _
  $region33: #{resnet_unit_forward.6} parent=0 // pred_fallthru
    _

// kernel: resnet_unit_forward.9
$region0: #{resnet_unit_forward.9}
  #allocation0 [shape = 'u32[]', space=smem, size = 0x4, offset = 0x4, fixed_abs, tag = 'smem constant byte address 0x4 - core index']
  #allocation1 [shape = 'u32[144,128]{1,0:T(1,128)}', space=vmem, size = 0x12000, scoped, tag = 'internal scratch']
  %s0 = inlined_call_operand.vmem [shape: f32[128,128], index: 0, kind: input, shape index: {}]
  %s1 = inlined_call_operand.vmem [shape: f32[1,128], index: 1, kind: input, shape index: {}]
  %s2 = inlined_call_operand.vmem [shape: f32[1,128], index: 2, kind: input, shape index: {}]
  %s3 = inlined_call_operand.vmem [shape: bf16[128,128], index: 3, kind: input, shape index: {}]
  %s4 = inlined_call_operand.vmem [shape: f32[128,128], index: 4, kind: output, shape index: {0}]
  %s5 = inlined_call_operand.vmem [shape: f32[1,2,128], index: 5, kind: output, shape index: {1}]
  %6 = xla_tuple %s4, %s5
  %s7 = sld [smem:[#allocation0]]
  $region34: #{resnet_unit_forward.9} parent=0
    _
  %s9 = ssub.s32 1, %s7
  %s10 = scalar_select 0, %s9, %s7
  // Predicated region
  $region2: #{resnet_unit_forward.9} parent=0 // pred_check
    _
  $region3: #{resnet_unit_forward.9} parent=0 // pred_check_branch
    %12 = sbr.rel (0) target = $region5
  $region4: #{resnet_unit_forward.9} parent=0 // pred_region
    _
  $region5: #{resnet_unit_forward.9} parent=0 // pred_fallthru
    _
  // Predicated region
  $region6: #{resnet_unit_forward.9} parent=0 // pred_check
    _
  $region7: #{resnet_unit_forward.9} parent=0 // pred_check_branch
    %14 = sbr.rel (0) target = $region9
  $region8: #{resnet_unit_forward.9} parent=0 // pred_region
    _
  $region9: #{resnet_unit_forward.9} parent=0 // pred_fallthru
    _
  // Predicated region
  $region10: #{resnet_unit_forward.9} parent=0 // pred_check
    _
  $region11: #{resnet_unit_forward.9} parent=0 // pred_check_branch
    %16 = sbr.rel (0) target = $region13
  $region12: #{resnet_unit_forward.9} parent=0 // pred_region
    _
  $region13: #{resnet_unit_forward.9} parent=0 // pred_fallthru
    _
  // Predicated region
  $region14: #{resnet_unit_forward.9} parent=0 // pred_check
    _
  $region15: #{resnet_unit_forward.9} parent=0 // pred_check_branch
    %18 = sbr.rel (0) target = $region17
  $region16: #{resnet_unit_forward.9} parent=0 // pred_region
    _
  $region17: #{resnet_unit_forward.9} parent=0 // pred_fallthru
    _
  %v20 = vld [vmem:[%s0] sm:$0xff]
  %v21 = vld [vmem:[%s0 + $0x8] sm:$0xff]
  %v22 = vld [vmem:[%s0 + $0x10] sm:$0xff]
  %v23 = vld [vmem:[%s0 + $0x18] sm:$0xff]
  %v24 = vld [vmem:[%s0 + $0x20] sm:$0xff]
  %v25 = vld [vmem:[%s0 + $0x28] sm:$0xff]
  %v26 = vld [vmem:[%s0 + $0x30] sm:$0xff]
  %v27 = vld [vmem:[%s0 + $0x38] sm:$0xff]
  %v28 = vld [vmem:[%s0 + $0x40] sm:$0xff]
  %v29 = vld [vmem:[%s0 + $0x48] sm:$0xff]
  %v30 = vld [vmem:[%s0 + $0x50] sm:$0xff]
  %v31 = vld [vmem:[%s0 + $0x58] sm:$0xff]
  %v32 = vld [vmem:[%s0 + $0x60] sm:$0xff]
  %v33 = vld [vmem:[%s0 + $0x68] sm:$0xff]
  %v34 = vld [vmem:[%s0 + $0x70] sm:$0xff]
  %v35 = vld [vmem:[%s0 + $0x78] sm:$0xff]
  %v36 = vld [vmem:[%s1] sm:$0x1]
  %v38 = vlaneseq
  %v39 = vshrl.u32 %v38, 7
  %v40 = vsub.s32 0, %v39
  %v41 = vrot.slane %v36, %v40
  %v43 = vmul.f32 %v20, %v41
  %v44 = vmul.f32 %v21, %v41
  %v45 = vmul.f32 %v22, %v41
  %v46 = vmul.f32 %v23, %v41
  %v47 = vmul.f32 %v24, %v41
  %v48 = vmul.f32 %v25, %v41
  %v49 = vmul.f32 %v26, %v41
  %v50 = vmul.f32 %v27, %v41
  %v51 = vmul.f32 %v28, %v41
  %v52 = vmul.f32 %v29, %v41
  %v53 = vmul.f32 %v30, %v41
  %v54 = vmul.f32 %v31, %v41
  %v55 = vmul.f32 %v32, %v41
  %v56 = vmul.f32 %v33, %v41
  %v57 = vmul.f32 %v34, %v41
  %v58 = vmul.f32 %v35, %v41
  %v59 = vld [vmem:[%s2] sm:$0x1]
  %v61 = vlaneseq
  %v62 = vshrl.u32 %v61, 7
  %v63 = vsub.s32 0, %v62
  %v64 = vrot.slane %v59, %v63
  %v66 = vadd.f32 %v43, %v64
  %v67 = vadd.f32 %v44, %v64
  %v68 = vadd.f32 %v45, %v64
  %v69 = vadd.f32 %v46, %v64
  %v70 = vadd.f32 %v47, %v64
  %v71 = vadd.f32 %v48, %v64
  %v72 = vadd.f32 %v49, %v64
  %v73 = vadd.f32 %v50, %v64
  %v74 = vadd.f32 %v51, %v64
  %v75 = vadd.f32 %v52, %v64
  %v76 = vadd.f32 %v53, %v64
  %v77 = vadd.f32 %v54, %v64
  %v78 = vadd.f32 %v55, %v64
  %v79 = vadd.f32 %v56, %v64
  %v80 = vadd.f32 %v57, %v64
  %v81 = vadd.f32 %v58, %v64
  %v82 = vmax.f32 %v66, 0.0
  %v83 = vmax.f32 %v67, 0.0
  %v84 = vmax.f32 %v68, 0.0
  %v85 = vmax.f32 %v69, 0.0
  %v86 = vmax.f32 %v70, 0.0
  %v87 = vmax.f32 %v71, 0.0
  %v88 = vmax.f32 %v72, 0.0
  %v89 = vmax.f32 %v73, 0.0
  %v90 = vmax.f32 %v74, 0.0
  %v91 = vmax.f32 %v75, 0.0
  %v92 = vmax.f32 %v76, 0.0
  %v93 = vmax.f32 %v77, 0.0
  %v94 = vmax.f32 %v78, 0.0
  %v95 = vmax.f32 %v79, 0.0
  %v96 = vmax.f32 %v80, 0.0
  %v97 = vmax.f32 %v81, 0.0
  %v98 = vpack.c.bf16 %v83, %v82
  %v99 = vpack.c.bf16 %v85, %v84
  %v100 = vpack.c.bf16 %v87, %v86
  %v101 = vpack.c.bf16 %v89, %v88
  %v102 = vpack.c.bf16 %v91, %v90
  %v103 = vpack.c.bf16 %v93, %v92
  %v104 = vpack.c.bf16 %v95, %v94
  %v105 = vpack.c.bf16 %v97, %v96
  %v106 = vld [vmem:[%s3] sm:$0xf]
  %v107 = vld [vmem:[%s3 + $0x4] sm:$0xf]
  %v108 = vld [vmem:[%s3 + $0x8] sm:$0xf]
  %v109 = vld [vmem:[%s3 + $0xc] sm:$0xf]
  %v110 = vld [vmem:[%s3 + $0x10] sm:$0xf]
  %v111 = vld [vmem:[%s3 + $0x14] sm:$0xf]
  %v112 = vld [vmem:[%s3 + $0x18] sm:$0xf]
  %v113 = vld [vmem:[%s3 + $0x1c] sm:$0xf]
  %v114 = vld [vmem:[%s3 + $0x20] sm:$0xf]
  %v115 = vld [vmem:[%s3 + $0x24] sm:$0xf]
  %v116 = vld [vmem:[%s3 + $0x28] sm:$0xf]
  %v117 = vld [vmem:[%s3 + $0x2c] sm:$0xf]
  %v118 = vld [vmem:[%s3 + $0x30] sm:$0xf]
  %v119 = vld [vmem:[%s3 + $0x34] sm:$0xf]
  %v120 = vld [vmem:[%s3 + $0x38] sm:$0xf]
  %v121 = vld [vmem:[%s3 + $0x3c] sm:$0xf]
  %v138 = vunpack.c.l.b16 %v106
  %v139 = vunpack.c.l.b16 %v107
  %v140 = vunpack.c.l.b16 %v108
  %v141 = vunpack.c.l.b16 %v109
  %v142 = vunpack.c.l.b16 %v110
  %v143 = vunpack.c.l.b16 %v111
  %v144 = vunpack.c.l.b16 %v112
  %v145 = vunpack.c.l.b16 %v113
  %v146 = vunpack.c.l.b16 %v114
  %v147 = vunpack.c.l.b16 %v115
  %v148 = vunpack.c.l.b16 %v116
  %v149 = vunpack.c.l.b16 %v117
  %v150 = vunpack.c.l.b16 %v118
  %v151 = vunpack.c.l.b16 %v119
  %v152 = vunpack.c.l.b16 %v120
  %v153 = vunpack.c.l.b16 %v121
  %v154 = vpack.c.b16 %v139, %v138
  %v155 = vpack.c.b16 %v141, %v140
  %v156 = vpack.c.b16 %v143, %v142
  %v157 = vpack.c.b16 %v145, %v144
  %v158 = vpack.c.b16 %v147, %v146
  %v159 = vpack.c.b16 %v149, %v148
  %v160 = vpack.c.b16 %v151, %v150
  %v161 = vpack.c.b16 %v153, %v152
  %170 = vmatprep.subr.bf16.mxu0 0
  %171 = vmatpush1.bf16.msra.mxu0 %v154
  %172 = vmatprep.subr.bf16.mxu0 0
  %173 = vmatpush1.bf16.msra.mxu0 %v155
  %174 = vmatprep.subr.bf16.mxu0 0
  %175 = vmatpush1.bf16.msra.mxu0 %v156
  %176 = vmatprep.subr.bf16.mxu0 0
  %177 = vmatpush1.bf16.msra.mxu0 %v157
  %178 = vmatprep.subr.bf16.mxu0 0
  %179 = vmatpush1.bf16.msra.mxu0 %v158
  %180 = vmatprep.subr.bf16.mxu0 0
  %181 = vmatpush1.bf16.msra.mxu0 %v159
  %182 = vmatprep.subr.bf16.mxu0 0
  %183 = vmatpush1.bf16.msra.mxu0 %v160
  %184 = vmatprep.subr.bf16.mxu0 0
  %185 = vmatpush1.bf16.msra.mxu0 %v161
  %186 = vmatprep.subr.bf16.mxu0 0
  %187 = vmatpush1.bf16.msra.mxu0 0
  %188 = vmatprep.subr.bf16.mxu0 0
  %189 = vmatpush1.bf16.msra.mxu0 0
  %190 = vmatprep.subr.bf16.mxu0 0
  %191 = vmatpush1.bf16.msra.mxu0 0
  %192 = vmatprep.subr.bf16.mxu0 0
  %193 = vmatpush1.bf16.msra.mxu0 0
  %194 = vmatprep.subr.bf16.mxu0 0
  %195 = vmatpush1.bf16.msra.mxu0 0
  %196 = vmatprep.subr.bf16.mxu0 0
  %197 = vmatpush1.bf16.msra.mxu0 0
  %198 = vmatprep.subr.bf16.mxu0 0
  %199 = vmatpush1.bf16.msra.mxu0 0
  %200 = vmatprep.subr.bf16.mxu0 0
  %201 = vmatpush1.bf16.msra.mxu0 0
  %202 = vmatprep.mubr.bf16.mxu0 0
  %203 = vmatmul.mubr.bf16.gmra.mrb[0].mxu0 %v98
  %v204 = vpop.f32.mrb[0].mxu0
  %v205 = vadd.f32 0.0, %v204
  %v206 = vpop.f32.mrb[0].mxu0
  %v207 = vpop.f32.mrb[0].mxu0
  %v208 = vadd.f32 0.0, %v207
  %v209 = vpop.f32.mrb[0].mxu0
  %210 = vmatprep.mubr.bf16.mxu0 0
  %211 = vmatmul.mubr.bf16.gmra.mrb[0].mxu0 %v99
  %v212 = vpop.f32.mrb[0].mxu0
  %v213 = vadd.f32 0.0, %v212
  %v214 = vpop.f32.mrb[0].mxu0
  %v215 = vpop.f32.mrb[0].mxu0
  %v216 = vadd.f32 0.0, %v215
  %v217 = vpop.f32.mrb[0].mxu0
  %218 = vmatprep.mubr.bf16.mxu0 0
  %219 = vmatmul.mubr.bf16.gmra.mrb[0].mxu0 %v100
  %v220 = vpop.f32.mrb[0].mxu0
  %v221 = vadd.f32 0.0, %v220
  %v222 = vpop.f32.mrb[0].mxu0
  %v223 = vpop.f32.mrb[0].mxu0
  %v224 = vadd.f32 0.0, %v223
  %v225 = vpop.f32.mrb[0].mxu0
  %226 = vmatprep.mubr.bf16.mxu0 0
  %227 = vmatmul.mubr.bf16.gmra.mrb[0].mxu0 %v101
  %v228 = vpop.f32.mrb[0].mxu0
  %v229 = vadd.f32 0.0, %v228
  %v230 = vpop.f32.mrb[0].mxu0
  %v231 = vpop.f32.mrb[0].mxu0
  %v232 = vadd.f32 0.0, %v231
  %v233 = vpop.f32.mrb[0].mxu0
  %234 = vmatprep.mubr.bf16.mxu0 0
  %235 = vmatmul.mubr.bf16.gmra.mrb[0].mxu0 %v102
  %v236 = vpop.f32.mrb[0].mxu0
  %v237 = vadd.f32 0.0, %v236
  %v238 = vpop.f32.mrb[0].mxu0
  %v239 = vpop.f32.mrb[0].mxu0
  %v240 = vadd.f32 0.0, %v239
  %v241 = vpop.f32.mrb[0].mxu0
  %242 = vmatprep.mubr.bf16.mxu0 0
  %243 = vmatmul.mubr.bf16.gmra.mrb[0].mxu0 %v103
  %v244 = vpop.f32.mrb[0].mxu0
  %v245 = vadd.f32 0.0, %v244
  %v246 = vpop.f32.mrb[0].mxu0
  %v247 = vpop.f32.mrb[0].mxu0
  %v248 = vadd.f32 0.0, %v247
  %v249 = vpop.f32.mrb[0].mxu0
  %250 = vmatprep.mubr.bf16.mxu0 0
  %251 = vmatmul.mubr.bf16.gmra.mrb[0].mxu0 %v104
  %v252 = vpop.f32.mrb[0].mxu0
  %v253 = vadd.f32 0.0, %v252
  %v254 = vpop.f32.mrb[0].mxu0
  %v255 = vpop.f32.mrb[0].mxu0
  %v256 = vadd.f32 0.0, %v255
  %v257 = vpop.f32.mrb[0].mxu0
  %258 = vmatprep.mubr.bf16.mxu0 0
  %259 = vmatmul.mubr.bf16.gmra.mrb[0].mxu0 %v105
  %v260 = vpop.f32.mrb[0].mxu0
  %v261 = vadd.f32 0.0, %v260
  %v262 = vpop.f32.mrb[0].mxu0
  %v263 = vpop.f32.mrb[0].mxu0
  %v264 = vadd.f32 0.0, %v263
  %v265 = vpop.f32.mrb[0].mxu0
  %266 = vdwg.mxu0
  %267 = vst [vmem:[%s4] sm:$0xff] %v205
  %268 = vst [vmem:[%s4 + $0x8] sm:$0xff] %v208
  %269 = vst [vmem:[%s4 + $0x10] sm:$0xff] %v213
  %270 = vst [vmem:[%s4 + $0x18] sm:$0xff] %v216
  %271 = vst [vmem:[%s4 + $0x20] sm:$0xff] %v221
  %272 = vst [vmem:[%s4 + $0x28] sm:$0xff] %v224
  %273 = vst [vmem:[%s4 + $0x30] sm:$0xff] %v229
  %274 = vst [vmem:[%s4 + $0x38] sm:$0xff] %v232
  %275 = vst [vmem:[%s4 + $0x40] sm:$0xff] %v237
  %276 = vst [vmem:[%s4 + $0x48] sm:$0xff] %v240
  %277 = vst [vmem:[%s4 + $0x50] sm:$0xff] %v245
  %278 = vst [vmem:[%s4 + $0x58] sm:$0xff] %v248
  %279 = vst [vmem:[%s4 + $0x60] sm:$0xff] %v253
  %280 = vst [vmem:[%s4 + $0x68] sm:$0xff] %v256
  %281 = vst [vmem:[%s4 + $0x70] sm:$0xff] %v261
  %282 = vst [vmem:[%s4 + $0x78] sm:$0xff] %v264
  %v283 = vadd.f32 %v205, %v208
  %v284 = vadd.f32 %v283, %v213
  %v285 = vadd.f32 %v284, %v216
  %v286 = vadd.f32 %v285, %v221
  %v287 = vadd.f32 %v286, %v224
  %v288 = vadd.f32 %v287, %v229
  %v289 = vadd.f32 %v288, %v232
  %v290 = vadd.f32 %v289, %v237
  %v291 = vadd.f32 %v290, %v240
  %v292 = vadd.f32 %v291, %v245
  %v293 = vadd.f32 %v292, %v248
  %v294 = vadd.f32 %v293, %v253
  %v295 = vadd.f32 %v294, %v256
  %v296 = vadd.f32 %v295, %v261
  %v297 = vadd.f32 %v296, %v264
  %v298 = vrot.slane %v297, 4
  %v299 = vadd.f32 %v297, %v298
  %v300 = vrot.slane %v299, 2
  %v301 = vadd.f32 %v299, %v300
  %v302 = vrot.slane %v301, 1
  %v303 = vadd.f32 %v301, %v302
  %304 = vst [vmem:[%s5] sm:$0x1] %v303
  %v305 = vmul.f32 %v205, %v205
  %v306 = vmul.f32 %v208, %v208
  %v307 = vmul.f32 %v213, %v213
  %v308 = vmul.f32 %v216, %v216
  %v309 = vmul.f32 %v221, %v221
  %v310 = vmul.f32 %v224, %v224
  %v311 = vmul.f32 %v229, %v229
  %v312 = vmul.f32 %v232, %v232
  %v313 = vmul.f32 %v237, %v237
  %v314 = vmul.f32 %v240, %v240
  %v315 = vmul.f32 %v245, %v245
  %v316 = vmul.f32 %v248, %v248
  %v317 = vmul.f32 %v253, %v253
  %v318 = vmul.f32 %v256, %v256
  %v319 = vmul.f32 %v261, %v261
  %v320 = vmul.f32 %v264, %v264
  %v321 = vadd.f32 %v305, %v306
  %v322 = vadd.f32 %v321, %v307
  %v323 = vadd.f32 %v322, %v308
  %v324 = vadd.f32 %v323, %v309
  %v325 = vadd.f32 %v324, %v310
  %v326 = vadd.f32 %v325, %v311
  %v327 = vadd.f32 %v326, %v312
  %v328 = vadd.f32 %v327, %v313
  %v329 = vadd.f32 %v328, %v314
  %v330 = vadd.f32 %v329, %v315
  %v331 = vadd.f32 %v330, %v316
  %v332 = vadd.f32 %v331, %v317
  %v333 = vadd.f32 %v332, %v318
  %v334 = vadd.f32 %v333, %v319
  %v335 = vadd.f32 %v334, %v320
  %v336 = vrot.slane %v335, 4
  %v337 = vadd.f32 %v335, %v336
  %v338 = vrot.slane %v337, 2
  %v339 = vadd.f32 %v337, %v338
  %v340 = vrot.slane %v339, 1
  %v341 = vadd.f32 %v339, %v340
  %342 = vst [vmem:[%s5 + $0x1] sm:$0x1] %v341
  // Predicated region
  $region18: #{resnet_unit_forward.9} parent=0 // pred_check
    _
  $region19: #{resnet_unit_forward.9} parent=0 // pred_check_branch
    %344 = sbr.rel (0) target = $region21
  $region20: #{resnet_unit_forward.9} parent=0 // pred_region
    _
  $region21: #{resnet_unit_forward.9} parent=0 // pred_fallthru
    _
  // Predicated region
  $region22: #{resnet_unit_forward.9} parent=0 // pred_check
    _
  $region23: #{resnet_unit_forward.9} parent=0 // pred_check_branch
    %346 = sbr.rel (0) target = $region25
  $region24: #{resnet_unit_forward.9} parent=0 // pred_region
    _
  $region25: #{resnet_unit_forward.9} parent=0 // pred_fallthru
    _
  // Predicated region
  $region26: #{resnet_unit_forward.9} parent=0 // pred_check
    _
  $region27: #{resnet_unit_forward.9} parent=0 // pred_check_branch
    %348 = sbr.rel (0) target = $region29
  $region28: #{resnet_unit_forward.9} parent=0 // pred_region
    _
  $region29: #{resnet_unit_forward.9} parent=0 // pred_fallthru
    _
  // Predicated region
  $region30: #{resnet_unit_forward.9} parent=0 // pred_check
    _
  $region31: #{resnet_unit_forward.9} parent=0 // pred_check_branch
    %350 = sbr.rel (0) target = $region33
  $region32: #{resnet_unit_forward.9} parent=0 // pred_region
    _
  $region33: #{resnet_unit_forward.9} parent=0 // pred_fallthru
    _

// kernel: resnet_unit_forward.8
$region0: #{resnet_unit_forward.8}
  #allocation0 [shape = 'u32[]', space=smem, size = 0x4, offset = 0x4, fixed_abs, tag = 'smem constant byte address 0x4 - core index']
  #allocation1 [shape = 'u32[144,128]{1,0:T(1,128)}', space=vmem, size = 0x12000, scoped, tag = 'internal scratch']
  %s0 = inlined_call_operand.vmem [shape: bf16[9,128,128], index: 0, kind: input, shape index: {}]
  %s1 = inlined_call_operand.vmem [shape: bf16[9,128,128], index: 1, kind: input, shape index: {}]
  %s2 = inlined_call_operand.vmem [shape: f32[128,128], index: 2, kind: output, shape index: {0}]
  %s3 = inlined_call_operand.vmem [shape: f32[1,2,128], index: 3, kind: output, shape index: {1}]
  %4 = xla_tuple %s2, %s3
  %s5 = sld [smem:[#allocation0]]
  $region26: #{resnet_unit_forward.8} parent=0
    _
  %s7 = ssub.s32 1, %s5
  %s8 = scalar_select 0, %s7, %s5
  // Predicated region
  $region2: #{resnet_unit_forward.8} parent=0 // pred_check
    _
  $region3: #{resnet_unit_forward.8} parent=0 // pred_check_branch
    %10 = sbr.rel (0) target = $region5
  $region4: #{resnet_unit_forward.8} parent=0 // pred_region
    _
  $region5: #{resnet_unit_forward.8} parent=0 // pred_fallthru
    _
  // Predicated region
  $region6: #{resnet_unit_forward.8} parent=0 // pred_check
    _
  $region7: #{resnet_unit_forward.8} parent=0 // pred_check_branch
    %12 = sbr.rel (0) target = $region9
  $region8: #{resnet_unit_forward.8} parent=0 // pred_region
    _
  $region9: #{resnet_unit_forward.8} parent=0 // pred_fallthru
    _
  %v14 = vld [vmem:[%s0] sm:$0xf]
  %v15 = vld [vmem:[%s0 + $0x4] sm:$0xf]
  %v16 = vld [vmem:[%s0 + $0x8] sm:$0xf]
  %v17 = vld [vmem:[%s0 + $0xc] sm:$0xf]
  %v18 = vld [vmem:[%s0 + $0x10] sm:$0xf]
  %v19 = vld [vmem:[%s0 + $0x14] sm:$0xf]
  %v20 = vld [vmem:[%s0 + $0x18] sm:$0xf]
  %v21 = vld [vmem:[%s0 + $0x1c] sm:$0xf]
  %v22 = vld [vmem:[%s0 + $0x20] sm:$0xf]
  %v23 = vld [vmem:[%s0 + $0x24] sm:$0xf]
  %v24 = vld [vmem:[%s0 + $0x28] sm:$0xf]
  %v25 = vld [vmem:[%s0 + $0x2c] sm:$0xf]
  %v26 = vld [vmem:[%s0 + $0x30] sm:$0xf]
  %v27 = vld [vmem:[%s0 + $0x34] sm:$0xf]
  %v28 = vld [vmem:[%s0 + $0x38] sm:$0xf]
  %v29 = vld [vmem:[%s0 + $0x3c] sm:$0xf]
  %v30 = vld [vmem:[%s1] sm:$0xf]
  %v31 = vld [vmem:[%s1 + $0x4] sm:$0xf]
  %v32 = vld [vmem:[%s1 + $0x8] sm:$0xf]
  %v33 = vld [vmem:[%s1 + $0xc] sm:$0xf]
  %v34 = vld [vmem:[%s1 + $0x10] sm:$0xf]
  %v35 = vld [vmem:[%s1 + $0x14] sm:$0xf]
  %v36 = vld [vmem:[%s1 + $0x18] sm:$0xf]
  %v37 = vld [vmem:[%s1 + $0x1c] sm:$0xf]
  %v38 = vld [vmem:[%s1 + $0x20] sm:$0xf]
  %v39 = vld [vmem:[%s1 + $0x24] sm:$0xf]
  %v40 = vld [vmem:[%s1 + $0x28] sm:$0xf]
  %v41 = vld [vmem:[%s1 + $0x2c] sm:$0xf]
  %v42 = vld [vmem:[%s1 + $0x30] sm:$0xf]
  %v43 = vld [vmem:[%s1 + $0x34] sm:$0xf]
  %v44 = vld [vmem:[%s1 + $0x38] sm:$0xf]
  %v45 = vld [vmem:[%s1 + $0x3c] sm:$0xf]
  %s46 = scalar_lea.vmem %s0, 64
  %v47 = vld [vmem:[%s46] sm:$0xf]
  %v48 = vld [vmem:[%s46 + $0x4] sm:$0xf]
  %v49 = vld [vmem:[%s46 + $0x8] sm:$0xf]
  %v50 = vld [vmem:[%s46 + $0xc] sm:$0xf]
  %v51 = vld [vmem:[%s46 + $0x10] sm:$0xf]
  %v52 = vld [vmem:[%s46 + $0x14] sm:$0xf]
  %v53 = vld [vmem:[%s46 + $0x18] sm:$0xf]
  %v54 = vld [vmem:[%s46 + $0x1c] sm:$0xf]
  %v55 = vld [vmem:[%s46 + $0x20] sm:$0xf]
  %v56 = vld [vmem:[%s46 + $0x24] sm:$0xf]
  %v57 = vld [vmem:[%s46 + $0x28] sm:$0xf]
  %v58 = vld [vmem:[%s46 + $0x2c] sm:$0xf]
  %v59 = vld [vmem:[%s46 + $0x30] sm:$0xf]
  %v60 = vld [vmem:[%s46 + $0x34] sm:$0xf]
  %v61 = vld [vmem:[%s46 + $0x38] sm:$0xf]
  %v62 = vld [vmem:[%s46 + $0x3c] sm:$0xf]
  %s63 = scalar_lea.vmem %s1, 64
  %v64 = vld [vmem:[%s63] sm:$0xf]
  %v65 = vld [vmem:[%s63 + $0x4] sm:$0xf]
  %v66 = vld [vmem:[%s63 + $0x8] sm:$0xf]
  %v67 = vld [vmem:[%s63 + $0xc] sm:$0xf]
  %v68 = vld [vmem:[%s63 + $0x10] sm:$0xf]
  %v69 = vld [vmem:[%s63 + $0x14] sm:$0xf]
  %v70 = vld [vmem:[%s63 + $0x18] sm:$0xf]
  %v71 = vld [vmem:[%s63 + $0x1c] sm:$0xf]
  %v72 = vld [vmem:[%s63 + $0x20] sm:$0xf]
  %v73 = vld [vmem:[%s63 + $0x24] sm:$0xf]
  %v74 = vld [vmem:[%s63 + $0x28] sm:$0xf]
  %v75 = vld [vmem:[%s63 + $0x2c] sm:$0xf]
  %v76 = vld [vmem:[%s63 + $0x30] sm:$0xf]
  %v77 = vld [vmem:[%s63 + $0x34] sm:$0xf]
  %v78 = vld [vmem:[%s63 + $0x38] sm:$0xf]
  %v79 = vld [vmem:[%s63 + $0x3c] sm:$0xf]
  %v96 = vunpack.c.l.b16 %v47
  %v97 = vunpack.c.l.b16 %v48
  %v98 = vunpack.c.l.b16 %v49
  %v99 = vunpack.c.l.b16 %v50
  %v100 = vunpack.c.l.b16 %v51
  %v101 = vunpack.c.l.b16 %v52
  %v102 = vunpack.c.l.b16 %v53
  %v103 = vunpack.c.l.b16 %v54
  %v104 = vunpack.c.l.b16 %v55
  %v105 = vunpack.c.l.b16 %v56
  %v106 = vunpack.c.l.b16 %v57
  %v107 = vunpack.c.l.b16 %v58
  %v108 = vunpack.c.l.b16 %v59
  %v109 = vunpack.c.l.b16 %v60
  %v110 = vunpack.c.l.b16 %v61
  %v111 = vunpack.c.l.b16 %v62
  %v112 = vpack.c.b16 %v97, %v96
  %v113 = vpack.c.b16 %v99, %v98
  %v114 = vpack.c.b16 %v101, %v100
  %v115 = vpack.c.b16 %v103, %v102
  %v116 = vpack.c.b16 %v105, %v104
  %v117 = vpack.c.b16 %v107, %v106
  %v118 = vpack.c.b16 %v109, %v108
  %v119 = vpack.c.b16 %v111, %v110
  %v144 = vunpack.c.l.b16 %v64
  %v145 = vunpack.c.l.b16 %v65
  %v146 = vunpack.c.l.b16 %v66
  %v147 = vunpack.c.l.b16 %v67
  %v148 = vunpack.c.l.b16 %v68
  %v149 = vunpack.c.l.b16 %v69
  %v150 = vunpack.c.l.b16 %v70
  %v151 = vunpack.c.l.b16 %v71
  %v152 = vunpack.c.l.b16 %v72
  %v153 = vunpack.c.l.b16 %v73
  %v154 = vunpack.c.l.b16 %v74
  %v155 = vunpack.c.l.b16 %v75
  %v156 = vunpack.c.l.b16 %v76
  %v157 = vunpack.c.l.b16 %v77
  %v158 = vunpack.c.l.b16 %v78
  %v159 = vunpack.c.l.b16 %v79
  %v160 = vpack.c.b16 %v145, %v144
  %v161 = vpack.c.b16 %v147, %v146
  %v162 = vpack.c.b16 %v149, %v148
  %v163 = vpack.c.b16 %v151, %v150
  %v164 = vpack.c.b16 %v153, %v152
  %v165 = vpack.c.b16 %v155, %v154
  %v166 = vpack.c.b16 %v157, %v156
  %v167 = vpack.c.b16 %v159, %v158
  %176 = vmatprep.subr.bf16.mxu0 0
  %177 = vmatpush1.bf16.msra.mxu0 %v160
  %178 = vmatprep.subr.bf16.mxu0 0
  %179 = vmatpush1.bf16.msra.mxu0 %v161
  %180 = vmatprep.subr.bf16.mxu0 0
  %181 = vmatpush1.bf16.msra.mxu0 %v162
  %182 = vmatprep.subr.bf16.mxu0 0
  %183 = vmatpush1.bf16.msra.mxu0 %v163
  %184 = vmatprep.subr.bf16.mxu0 0
  %185 = vmatpush1.bf16.msra.mxu0 %v164
  %186 = vmatprep.subr.bf16.mxu0 0
  %187 = vmatpush1.bf16.msra.mxu0 %v165
  %188 = vmatprep.subr.bf16.mxu0 0
  %189 = vmatpush1.bf16.msra.mxu0 %v166
  %190 = vmatprep.subr.bf16.mxu0 0
  %191 = vmatpush1.bf16.msra.mxu0 %v167
  %192 = vmatprep.subr.bf16.mxu0 0
  %193 = vmatpush1.bf16.msra.mxu0 0
  %194 = vmatprep.subr.bf16.mxu0 0
  %195 = vmatpush1.bf16.msra.mxu0 0
  %196 = vmatprep.subr.bf16.mxu0 0
  %197 = vmatpush1.bf16.msra.mxu0 0
  %198 = vmatprep.subr.bf16.mxu0 0
  %199 = vmatpush1.bf16.msra.mxu0 0
  %200 = vmatprep.subr.bf16.mxu0 0
  %201 = vmatpush1.bf16.msra.mxu0 0
  %202 = vmatprep.subr.bf16.mxu0 0
  %203 = vmatpush1.bf16.msra.mxu0 0
  %204 = vmatprep.subr.bf16.mxu0 0
  %205 = vmatpush1.bf16.msra.mxu0 0
  %206 = vmatprep.subr.bf16.mxu0 0
  %207 = vmatpush1.bf16.msra.mxu0 0
  %208 = vmatprep.mubr.bf16.mxu0 0
  %209 = vmatmul.mubr.bf16.gmra.mrb[0].mxu0 %v112
  %v210 = vpop.f32.mrb[0].mxu0
  %v211 = vadd.f32 0.0, %v210
  %v212 = vpop.f32.mrb[0].mxu0
  %v213 = vpop.f32.mrb[0].mxu0
  %v214 = vadd.f32 0.0, %v213
  %v215 = vpop.f32.mrb[0].mxu0
  %216 = vmatprep.mubr.bf16.mxu0 0
  %217 = vmatmul.mubr.bf16.gmra.mrb[0].mxu0 %v113
  %v218 = vpop.f32.mrb[0].mxu0
  %v219 = vadd.f32 0.0, %v218
  %v220 = vpop.f32.mrb[0].mxu0
  %v221 = vpop.f32.mrb[0].mxu0
  %v222 = vadd.f32 0.0, %v221
  %v223 = vpop.f32.mrb[0].mxu0
  %224 = vmatprep.mubr.bf16.mxu0 0
  %225 = vmatmul.mubr.bf16.gmra.mrb[0].mxu0 %v114
  %v226 = vpop.f32.mrb[0].mxu0
  %v227 = vadd.f32 0.0, %v226
  %v228 = vpop.f32.mrb[0].mxu0
  %v229 = vpop.f32.mrb[0].mxu0
  %v230 = vadd.f32 0.0, %v229
  %v231 = vpop.f32.mrb[0].mxu0
  %232 = vmatprep.mubr.bf16.mxu0 0
  %233 = vmatmul.mubr.bf16.gmra.mrb[0].mxu0 %v115
  %v234 = vpop.f32.mrb[0].mxu0
  %v235 = vadd.f32 0.0, %v234
  %v236 = vpop.f32.mrb[0].mxu0
  %v237 = vpop.f32.mrb[0].mxu0
  %v238 = vadd.f32 0.0, %v237
  %v239 = vpop.f32.mrb[0].mxu0
  %240 = vmatprep.mubr.bf16.mxu0 0
  %241 = vmatmul.mubr.bf16.gmra.mrb[0].mxu0 %v116
  %v242 = vpop.f32.mrb[0].mxu0
  %v243 = vadd.f32 0.0, %v242
  %v244 = vpop.f32.mrb[0].mxu0
  %v245 = vpop.f32.mrb[0].mxu0
  %v246 = vadd.f32 0.0, %v245
  %v247 = vpop.f32.mrb[0].mxu0
  %248 = vmatprep.mubr.bf16.mxu0 0
  %249 = vmatmul.mubr.bf16.gmra.mrb[0].mxu0 %v117
  %v250 = vpop.f32.mrb[0].mxu0
  %v251 = vadd.f32 0.0, %v250
  %v252 = vpop.f32.mrb[0].mxu0
  %v253 = vpop.f32.mrb[0].mxu0
  %v254 = vadd.f32 0.0, %v253
  %v255 = vpop.f32.mrb[0].mxu0
  %256 = vmatprep.mubr.bf16.mxu0 0
  %257 = vmatmul.mubr.bf16.gmra.mrb[0].mxu0 %v118
  %v258 = vpop.f32.mrb[0].mxu0
  %v259 = vadd.f32 0.0, %v258
  %v260 = vpop.f32.mrb[0].mxu0
  %v261 = vpop.f32.mrb[0].mxu0
  %v262 = vadd.f32 0.0, %v261
  %v263 = vpop.f32.mrb[0].mxu0
  %264 = vmatprep.mubr.bf16.mxu0 0
  %265 = vmatmul.mubr.bf16.gmra.mrb[0].mxu0 %v119
  %v266 = vpop.f32.mrb[0].mxu0
  %v267 = vadd.f32 0.0, %v266
  %v268 = vpop.f32.mrb[0].mxu0
  %v269 = vpop.f32.mrb[0].mxu0
  %v270 = vadd.f32 0.0, %v269
  %v271 = vpop.f32.mrb[0].mxu0
  %272 = vdwg.mxu0
  %v289 = vunpack.c.l.b16 %v14
  %v290 = vunpack.c.l.b16 %v15
  %v291 = vunpack.c.l.b16 %v16
  %v292 = vunpack.c.l.b16 %v17
  %v293 = vunpack.c.l.b16 %v18
  %v294 = vunpack.c.l.b16 %v19
  %v295 = vunpack.c.l.b16 %v20
  %v296 = vunpack.c.l.b16 %v21
  %v297 = vunpack.c.l.b16 %v22
  %v298 = vunpack.c.l.b16 %v23
  %v299 = vunpack.c.l.b16 %v24
  %v300 = vunpack.c.l.b16 %v25
  %v301 = vunpack.c.l.b16 %v26
  %v302 = vunpack.c.l.b16 %v27
  %v303 = vunpack.c.l.b16 %v28
  %v304 = vunpack.c.l.b16 %v29
  %v305 = vpack.c.b16 %v290, %v289
  %v306 = vpack.c.b16 %v292, %v291
  %v307 = vpack.c.b16 %v294, %v293
  %v308 = vpack.c.b16 %v296, %v295
  %v309 = vpack.c.b16 %v298, %v297
  %v310 = vpack.c.b16 %v300, %v299
  %v311 = vpack.c.b16 %v302, %v301
  %v312 = vpack.c.b16 %v304, %v303
  %v337 = vunpack.c.l.b16 %v30
  %v338 = vunpack.c.l.b16 %v31
  %v339 = vunpack.c.l.b16 %v32
  %v340 = vunpack.c.l.b16 %v33
  %v341 = vunpack.c.l.b16 %v34
  %v342 = vunpack.c.l.b16 %v35
  %v343 = vunpack.c.l.b16 %v36
  %v344 = vunpack.c.l.b16 %v37
  %v345 = vunpack.c.l.b16 %v38
  %v346 = vunpack.c.l.b16 %v39
  %v347 = vunpack.c.l.b16 %v40
  %v348 = vunpack.c.l.b16 %v41
  %v349 = vunpack.c.l.b16 %v42
  %v350 = vunpack.c.l.b16 %v43
  %v351 = vunpack.c.l.b16 %v44
  %v352 = vunpack.c.l.b16 %v45
  %v353 = vpack.c.b16 %v338, %v337
  %v354 = vpack.c.b16 %v340, %v339
  %v355 = vpack.c.b16 %v342, %v341
  %v356 = vpack.c.b16 %v344, %v343
  %v357 = vpack.c.b16 %v346, %v345
  %v358 = vpack.c.b16 %v348, %v347
  %v359 = vpack.c.b16 %v350, %v349
  %v360 = vpack.c.b16 %v352, %v351
  %369 = vmatprep.subr.bf16.mxu0 0
  %370 = vmatpush1.bf16.msra.mxu0 %v353
  %371 = vmatprep.subr.bf16.mxu0 0
  %372 = vmatpush1.bf16.msra.mxu0 %v354
  %373 = vmatprep.subr.bf16.mxu0 0
  %374 = vmatpush1.bf16.msra.mxu0 %v355
  %375 = vmatprep.subr.bf16.mxu0 0
  %376 = vmatpush1.bf16.msra.mxu0 %v356
  %377 = vmatprep.subr.bf16.mxu0 0
  %378 = vmatpush1.bf16.msra.mxu0 %v357
  %379 = vmatprep.subr.bf16.mxu0 0
  %380 = vmatpush1.bf16.msra.mxu0 %v358
  %381 = vmatprep.subr.bf16.mxu0 0
  %382 = vmatpush1.bf16.msra.mxu0 %v359
  %383 = vmatprep.subr.bf16.mxu0 0
  %384 = vmatpush1.bf16.msra.mxu0 %v360
  %385 = vmatprep.subr.bf16.mxu0 0
  %386 = vmatpush1.bf16.msra.mxu0 0
  %387 = vmatprep.subr.bf16.mxu0 0
  %388 = vmatpush1.bf16.msra.mxu0 0
  %389 = vmatprep.subr.bf16.mxu0 0
  %390 = vmatpush1.bf16.msra.mxu0 0
  %391 = vmatprep.subr.bf16.mxu0 0
  %392 = vmatpush1.bf16.msra.mxu0 0
  %393 = vmatprep.subr.bf16.mxu0 0
  %394 = vmatpush1.bf16.msra.mxu0 0
  %395 = vmatprep.subr.bf16.mxu0 0
  %396 = vmatpush1.bf16.msra.mxu0 0
  %397 = vmatprep.subr.bf16.mxu0 0
  %398 = vmatpush1.bf16.msra.mxu0 0
  %399 = vmatprep.subr.bf16.mxu0 0
  %400 = vmatpush1.bf16.msra.mxu0 0
  %401 = vmatprep.mubr.bf16.mxu0 0
  %402 = vmatmul.mubr.bf16.gmra.mrb[0].mxu0 %v305
  %v403 = vpop.f32.mrb[0].mxu0
  %v404 = vadd.f32 %v211, %v403
  %v405 = vpop.f32.mrb[0].mxu0
  %v406 = vpop.f32.mrb[0].mxu0
  %v407 = vadd.f32 %v214, %v406
  %v408 = vpop.f32.mrb[0].mxu0
  %409 = vmatprep.mubr.bf16.mxu0 0
  %410 = vmatmul.mubr.bf16.gmra.mrb[0].mxu0 %v306
  %v411 = vpop.f32.mrb[0].mxu0
  %v412 = vadd.f32 %v219, %v411
  %v413 = vpop.f32.mrb[0].mxu0
  %v414 = vpop.f32.mrb[0].mxu0
  %v415 = vadd.f32 %v222, %v414
  %v416 = vpop.f32.mrb[0].mxu0
  %417 = vmatprep.mubr.bf16.mxu0 0
  %418 = vmatmul.mubr.bf16.gmra.mrb[0].mxu0 %v307
  %v419 = vpop.f32.mrb[0].mxu0
  %v420 = vadd.f32 %v227, %v419
  %v421 = vpop.f32.mrb[0].mxu0
  %v422 = vpop.f32.mrb[0].mxu0
  %v423 = vadd.f32 %v230, %v422
  %v424 = vpop.f32.mrb[0].mxu0
  %425 = vmatprep.mubr.bf16.mxu0 0
  %426 = vmatmul.mubr.bf16.gmra.mrb[0].mxu0 %v308
  %v427 = vpop.f32.mrb[0].mxu0
  %v428 = vadd.f32 %v235, %v427
  %v429 = vpop.f32.mrb[0].mxu0
  %v430 = vpop.f32.mrb[0].mxu0
  %v431 = vadd.f32 %v238, %v430
  %v432 = vpop.f32.mrb[0].mxu0
  %433 = vmatprep.mubr.bf16.mxu0 0
  %434 = vmatmul.mubr.bf16.gmra.mrb[0].mxu0 %v309
  %v435 = vpop.f32.mrb[0].mxu0
  %v436 = vadd.f32 %v243, %v435
  %v437 = vpop.f32.mrb[0].mxu0
  %v438 = vpop.f32.mrb[0].mxu0
  %v439 = vadd.f32 %v246, %v438
  %v440 = vpop.f32.mrb[0].mxu0
  %441 = vmatprep.mubr.bf16.mxu0 0
  %442 = vmatmul.mubr.bf16.gmra.mrb[0].mxu0 %v310
  %v443 = vpop.f32.mrb[0].mxu0
  %v444 = vadd.f32 %v251, %v443
  %v445 = vpop.f32.mrb[0].mxu0
  %v446 = vpop.f32.mrb[0].mxu0
  %v447 = vadd.f32 %v254, %v446
  %v448 = vpop.f32.mrb[0].mxu0
  %449 = vmatprep.mubr.bf16.mxu0 0
  %450 = vmatmul.mubr.bf16.gmra.mrb[0].mxu0 %v311
  %v451 = vpop.f32.mrb[0].mxu0
  %v452 = vadd.f32 %v259, %v451
  %v453 = vpop.f32.mrb[0].mxu0
  %v454 = vpop.f32.mrb[0].mxu0
  %v455 = vadd.f32 %v262, %v454
  %v456 = vpop.f32.mrb[0].mxu0
  %457 = vmatprep.mubr.bf16.mxu0 0
  %458 = vmatmul.mubr.bf16.gmra.mrb[0].mxu0 %v312
  %v459 = vpop.f32.mrb[0].mxu0
  %v460 = vadd.f32 %v267, %v459
  %v461 = vpop.f32.mrb[0].mxu0
  %v462 = vpop.f32.mrb[0].mxu0
  %v463 = vadd.f32 %v270, %v462
  %v464 = vpop.f32.mrb[0].mxu0
  %465 = vdwg.mxu0
  %s466 = scalar_lea.vmem %s0, 128
  %v467 = vld [vmem:[%s466] sm:$0xf]
  %v468 = vld [vmem:[%s466 + $0x4] sm:$0xf]
  %v469 = vld [vmem:[%s466 + $0x8] sm:$0xf]
  %v470 = vld [vmem:[%s466 + $0xc] sm:$0xf]
  %v471 = vld [vmem:[%s466 + $0x10] sm:$0xf]
  %v472 = vld [vmem:[%s466 + $0x14] sm:$0xf]
  %v473 = vld [vmem:[%s466 + $0x18] sm:$0xf]
  %v474 = vld [vmem:[%s466 + $0x1c] sm:$0xf]
  %v475 = vld [vmem:[%s466 + $0x20] sm:$0xf]
  %v476 = vld [vmem:[%s466 + $0x24] sm:$0xf]
  %v477 = vld [vmem:[%s466 + $0x28] sm:$0xf]
  %v478 = vld [vmem:[%s466 + $0x2c] sm:$0xf]
  %v479 = vld [vmem:[%s466 + $0x30] sm:$0xf]
  %v480 = vld [vmem:[%s466 + $0x34] sm:$0xf]
  %v481 = vld [vmem:[%s466 + $0x38] sm:$0xf]
  %v482 = vld [vmem:[%s466 + $0x3c] sm:$0xf]
  %s483 = scalar_lea.vmem %s1, 128
  %v484 = vld [vmem:[%s483] sm:$0xf]
  %v485 = vld [vmem:[%s483 + $0x4] sm:$0xf]
  %v486 = vld [vmem:[%s483 + $0x8] sm:$0xf]
  %v487 = vld [vmem:[%s483 + $0xc] sm:$0xf]
  %v488 = vld [vmem:[%s483 + $0x10] sm:$0xf]
  %v489 = vld [vmem:[%s483 + $0x14] sm:$0xf]
  %v490 = vld [vmem:[%s483 + $0x18] sm:$0xf]
  %v491 = vld [vmem:[%s483 + $0x1c] sm:$0xf]
  %v492 = vld [vmem:[%s483 + $0x20] sm:$0xf]
  %v493 = vld [vmem:[%s483 + $0x24] sm:$0xf]
  %v494 = vld [vmem:[%s483 + $0x28] sm:$0xf]
  %v495 = vld [vmem:[%s483 + $0x2c] sm:$0xf]
  %v496 = vld [vmem:[%s483 + $0x30] sm:$0xf]
  %v497 = vld [vmem:[%s483 + $0x34] sm:$0xf]
  %v498 = vld [vmem:[%s483 + $0x38] sm:$0xf]
  %v499 = vld [vmem:[%s483 + $0x3c] sm:$0xf]
  %v516 = vunpack.c.l.b16 %v467
  %v517 = vunpack.c.l.b16 %v468
  %v518 = vunpack.c.l.b16 %v469
  %v519 = vunpack.c.l.b16 %v470
  %v520 = vunpack.c.l.b16 %v471
  %v521 = vunpack.c.l.b16 %v472
  %v522 = vunpack.c.l.b16 %v473
  %v523 = vunpack.c.l.b16 %v474
  %v524 = vunpack.c.l.b16 %v475
  %v525 = vunpack.c.l.b16 %v476
  %v526 = vunpack.c.l.b16 %v477
  %v527 = vunpack.c.l.b16 %v478
  %v528 = vunpack.c.l.b16 %v479
  %v529 = vunpack.c.l.b16 %v480
  %v530 = vunpack.c.l.b16 %v481
  %v531 = vunpack.c.l.b16 %v482
  %v532 = vpack.c.b16 %v517, %v516
  %v533 = vpack.c.b16 %v519, %v518
  %v534 = vpack.c.b16 %v521, %v520
  %v535 = vpack.c.b16 %v523, %v522
  %v536 = vpack.c.b16 %v525, %v524
  %v537 = vpack.c.b16 %v527, %v526
  %v538 = vpack.c.b16 %v529, %v528
  %v539 = vpack.c.b16 %v531, %v530
  %v564 = vunpack.c.l.b16 %v484
  %v565 = vunpack.c.l.b16 %v485
  %v566 = vunpack.c.l.b16 %v486
  %v567 = vunpack.c.l.b16 %v487
  %v568 = vunpack.c.l.b16 %v488
  %v569 = vunpack.c.l.b16 %v489
  %v570 = vunpack.c.l.b16 %v490
  %v571 = vunpack.c.l.b16 %v491
  %v572 = vunpack.c.l.b16 %v492
  %v573 = vunpack.c.l.b16 %v493
  %v574 = vunpack.c.l.b16 %v494
  %v575 = vunpack.c.l.b16 %v495
  %v576 = vunpack.c.l.b16 %v496
  %v577 = vunpack.c.l.b16 %v497
  %v578 = vunpack.c.l.b16 %v498
  %v579 = vunpack.c.l.b16 %v499
  %v580 = vpack.c.b16 %v565, %v564
  %v581 = vpack.c.b16 %v567, %v566
  %v582 = vpack.c.b16 %v569, %v568
  %v583 = vpack.c.b16 %v571, %v570
  %v584 = vpack.c.b16 %v573, %v572
  %v585 = vpack.c.b16 %v575, %v574
  %v586 = vpack.c.b16 %v577, %v576
  %v587 = vpack.c.b16 %v579, %v578
  %596 = vmatprep.subr.bf16.mxu0 0
  %597 = vmatpush1.bf16.msra.mxu0 %v580
  %598 = vmatprep.subr.bf16.mxu0 0
  %599 = vmatpush1.bf16.msra.mxu0 %v581
  %600 = vmatprep.subr.bf16.mxu0 0
  %601 = vmatpush1.bf16.msra.mxu0 %v582
  %602 = vmatprep.subr.bf16.mxu0 0
  %603 = vmatpush1.bf16.msra.mxu0 %v583
  %604 = vmatprep.subr.bf16.mxu0 0
  %605 = vmatpush1.bf16.msra.mxu0 %v584
  %606 = vmatprep.subr.bf16.mxu0 0
  %607 = vmatpush1.bf16.msra.mxu0 %v585
  %608 = vmatprep.subr.bf16.mxu0 0
  %609 = vmatpush1.bf16.msra.mxu0 %v586
  %610 = vmatprep.subr.bf16.mxu0 0
  %611 = vmatpush1.bf16.msra.mxu0 %v587
  %612 = vmatprep.subr.bf16.mxu0 0
  %613 = vmatpush1.bf16.msra.mxu0 0
  %614 = vmatprep.subr.bf16.mxu0 0
  %615 = vmatpush1.bf16.msra.mxu0 0
  %616 = vmatprep.subr.bf16.mxu0 0
  %617 = vmatpush1.bf16.msra.mxu0 0
  %618 = vmatprep.subr.bf16.mxu0 0
  %619 = vmatpush1.bf16.msra.mxu0 0
  %620 = vmatprep.subr.bf16.mxu0 0
  %621 = vmatpush1.bf16.msra.mxu0 0
  %622 = vmatprep.subr.bf16.mxu0 0
  %623 = vmatpush1.bf16.msra.mxu0 0
  %624 = vmatprep.subr.bf16.mxu0 0
  %625 = vmatpush1.bf16.msra.mxu0 0
  %626 = vmatprep.subr.bf16.mxu0 0
  %627 = vmatpush1.bf16.msra.mxu0 0
  %628 = vmatprep.mubr.bf16.mxu0 0
  %629 = vmatmul.mubr.bf16.gmra.mrb[0].mxu0 %v532
  %v630 = vpop.f32.mrb[0].mxu0
  %v631 = vadd.f32 0.0, %v630
  %v632 = vpop.f32.mrb[0].mxu0
  %v633 = vpop.f32.mrb[0].mxu0
  %v634 = vadd.f32 0.0, %v633
  %v635 = vpop.f32.mrb[0].mxu0
  %636 = vmatprep.mubr.bf16.mxu0 0
  %637 = vmatmul.mubr.bf16.gmra.mrb[0].mxu0 %v533
  %v638 = vpop.f32.mrb[0].mxu0
  %v639 = vadd.f32 0.0, %v638
  %v640 = vpop.f32.mrb[0].mxu0
  %v641 = vpop.f32.mrb[0].mxu0
  %v642 = vadd.f32 0.0, %v641
  %v643 = vpop.f32.mrb[0].mxu0
  %644 = vmatprep.mubr.bf16.mxu0 0
  %645 = vmatmul.mubr.bf16.gmra.mrb[0].mxu0 %v534
  %v646 = vpop.f32.mrb[0].mxu0
  %v647 = vadd.f32 0.0, %v646
  %v648 = vpop.f32.mrb[0].mxu0
  %v649 = vpop.f32.mrb[0].mxu0
  %v650 = vadd.f32 0.0, %v649
  %v651 = vpop.f32.mrb[0].mxu0
  %652 = vmatprep.mubr.bf16.mxu0 0
  %653 = vmatmul.mubr.bf16.gmra.mrb[0].mxu0 %v535
  %v654 = vpop.f32.mrb[0].mxu0
  %v655 = vadd.f32 0.0, %v654
  %v656 = vpop.f32.mrb[0].mxu0
  %v657 = vpop.f32.mrb[0].mxu0
  %v658 = vadd.f32 0.0, %v657
  %v659 = vpop.f32.mrb[0].mxu0
  %660 = vmatprep.mubr.bf16.mxu0 0
  %661 = vmatmul.mubr.bf16.gmra.mrb[0].mxu0 %v536
  %v662 = vpop.f32.mrb[0].mxu0
  %v663 = vadd.f32 0.0, %v662
  %v664 = vpop.f32.mrb[0].mxu0
  %v665 = vpop.f32.mrb[0].mxu0
  %v666 = vadd.f32 0.0, %v665
  %v667 = vpop.f32.mrb[0].mxu0
  %668 = vmatprep.mubr.bf16.mxu0 0
  %669 = vmatmul.mubr.bf16.gmra.mrb[0].mxu0 %v537
  %v670 = vpop.f32.mrb[0].mxu0
  %v671 = vadd.f32 0.0, %v670
  %v672 = vpop.f32.mrb[0].mxu0
  %v673 = vpop.f32.mrb[0].mxu0
  %v674 = vadd.f32 0.0, %v673
  %v675 = vpop.f32.mrb[0].mxu0
  %676 = vmatprep.mubr.bf16.mxu0 0
  %677 = vmatmul.mubr.bf16.gmra.mrb[0].mxu0 %v538
  %v678 = vpop.f32.mrb[0].mxu0
  %v679 = vadd.f32 0.0, %v678
  %v680 = vpop.f32.mrb[0].mxu0
  %v681 = vpop.f32.mrb[0].mxu0
  %v682 = vadd.f32 0.0, %v681
  %v683 = vpop.f32.mrb[0].mxu0
  %684 = vmatprep.mubr.bf16.mxu0 0
  %685 = vmatmul.mubr.bf16.gmra.mrb[0].mxu0 %v539
  %v686 = vpop.f32.mrb[0].mxu0
  %v687 = vadd.f32 0.0, %v686
  %v688 = vpop.f32.mrb[0].mxu0
  %v689 = vpop.f32.mrb[0].mxu0
  %v690 = vadd.f32 0.0, %v689
  %v691 = vpop.f32.mrb[0].mxu0
  %692 = vdwg.mxu0
  %v693 = vadd.f32 %v404, %v631
  %v694 = vadd.f32 %v407, %v634
  %v695 = vadd.f32 %v412, %v639
  %v696 = vadd.f32 %v415, %v642
  %v697 = vadd.f32 %v420, %v647
  %v698 = vadd.f32 %v423, %v650
  %v699 = vadd.f32 %v428, %v655
  %v700 = vadd.f32 %v431, %v658
  %v701 = vadd.f32 %v436, %v663
  %v702 = vadd.f32 %v439, %v666
  %v703 = vadd.f32 %v444, %v671
  %v704 = vadd.f32 %v447, %v674
  %v705 = vadd.f32 %v452, %v679
  %v706 = vadd.f32 %v455, %v682
  %v707 = vadd.f32 %v460, %v687
  %v708 = vadd.f32 %v463, %v690
  %s709 = scalar_lea.vmem %s0, 192
  %v710 = vld [vmem:[%s709] sm:$0xf]
  %v711 = vld [vmem:[%s709 + $0x4] sm:$0xf]
  %v712 = vld [vmem:[%s709 + $0x8] sm:$0xf]
  %v713 = vld [vmem:[%s709 + $0xc] sm:$0xf]
  %v714 = vld [vmem:[%s709 + $0x10] sm:$0xf]
  %v715 = vld [vmem:[%s709 + $0x14] sm:$0xf]
  %v716 = vld [vmem:[%s709 + $0x18] sm:$0xf]
  %v717 = vld [vmem:[%s709 + $0x1c] sm:$0xf]
  %v718 = vld [vmem:[%s709 + $0x20] sm:$0xf]
  %v719 = vld [vmem:[%s709 + $0x24] sm:$0xf]
  %v720 = vld [vmem:[%s709 + $0x28] sm:$0xf]
  %v721 = vld [vmem:[%s709 + $0x2c] sm:$0xf]
  %v722 = vld [vmem:[%s709 + $0x30] sm:$0xf]
  %v723 = vld [vmem:[%s709 + $0x34] sm:$0xf]
  %v724 = vld [vmem:[%s709 + $0x38] sm:$0xf]
  %v725 = vld [vmem:[%s709 + $0x3c] sm:$0xf]
  %s726 = scalar_lea.vmem %s1, 192
  %v727 = vld [vmem:[%s726] sm:$0xf]
  %v728 = vld [vmem:[%s726 + $0x4] sm:$0xf]
  %v729 = vld [vmem:[%s726 + $0x8] sm:$0xf]
  %v730 = vld [vmem:[%s726 + $0xc] sm:$0xf]
  %v731 = vld [vmem:[%s726 + $0x10] sm:$0xf]
  %v732 = vld [vmem:[%s726 + $0x14] sm:$0xf]
  %v733 = vld [vmem:[%s726 + $0x18] sm:$0xf]
  %v734 = vld [vmem:[%s726 + $0x1c] sm:$0xf]
  %v735 = vld [vmem:[%s726 + $0x20] sm:$0xf]
  %v736 = vld [vmem:[%s726 + $0x24] sm:$0xf]
  %v737 = vld [vmem:[%s726 + $0x28] sm:$0xf]
  %v738 = vld [vmem:[%s726 + $0x2c] sm:$0xf]
  %v739 = vld [vmem:[%s726 + $0x30] sm:$0xf]
  %v740 = vld [vmem:[%s726 + $0x34] sm:$0xf]
  %v741 = vld [vmem:[%s726 + $0x38] sm:$0xf]
  %v742 = vld [vmem:[%s726 + $0x3c] sm:$0xf]
  %v759 = vunpack.c.l.b16 %v710
  %v760 = vunpack.c.l.b16 %v711
  %v761 = vunpack.c.l.b16 %v712
  %v762 = vunpack.c.l.b16 %v713
  %v763 = vunpack.c.l.b16 %v714
  %v764 = vunpack.c.l.b16 %v715
  %v765 = vunpack.c.l.b16 %v716
  %v766 = vunpack.c.l.b16 %v717
  %v767 = vunpack.c.l.b16 %v718
  %v768 = vunpack.c.l.b16 %v719
  %v769 = vunpack.c.l.b16 %v720
  %v770 = vunpack.c.l.b16 %v721
  %v771 = vunpack.c.l.b16 %v722
  %v772 = vunpack.c.l.b16 %v723
  %v773 = vunpack.c.l.b16 %v724
  %v774 = vunpack.c.l.b16 %v725
  %v775 = vpack.c.b16 %v760, %v759
  %v776 = vpack.c.b16 %v762, %v761
  %v777 = vpack.c.b16 %v764, %v763
  %v778 = vpack.c.b16 %v766, %v765
  %v779 = vpack.c.b16 %v768, %v767
  %v780 = vpack.c.b16 %v770, %v769
  %v781 = vpack.c.b16 %v772, %v771
  %v782 = vpack.c.b16 %v774, %v773
  %v807 = vunpack.c.l.b16 %v727
  %v808 = vunpack.c.l.b16 %v728
  %v809 = vunpack.c.l.b16 %v729
  %v810 = vunpack.c.l.b16 %v730
  %v811 = vunpack.c.l.b16 %v731
  %v812 = vunpack.c.l.b16 %v732
  %v813 = vunpack.c.l.b16 %v733
  %v814 = vunpack.c.l.b16 %v734
  %v815 = vunpack.c.l.b16 %v735
  %v816 = vunpack.c.l.b16 %v736
  %v817 = vunpack.c.l.b16 %v737
  %v818 = vunpack.c.l.b16 %v738
  %v819 = vunpack.c.l.b16 %v739
  %v820 = vunpack.c.l.b16 %v740
  %v821 = vunpack.c.l.b16 %v741
  %v822 = vunpack.c.l.b16 %v742
  %v823 = vpack.c.b16 %v808, %v807
  %v824 = vpack.c.b16 %v810, %v809
  %v825 = vpack.c.b16 %v812, %v811
  %v826 = vpack.c.b16 %v814, %v813
  %v827 = vpack.c.b16 %v816, %v815
  %v828 = vpack.c.b16 %v818, %v817
  %v829 = vpack.c.b16 %v820, %v819
  %v830 = vpack.c.b16 %v822, %v821
  %839 = vmatprep.subr.bf16.mxu0 0
  %840 = vmatpush1.bf16.msra.mxu0 %v823
  %841 = vmatprep.subr.bf16.mxu0 0
  %842 = vmatpush1.bf16.msra.mxu0 %v824
  %843 = vmatprep.subr.bf16.mxu0 0
  %844 = vmatpush1.bf16.msra.mxu0 %v825
  %845 = vmatprep.subr.bf16.mxu0 0
  %846 = vmatpush1.bf16.msra.mxu0 %v826
  %847 = vmatprep.subr.bf16.mxu0 0
  %848 = vmatpush1.bf16.msra.mxu0 %v827
  %849 = vmatprep.subr.bf16.mxu0 0
  %850 = vmatpush1.bf16.msra.mxu0 %v828
  %851 = vmatprep.subr.bf16.mxu0 0
  %852 = vmatpush1.bf16.msra.mxu0 %v829
  %853 = vmatprep.subr.bf16.mxu0 0
  %854 = vmatpush1.bf16.msra.mxu0 %v830
  %855 = vmatprep.subr.bf16.mxu0 0
  %856 = vmatpush1.bf16.msra.mxu0 0
  %857 = vmatprep.subr.bf16.mxu0 0
  %858 = vmatpush1.bf16.msra.mxu0 0
  %859 = vmatprep.subr.bf16.mxu0 0
  %860 = vmatpush1.bf16.msra.mxu0 0
  %861 = vmatprep.subr.bf16.mxu0 0
  %862 = vmatpush1.bf16.msra.mxu0 0
  %863 = vmatprep.subr.bf16.mxu0 0
  %864 = vmatpush1.bf16.msra.mxu0 0
  %865 = vmatprep.subr.bf16.mxu0 0
  %866 = vmatpush1.bf16.msra.mxu0 0
  %867 = vmatprep.subr.bf16.mxu0 0
  %868 = vmatpush1.bf16.msra.mxu0 0
  %869 = vmatprep.subr.bf16.mxu0 0
  %870 = vmatpush1.bf16.msra.mxu0 0
  %871 = vmatprep.mubr.bf16.mxu0 0
  %872 = vmatmul.mubr.bf16.gmra.mrb[0].mxu0 %v775
  %v873 = vpop.f32.mrb[0].mxu0
  %v874 = vadd.f32 0.0, %v873
  %v875 = vpop.f32.mrb[0].mxu0
  %v876 = vpop.f32.mrb[0].mxu0
  %v877 = vadd.f32 0.0, %v876
  %v878 = vpop.f32.mrb[0].mxu0
  %879 = vmatprep.mubr.bf16.mxu0 0
  %880 = vmatmul.mubr.bf16.gmra.mrb[0].mxu0 %v776
  %v881 = vpop.f32.mrb[0].mxu0
  %v882 = vadd.f32 0.0, %v881
  %v883 = vpop.f32.mrb[0].mxu0
  %v884 = vpop.f32.mrb[0].mxu0
  %v885 = vadd.f32 0.0, %v884
  %v886 = vpop.f32.mrb[0].mxu0
  %887 = vmatprep.mubr.bf16.mxu0 0
  %888 = vmatmul.mubr.bf16.gmra.mrb[0].mxu0 %v777
  %v889 = vpop.f32.mrb[0].mxu0
  %v890 = vadd.f32 0.0, %v889
  %v891 = vpop.f32.mrb[0].mxu0
  %v892 = vpop.f32.mrb[0].mxu0
  %v893 = vadd.f32 0.0, %v892
  %v894 = vpop.f32.mrb[0].mxu0
  %895 = vmatprep.mubr.bf16.mxu0 0
  %896 = vmatmul.mubr.bf16.gmra.mrb[0].mxu0 %v778
  %v897 = vpop.f32.mrb[0].mxu0
  %v898 = vadd.f32 0.0, %v897
  %v899 = vpop.f32.mrb[0].mxu0
  %v900 = vpop.f32.mrb[0].mxu0
  %v901 = vadd.f32 0.0, %v900
  %v902 = vpop.f32.mrb[0].mxu0
  %903 = vmatprep.mubr.bf16.mxu0 0
  %904 = vmatmul.mubr.bf16.gmra.mrb[0].mxu0 %v779
  %v905 = vpop.f32.mrb[0].mxu0
  %v906 = vadd.f32 0.0, %v905
  %v907 = vpop.f32.mrb[0].mxu0
  %v908 = vpop.f32.mrb[0].mxu0
  %v909 = vadd.f32 0.0, %v908
  %v910 = vpop.f32.mrb[0].mxu0
  %911 = vmatprep.mubr.bf16.mxu0 0
  %912 = vmatmul.mubr.bf16.gmra.mrb[0].mxu0 %v780
  %v913 = vpop.f32.mrb[0].mxu0
  %v914 = vadd.f32 0.0, %v913
  %v915 = vpop.f32.mrb[0].mxu0
  %v916 = vpop.f32.mrb[0].mxu0
  %v917 = vadd.f32 0.0, %v916
  %v918 = vpop.f32.mrb[0].mxu0
  %919 = vmatprep.mubr.bf16.mxu0 0
  %920 = vmatmul.mubr.bf16.gmra.mrb[0].mxu0 %v781
  %v921 = vpop.f32.mrb[0].mxu0
  %v922 = vadd.f32 0.0, %v921
  %v923 = vpop.f32.mrb[0].mxu0
  %v924 = vpop.f32.mrb[0].mxu0
  %v925 = vadd.f32 0.0, %v924
  %v926 = vpop.f32.mrb[0].mxu0
  %927 = vmatprep.mubr.bf16.mxu0 0
  %928 = vmatmul.mubr.bf16.gmra.mrb[0].mxu0 %v782
  %v929 = vpop.f32.mrb[0].mxu0
  %v930 = vadd.f32 0.0, %v929
  %v931 = vpop.f32.mrb[0].mxu0
  %v932 = vpop.f32.mrb[0].mxu0
  %v933 = vadd.f32 0.0, %v932
  %v934 = vpop.f32.mrb[0].mxu0
  %935 = vdwg.mxu0
  %v936 = vadd.f32 %v693, %v874
  %v937 = vadd.f32 %v694, %v877
  %v938 = vadd.f32 %v695, %v882
  %v939 = vadd.f32 %v696, %v885
  %v940 = vadd.f32 %v697, %v890
  %v941 = vadd.f32 %v698, %v893
  %v942 = vadd.f32 %v699, %v898
  %v943 = vadd.f32 %v700, %v901
  %v944 = vadd.f32 %v701, %v906
  %v945 = vadd.f32 %v702, %v909
  %v946 = vadd.f32 %v703, %v914
  %v947 = vadd.f32 %v704, %v917
  %v948 = vadd.f32 %v705, %v922
  %v949 = vadd.f32 %v706, %v925
  %v950 = vadd.f32 %v707, %v930
  %v951 = vadd.f32 %v708, %v933
  %s952 = scalar_lea.vmem %s0, 256
  %v953 = vld [vmem:[%s952] sm:$0xf]
  %v954 = vld [vmem:[%s952 + $0x4] sm:$0xf]
  %v955 = vld [vmem:[%s952 + $0x8] sm:$0xf]
  %v956 = vld [vmem:[%s952 + $0xc] sm:$0xf]
  %v957 = vld [vmem:[%s952 + $0x10] sm:$0xf]
  %v958 = vld [vmem:[%s952 + $0x14] sm:$0xf]
  %v959 = vld [vmem:[%s952 + $0x18] sm:$0xf]
  %v960 = vld [vmem:[%s952 + $0x1c] sm:$0xf]
  %v961 = vld [vmem:[%s952 + $0x20] sm:$0xf]
  %v962 = vld [vmem:[%s952 + $0x24] sm:$0xf]
  %v963 = vld [vmem:[%s952 + $0x28] sm:$0xf]
  %v964 = vld [vmem:[%s952 + $0x2c] sm:$0xf]
  %v965 = vld [vmem:[%s952 + $0x30] sm:$0xf]
  %v966 = vld [vmem:[%s952 + $0x34] sm:$0xf]
  %v967 = vld [vmem:[%s952 + $0x38] sm:$0xf]
  %v968 = vld [vmem:[%s952 + $0x3c] sm:$0xf]
  %s969 = scalar_lea.vmem %s1, 256
  %v970 = vld [vmem:[%s969] sm:$0xf]
  %v971 = vld [vmem:[%s969 + $0x4] sm:$0xf]
  %v972 = vld [vmem:[%s969 + $0x8] sm:$0xf]
  %v973 = vld [vmem:[%s969 + $0xc] sm:$0xf]
  %v974 = vld [vmem:[%s969 + $0x10] sm:$0xf]
  %v975 = vld [vmem:[%s969 + $0x14] sm:$0xf]
  %v976 = vld [vmem:[%s969 + $0x18] sm:$0xf]
  %v977 = vld [vmem:[%s969 + $0x1c] sm:$0xf]
  %v978 = vld [vmem:[%s969 + $0x20] sm:$0xf]
  %v979 = vld [vmem:[%s969 + $0x24] sm:$0xf]
  %v980 = vld [vmem:[%s969 + $0x28] sm:$0xf]
  %v981 = vld [vmem:[%s969 + $0x2c] sm:$0xf]
  %v982 = vld [vmem:[%s969 + $0x30] sm:$0xf]
  %v983 = vld [vmem:[%s969 + $0x34] sm:$0xf]
  %v984 = vld [vmem:[%s969 + $0x38] sm:$0xf]
  %v985 = vld [vmem:[%s969 + $0x3c] sm:$0xf]
  %v1002 = vunpack.c.l.b16 %v953
  %v1003 = vunpack.c.l.b16 %v954
  %v1004 = vunpack.c.l.b16 %v955
  %v1005 = vunpack.c.l.b16 %v956
  %v1006 = vunpack.c.l.b16 %v957
  %v1007 = vunpack.c.l.b16 %v958
  %v1008 = vunpack.c.l.b16 %v959
  %v1009 = vunpack.c.l.b16 %v960
  %v1010 = vunpack.c.l.b16 %v961
  %v1011 = vunpack.c.l.b16 %v962
  %v1012 = vunpack.c.l.b16 %v963
  %v1013 = vunpack.c.l.b16 %v964
  %v1014 = vunpack.c.l.b16 %v965
  %v1015 = vunpack.c.l.b16 %v966
  %v1016 = vunpack.c.l.b16 %v967
  %v1017 = vunpack.c.l.b16 %v968
  %v1018 = vpack.c.b16 %v1003, %v1002
  %v1019 = vpack.c.b16 %v1005, %v1004
  %v1020 = vpack.c.b16 %v1007, %v1006
  %v1021 = vpack.c.b16 %v1009, %v1008
  %v1022 = vpack.c.b16 %v1011, %v1010
  %v1023 = vpack.c.b16 %v1013, %v1012
  %v1024 = vpack.c.b16 %v1015, %v1014
  %v1025 = vpack.c.b16 %v1017, %v1016
  %v1050 = vunpack.c.l.b16 %v970
  %v1051 = vunpack.c.l.b16 %v971
  %v1052 = vunpack.c.l.b16 %v972
  %v1053 = vunpack.c.l.b16 %v973
  %v1054 = vunpack.c.l.b16 %v974
  %v1055 = vunpack.c.l.b16 %v975
  %v1056 = vunpack.c.l.b16 %v976
  %v1057 = vunpack.c.l.b16 %v977
  %v1058 = vunpack.c.l.b16 %v978
  %v1059 = vunpack.c.l.b16 %v979
  %v1060 = vunpack.c.l.b16 %v980
  %v1061 = vunpack.c.l.b16 %v981
  %v1062 = vunpack.c.l.b16 %v982
  %v1063 = vunpack.c.l.b16 %v983
  %v1064 = vunpack.c.l.b16 %v984
  %v1065 = vunpack.c.l.b16 %v985
  %v1066 = vpack.c.b16 %v1051, %v1050
  %v1067 = vpack.c.b16 %v1053, %v1052
  %v1068 = vpack.c.b16 %v1055, %v1054
  %v1069 = vpack.c.b16 %v1057, %v1056
  %v1070 = vpack.c.b16 %v1059, %v1058
  %v1071 = vpack.c.b16 %v1061, %v1060
  %v1072 = vpack.c.b16 %v1063, %v1062
  %v1073 = vpack.c.b16 %v1065, %v1064
  %1082 = vmatprep.subr.bf16.mxu0 0
  %1083 = vmatpush1.bf16.msra.mxu0 %v1066
  %1084 = vmatprep.subr.bf16.mxu0 0
  %1085 = vmatpush1.bf16.msra.mxu0 %v1067
  %1086 = vmatprep.subr.bf16.mxu0 0
  %1087 = vmatpush1.bf16.msra.mxu0 %v1068
  %1088 = vmatprep.subr.bf16.mxu0 0
  %1089 = vmatpush1.bf16.msra.mxu0 %v1069
  %1090 = vmatprep.subr.bf16.mxu0 0
  %1091 = vmatpush1.bf16.msra.mxu0 %v1070
  %1092 = vmatprep.subr.bf16.mxu0 0
  %1093 = vmatpush1.bf16.msra.mxu0 %v1071
  %1094 = vmatprep.subr.bf16.mxu0 0
  %1095 = vmatpush1.bf16.msra.mxu0 %v1072
  %1096 = vmatprep.subr.bf16.mxu0 0
  %1097 = vmatpush1.bf16.msra.mxu0 %v1073
  %1098 = vmatprep.subr.bf16.mxu0 0
  %1099 = vmatpush1.bf16.msra.mxu0 0
  %1100 = vmatprep.subr.bf16.mxu0 0
  %1101 = vmatpush1.bf16.msra.mxu0 0
  %1102 = vmatprep.subr.bf16.mxu0 0
  %1103 = vmatpush1.bf16.msra.mxu0 0
  %1104 = vmatprep.subr.bf16.mxu0 0
  %1105 = vmatpush1.bf16.msra.mxu0 0
  %1106 = vmatprep.subr.bf16.mxu0 0
  %1107 = vmatpush1.bf16.msra.mxu0 0
  %1108 = vmatprep.subr.bf16.mxu0 0
  %1109 = vmatpush1.bf16.msra.mxu0 0
  %1110 = vmatprep.subr.bf16.mxu0 0
  %1111 = vmatpush1.bf16.msra.mxu0 0
  %1112 = vmatprep.subr.bf16.mxu0 0
  %1113 = vmatpush1.bf16.msra.mxu0 0
  %1114 = vmatprep.mubr.bf16.mxu0 0
  %1115 = vmatmul.mubr.bf16.gmra.mrb[0].mxu0 %v1018
  %v1116 = vpop.f32.mrb[0].mxu0
  %v1117 = vadd.f32 0.0, %v1116
  %v1118 = vpop.f32.mrb[0].mxu0
  %v1119 = vpop.f32.mrb[0].mxu0
  %v1120 = vadd.f32 0.0, %v1119
  %v1121 = vpop.f32.mrb[0].mxu0
  %1122 = vmatprep.mubr.bf16.mxu0 0
  %1123 = vmatmul.mubr.bf16.gmra.mrb[0].mxu0 %v1019
  %v1124 = vpop.f32.mrb[0].mxu0
  %v1125 = vadd.f32 0.0, %v1124
  %v1126 = vpop.f32.mrb[0].mxu0
  %v1127 = vpop.f32.mrb[0].mxu0
  %v1128 = vadd.f32 0.0, %v1127
  %v1129 = vpop.f32.mrb[0].mxu0
  %1130 = vmatprep.mubr.bf16.mxu0 0
  %1131 = vmatmul.mubr.bf16.gmra.mrb[0].mxu0 %v1020
  %v1132 = vpop.f32.mrb[0].mxu0
  %v1133 = vadd.f32 0.0, %v1132
  %v1134 = vpop.f32.mrb[0].mxu0
  %v1135 = vpop.f32.mrb[0].mxu0
  %v1136 = vadd.f32 0.0, %v1135
  %v1137 = vpop.f32.mrb[0].mxu0
  %1138 = vmatprep.mubr.bf16.mxu0 0
  %1139 = vmatmul.mubr.bf16.gmra.mrb[0].mxu0 %v1021
  %v1140 = vpop.f32.mrb[0].mxu0
  %v1141 = vadd.f32 0.0, %v1140
  %v1142 = vpop.f32.mrb[0].mxu0
  %v1143 = vpop.f32.mrb[0].mxu0
  %v1144 = vadd.f32 0.0, %v1143
  %v1145 = vpop.f32.mrb[0].mxu0
  %1146 = vmatprep.mubr.bf16.mxu0 0
  %1147 = vmatmul.mubr.bf16.gmra.mrb[0].mxu0 %v1022
  %v1148 = vpop.f32.mrb[0].mxu0
  %v1149 = vadd.f32 0.0, %v1148
  %v1150 = vpop.f32.mrb[0].mxu0
  %v1151 = vpop.f32.mrb[0].mxu0
  %v1152 = vadd.f32 0.0, %v1151
  %v1153 = vpop.f32.mrb[0].mxu0
  %1154 = vmatprep.mubr.bf16.mxu0 0
  %1155 = vmatmul.mubr.bf16.gmra.mrb[0].mxu0 %v1023
  %v1156 = vpop.f32.mrb[0].mxu0
  %v1157 = vadd.f32 0.0, %v1156
  %v1158 = vpop.f32.mrb[0].mxu0
  %v1159 = vpop.f32.mrb[0].mxu0
  %v1160 = vadd.f32 0.0, %v1159
  %v1161 = vpop.f32.mrb[0].mxu0
  %1162 = vmatprep.mubr.bf16.mxu0 0
  %1163 = vmatmul.mubr.bf16.gmra.mrb[0].mxu0 %v1024
  %v1164 = vpop.f32.mrb[0].mxu0
  %v1165 = vadd.f32 0.0, %v1164
  %v1166 = vpop.f32.mrb[0].mxu0
  %v1167 = vpop.f32.mrb[0].mxu0
  %v1168 = vadd.f32 0.0, %v1167
  %v1169 = vpop.f32.mrb[0].mxu0
  %1170 = vmatprep.mubr.bf16.mxu0 0
  %1171 = vmatmul.mubr.bf16.gmra.mrb[0].mxu0 %v1025
  %v1172 = vpop.f32.mrb[0].mxu0
  %v1173 = vadd.f32 0.0, %v1172
  %v1174 = vpop.f32.mrb[0].mxu0
  %v1175 = vpop.f32.mrb[0].mxu0
  %v1176 = vadd.f32 0.0, %v1175
  %v1177 = vpop.f32.mrb[0].mxu0
  %1178 = vdwg.mxu0
  %v1179 = vadd.f32 %v936, %v1117
  %v1180 = vadd.f32 %v937, %v1120
  %v1181 = vadd.f32 %v938, %v1125
  %v1182 = vadd.f32 %v939, %v1128
  %v1183 = vadd.f32 %v940, %v1133
  %v1184 = vadd.f32 %v941, %v1136
  %v1185 = vadd.f32 %v942, %v1141
  %v1186 = vadd.f32 %v943, %v1144
  %v1187 = vadd.f32 %v944, %v1149
  %v1188 = vadd.f32 %v945, %v1152
  %v1189 = vadd.f32 %v946, %v1157
  %v1190 = vadd.f32 %v947, %v1160
  %v1191 = vadd.f32 %v948, %v1165
  %v1192 = vadd.f32 %v949, %v1168
  %v1193 = vadd.f32 %v950, %v1173
  %v1194 = vadd.f32 %v951, %v1176
  %s1195 = scalar_lea.vmem %s0, 320
  %v1196 = vld [vmem:[%s1195] sm:$0xf]
  %v1197 = vld [vmem:[%s1195 + $0x4] sm:$0xf]
  %v1198 = vld [vmem:[%s1195 + $0x8] sm:$0xf]
  %v1199 = vld [vmem:[%s1195 + $0xc] sm:$0xf]
  %v1200 = vld [vmem:[%s1195 + $0x10] sm:$0xf]
  %v1201 = vld [vmem:[%s1195 + $0x14] sm:$0xf]
  %v1202 = vld [vmem:[%s1195 + $0x18] sm:$0xf]
  %v1203 = vld [vmem:[%s1195 + $0x1c] sm:$0xf]
  %v1204 = vld [vmem:[%s1195 + $0x20] sm:$0xf]
  %v1205 = vld [vmem:[%s1195 + $0x24] sm:$0xf]
  %v1206 = vld [vmem:[%s1195 + $0x28] sm:$0xf]
  %v1207 = vld [vmem:[%s1195 + $0x2c] sm:$0xf]
  %v1208 = vld [vmem:[%s1195 + $0x30] sm:$0xf]
  %v1209 = vld [vmem:[%s1195 + $0x34] sm:$0xf]
  %v1210 = vld [vmem:[%s1195 + $0x38] sm:$0xf]
  %v1211 = vld [vmem:[%s1195 + $0x3c] sm:$0xf]
  %s1212 = scalar_lea.vmem %s1, 320
  %v1213 = vld [vmem:[%s1212] sm:$0xf]
  %v1214 = vld [vmem:[%s1212 + $0x4] sm:$0xf]
  %v1215 = vld [vmem:[%s1212 + $0x8] sm:$0xf]
  %v1216 = vld [vmem:[%s1212 + $0xc] sm:$0xf]
  %v1217 = vld [vmem:[%s1212 + $0x10] sm:$0xf]
  %v1218 = vld [vmem:[%s1212 + $0x14] sm:$0xf]
  %v1219 = vld [vmem:[%s1212 + $0x18] sm:$0xf]
  %v1220 = vld [vmem:[%s1212 + $0x1c] sm:$0xf]
  %v1221 = vld [vmem:[%s1212 + $0x20] sm:$0xf]
  %v1222 = vld [vmem:[%s1212 + $0x24] sm:$0xf]
  %v1223 = vld [vmem:[%s1212 + $0x28] sm:$0xf]
  %v1224 = vld [vmem:[%s1212 + $0x2c] sm:$0xf]
  %v1225 = vld [vmem:[%s1212 + $0x30] sm:$0xf]
  %v1226 = vld [vmem:[%s1212 + $0x34] sm:$0xf]
  %v1227 = vld [vmem:[%s1212 + $0x38] sm:$0xf]
  %v1228 = vld [vmem:[%s1212 + $0x3c] sm:$0xf]
  %v1245 = vunpack.c.l.b16 %v1196
  %v1246 = vunpack.c.l.b16 %v1197
  %v1247 = vunpack.c.l.b16 %v1198
  %v1248 = vunpack.c.l.b16 %v1199
  %v1249 = vunpack.c.l.b16 %v1200
  %v1250 = vunpack.c.l.b16 %v1201
  %v1251 = vunpack.c.l.b16 %v1202
  %v1252 = vunpack.c.l.b16 %v1203
  %v1253 = vunpack.c.l.b16 %v1204
  %v1254 = vunpack.c.l.b16 %v1205
  %v1255 = vunpack.c.l.b16 %v1206
  %v1256 = vunpack.c.l.b16 %v1207
  %v1257 = vunpack.c.l.b16 %v1208
  %v1258 = vunpack.c.l.b16 %v1209
  %v1259 = vunpack.c.l.b16 %v1210
  %v1260 = vunpack.c.l.b16 %v1211
  %v1261 = vpack.c.b16 %v1246, %v1245
  %v1262 = vpack.c.b16 %v1248, %v1247
  %v1263 = vpack.c.b16 %v1250, %v1249
  %v1264 = vpack.c.b16 %v1252, %v1251
  %v1265 = vpack.c.b16 %v1254, %v1253
  %v1266 = vpack.c.b16 %v1256, %v1255
  %v1267 = vpack.c.b16 %v1258, %v1257
  %v1268 = vpack.c.b16 %v1260, %v1259
  %v1293 = vunpack.c.l.b16 %v1213
  %v1294 = vunpack.c.l.b16 %v1214
  %v1295 = vunpack.c.l.b16 %v1215
  %v1296 = vunpack.c.l.b16 %v1216
  %v1297 = vunpack.c.l.b16 %v1217
  %v1298 = vunpack.c.l.b16 %v1218
  %v1299 = vunpack.c.l.b16 %v1219
  %v1300 = vunpack.c.l.b16 %v1220
  %v1301 = vunpack.c.l.b16 %v1221
  %v1302 = vunpack.c.l.b16 %v1222
  %v1303 = vunpack.c.l.b16 %v1223
  %v1304 = vunpack.c.l.b16 %v1224
  %v1305 = vunpack.c.l.b16 %v1225
  %v1306 = vunpack.c.l.b16 %v1226
  %v1307 = vunpack.c.l.b16 %v1227
  %v1308 = vunpack.c.l.b16 %v1228
  %v1309 = vpack.c.b16 %v1294, %v1293
  %v1310 = vpack.c.b16 %v1296, %v1295
  %v1311 = vpack.c.b16 %v1298, %v1297
  %v1312 = vpack.c.b16 %v1300, %v1299
  %v1313 = vpack.c.b16 %v1302, %v1301
  %v1314 = vpack.c.b16 %v1304, %v1303
  %v1315 = vpack.c.b16 %v1306, %v1305
  %v1316 = vpack.c.b16 %v1308, %v1307
  %1325 = vmatprep.subr.bf16.mxu0 0
  %1326 = vmatpush1.bf16.msra.mxu0 %v1309
  %1327 = vmatprep.subr.bf16.mxu0 0
  %1328 = vmatpush1.bf16.msra.mxu0 %v1310
  %1329 = vmatprep.subr.bf16.mxu0 0
  %1330 = vmatpush1.bf16.msra.mxu0 %v1311
  %1331 = vmatprep.subr.bf16.mxu0 0
  %1332 = vmatpush1.bf16.msra.mxu0 %v1312
  %1333 = vmatprep.subr.bf16.mxu0 0
  %1334 = vmatpush1.bf16.msra.mxu0 %v1313
  %1335 = vmatprep.subr.bf16.mxu0 0
  %1336 = vmatpush1.bf16.msra.mxu0 %v1314
  %1337 = vmatprep.subr.bf16.mxu0 0
  %1338 = vmatpush1.bf16.msra.mxu0 %v1315
  %1339 = vmatprep.subr.bf16.mxu0 0
  %1340 = vmatpush1.bf16.msra.mxu0 %v1316
  %1341 = vmatprep.subr.bf16.mxu0 0
  %1342 = vmatpush1.bf16.msra.mxu0 0
  %1343 = vmatprep.subr.bf16.mxu0 0
  %1344 = vmatpush1.bf16.msra.mxu0 0
  %1345 = vmatprep.subr.bf16.mxu0 0
  %1346 = vmatpush1.bf16.msra.mxu0 0
  %1347 = vmatprep.subr.bf16.mxu0 0
  %1348 = vmatpush1.bf16.msra.mxu0 0
  %1349 = vmatprep.subr.bf16.mxu0 0
  %1350 = vmatpush1.bf16.msra.mxu0 0
  %1351 = vmatprep.subr.bf16.mxu0 0
  %1352 = vmatpush1.bf16.msra.mxu0 0
  %1353 = vmatprep.subr.bf16.mxu0 0
  %1354 = vmatpush1.bf16.msra.mxu0 0
  %1355 = vmatprep.subr.bf16.mxu0 0
  %1356 = vmatpush1.bf16.msra.mxu0 0
  %1357 = vmatprep.mubr.bf16.mxu0 0
  %1358 = vmatmul.mubr.bf16.gmra.mrb[0].mxu0 %v1261
  %v1359 = vpop.f32.mrb[0].mxu0
  %v1360 = vadd.f32 0.0, %v1359
  %v1361 = vpop.f32.mrb[0].mxu0
  %v1362 = vpop.f32.mrb[0].mxu0
  %v1363 = vadd.f32 0.0, %v1362
  %v1364 = vpop.f32.mrb[0].mxu0
  %1365 = vmatprep.mubr.bf16.mxu0 0
  %1366 = vmatmul.mubr.bf16.gmra.mrb[0].mxu0 %v1262
  %v1367 = vpop.f32.mrb[0].mxu0
  %v1368 = vadd.f32 0.0, %v1367
  %v1369 = vpop.f32.mrb[0].mxu0
  %v1370 = vpop.f32.mrb[0].mxu0
  %v1371 = vadd.f32 0.0, %v1370
  %v1372 = vpop.f32.mrb[0].mxu0
  %1373 = vmatprep.mubr.bf16.mxu0 0
  %1374 = vmatmul.mubr.bf16.gmra.mrb[0].mxu0 %v1263
  %v1375 = vpop.f32.mrb[0].mxu0
  %v1376 = vadd.f32 0.0, %v1375
  %v1377 = vpop.f32.mrb[0].mxu0
  %v1378 = vpop.f32.mrb[0].mxu0
  %v1379 = vadd.f32 0.0, %v1378
  %v1380 = vpop.f32.mrb[0].mxu0
  %1381 = vmatprep.mubr.bf16.mxu0 0
  %1382 = vmatmul.mubr.bf16.gmra.mrb[0].mxu0 %v1264
  %v1383 = vpop.f32.mrb[0].mxu0
  %v1384 = vadd.f32 0.0, %v1383
  %v1385 = vpop.f32.mrb[0].mxu0
  %v1386 = vpop.f32.mrb[0].mxu0
  %v1387 = vadd.f32 0.0, %v1386
  %v1388 = vpop.f32.mrb[0].mxu0
  %1389 = vmatprep.mubr.bf16.mxu0 0
  %1390 = vmatmul.mubr.bf16.gmra.mrb[0].mxu0 %v1265
  %v1391 = vpop.f32.mrb[0].mxu0
  %v1392 = vadd.f32 0.0, %v1391
  %v1393 = vpop.f32.mrb[0].mxu0
  %v1394 = vpop.f32.mrb[0].mxu0
  %v1395 = vadd.f32 0.0, %v1394
  %v1396 = vpop.f32.mrb[0].mxu0
  %1397 = vmatprep.mubr.bf16.mxu0 0
  %1398 = vmatmul.mubr.bf16.gmra.mrb[0].mxu0 %v1266
  %v1399 = vpop.f32.mrb[0].mxu0
  %v1400 = vadd.f32 0.0, %v1399
  %v1401 = vpop.f32.mrb[0].mxu0
  %v1402 = vpop.f32.mrb[0].mxu0
  %v1403 = vadd.f32 0.0, %v1402
  %v1404 = vpop.f32.mrb[0].mxu0
  %1405 = vmatprep.mubr.bf16.mxu0 0
  %1406 = vmatmul.mubr.bf16.gmra.mrb[0].mxu0 %v1267
  %v1407 = vpop.f32.mrb[0].mxu0
  %v1408 = vadd.f32 0.0, %v1407
  %v1409 = vpop.f32.mrb[0].mxu0
  %v1410 = vpop.f32.mrb[0].mxu0
  %v1411 = vadd.f32 0.0, %v1410
  %v1412 = vpop.f32.mrb[0].mxu0
  %1413 = vmatprep.mubr.bf16.mxu0 0
  %1414 = vmatmul.mubr.bf16.gmra.mrb[0].mxu0 %v1268
  %v1415 = vpop.f32.mrb[0].mxu0
  %v1416 = vadd.f32 0.0, %v1415
  %v1417 = vpop.f32.mrb[0].mxu0
  %v1418 = vpop.f32.mrb[0].mxu0
  %v1419 = vadd.f32 0.0, %v1418
  %v1420 = vpop.f32.mrb[0].mxu0
  %1421 = vdwg.mxu0
  %v1422 = vadd.f32 %v1179, %v1360
  %v1423 = vadd.f32 %v1180, %v1363
  %v1424 = vadd.f32 %v1181, %v1368
  %v1425 = vadd.f32 %v1182, %v1371
  %v1426 = vadd.f32 %v1183, %v1376
  %v1427 = vadd.f32 %v1184, %v1379
  %v1428 = vadd.f32 %v1185, %v1384
  %v1429 = vadd.f32 %v1186, %v1387
  %v1430 = vadd.f32 %v1187, %v1392
  %v1431 = vadd.f32 %v1188, %v1395
  %v1432 = vadd.f32 %v1189, %v1400
  %v1433 = vadd.f32 %v1190, %v1403
  %v1434 = vadd.f32 %v1191, %v1408
  %v1435 = vadd.f32 %v1192, %v1411
  %v1436 = vadd.f32 %v1193, %v1416
  %v1437 = vadd.f32 %v1194, %v1419
  %s1438 = scalar_lea.vmem %s0, 384
  %v1439 = vld [vmem:[%s1438] sm:$0xf]
  %v1440 = vld [vmem:[%s1438 + $0x4] sm:$0xf]
  %v1441 = vld [vmem:[%s1438 + $0x8] sm:$0xf]
  %v1442 = vld [vmem:[%s1438 + $0xc] sm:$0xf]
  %v1443 = vld [vmem:[%s1438 + $0x10] sm:$0xf]
  %v1444 = vld [vmem:[%s1438 + $0x14] sm:$0xf]
  %v1445 = vld [vmem:[%s1438 + $0x18] sm:$0xf]
  %v1446 = vld [vmem:[%s1438 + $0x1c] sm:$0xf]
  %v1447 = vld [vmem:[%s1438 + $0x20] sm:$0xf]
  %v1448 = vld [vmem:[%s1438 + $0x24] sm:$0xf]
  %v1449 = vld [vmem:[%s1438 + $0x28] sm:$0xf]
  %v1450 = vld [vmem:[%s1438 + $0x2c] sm:$0xf]
  %v1451 = vld [vmem:[%s1438 + $0x30] sm:$0xf]
  %v1452 = vld [vmem:[%s1438 + $0x34] sm:$0xf]
  %v1453 = vld [vmem:[%s1438 + $0x38] sm:$0xf]
  %v1454 = vld [vmem:[%s1438 + $0x3c] sm:$0xf]
  %s1455 = scalar_lea.vmem %s1, 384
  %v1456 = vld [vmem:[%s1455] sm:$0xf]
  %v1457 = vld [vmem:[%s1455 + $0x4] sm:$0xf]
  %v1458 = vld [vmem:[%s1455 + $0x8] sm:$0xf]
  %v1459 = vld [vmem:[%s1455 + $0xc] sm:$0xf]
  %v1460 = vld [vmem:[%s1455 + $0x10] sm:$0xf]
  %v1461 = vld [vmem:[%s1455 + $0x14] sm:$0xf]
  %v1462 = vld [vmem:[%s1455 + $0x18] sm:$0xf]
  %v1463 = vld [vmem:[%s1455 + $0x1c] sm:$0xf]
  %v1464 = vld [vmem:[%s1455 + $0x20] sm:$0xf]
  %v1465 = vld [vmem:[%s1455 + $0x24] sm:$0xf]
  %v1466 = vld [vmem:[%s1455 + $0x28] sm:$0xf]
  %v1467 = vld [vmem:[%s1455 + $0x2c] sm:$0xf]
  %v1468 = vld [vmem:[%s1455 + $0x30] sm:$0xf]
  %v1469 = vld [vmem:[%s1455 + $0x34] sm:$0xf]
  %v1470 = vld [vmem:[%s1455 + $0x38] sm:$0xf]
  %v1471 = vld [vmem:[%s1455 + $0x3c] sm:$0xf]
  %v1488 = vunpack.c.l.b16 %v1439
  %v1489 = vunpack.c.l.b16 %v1440
  %v1490 = vunpack.c.l.b16 %v1441
  %v1491 = vunpack.c.l.b16 %v1442
  %v1492 = vunpack.c.l.b16 %v1443
  %v1493 = vunpack.c.l.b16 %v1444
  %v1494 = vunpack.c.l.b16 %v1445
  %v1495 = vunpack.c.l.b16 %v1446
  %v1496 = vunpack.c.l.b16 %v1447
  %v1497 = vunpack.c.l.b16 %v1448
  %v1498 = vunpack.c.l.b16 %v1449
  %v1499 = vunpack.c.l.b16 %v1450
  %v1500 = vunpack.c.l.b16 %v1451
  %v1501 = vunpack.c.l.b16 %v1452
  %v1502 = vunpack.c.l.b16 %v1453
  %v1503 = vunpack.c.l.b16 %v1454
  %v1504 = vpack.c.b16 %v1489, %v1488
  %v1505 = vpack.c.b16 %v1491, %v1490
  %v1506 = vpack.c.b16 %v1493, %v1492
  %v1507 = vpack.c.b16 %v1495, %v1494
  %v1508 = vpack.c.b16 %v1497, %v1496
  %v1509 = vpack.c.b16 %v1499, %v1498
  %v1510 = vpack.c.b16 %v1501, %v1500
  %v1511 = vpack.c.b16 %v1503, %v1502
  %v1536 = vunpack.c.l.b16 %v1456
  %v1537 = vunpack.c.l.b16 %v1457
  %v1538 = vunpack.c.l.b16 %v1458
  %v1539 = vunpack.c.l.b16 %v1459
  %v1540 = vunpack.c.l.b16 %v1460
  %v1541 = vunpack.c.l.b16 %v1461
  %v1542 = vunpack.c.l.b16 %v1462
  %v1543 = vunpack.c.l.b16 %v1463
  %v1544 = vunpack.c.l.b16 %v1464
  %v1545 = vunpack.c.l.b16 %v1465
  %v1546 = vunpack.c.l.b16 %v1466
  %v1547 = vunpack.c.l.b16 %v1467
  %v1548 = vunpack.c.l.b16 %v1468
  %v1549 = vunpack.c.l.b16 %v1469
  %v1550 = vunpack.c.l.b16 %v1470
  %v1551 = vunpack.c.l.b16 %v1471
  %v1552 = vpack.c.b16 %v1537, %v1536
  %v1553 = vpack.c.b16 %v1539, %v1538
  %v1554 = vpack.c.b16 %v1541, %v1540
  %v1555 = vpack.c.b16 %v1543, %v1542
  %v1556 = vpack.c.b16 %v1545, %v1544
  %v1557 = vpack.c.b16 %v1547, %v1546
  %v1558 = vpack.c.b16 %v1549, %v1548
  %v1559 = vpack.c.b16 %v1551, %v1550
  %1568 = vmatprep.subr.bf16.mxu0 0
  %1569 = vmatpush1.bf16.msra.mxu0 %v1552
  %1570 = vmatprep.subr.bf16.mxu0 0
  %1571 = vmatpush1.bf16.msra.mxu0 %v1553
  %1572 = vmatprep.subr.bf16.mxu0 0
  %1573 = vmatpush1.bf16.msra.mxu0 %v1554
  %1574 = vmatprep.subr.bf16.mxu0 0
  %1575 = vmatpush1.bf16.msra.mxu0 %v1555
  %1576 = vmatprep.subr.bf16.mxu0 0
  %1577 = vmatpush1.bf16.msra.mxu0 %v1556
  %1578 = vmatprep.subr.bf16.mxu0 0
  %1579 = vmatpush1.bf16.msra.mxu0 %v1557
  %1580 = vmatprep.subr.bf16.mxu0 0
  %1581 = vmatpush1.bf16.msra.mxu0 %v1558
  %1582 = vmatprep.subr.bf16.mxu0 0
  %1583 = vmatpush1.bf16.msra.mxu0 %v1559
  %1584 = vmatprep.subr.bf16.mxu0 0
  %1585 = vmatpush1.bf16.msra.mxu0 0
  %1586 = vmatprep.subr.bf16.mxu0 0
  %1587 = vmatpush1.bf16.msra.mxu0 0
  %1588 = vmatprep.subr.bf16.mxu0 0
  %1589 = vmatpush1.bf16.msra.mxu0 0
  %1590 = vmatprep.subr.bf16.mxu0 0
  %1591 = vmatpush1.bf16.msra.mxu0 0
  %1592 = vmatprep.subr.bf16.mxu0 0
  %1593 = vmatpush1.bf16.msra.mxu0 0
  %1594 = vmatprep.subr.bf16.mxu0 0
  %1595 = vmatpush1.bf16.msra.mxu0 0
  %1596 = vmatprep.subr.bf16.mxu0 0
  %1597 = vmatpush1.bf16.msra.mxu0 0
  %1598 = vmatprep.subr.bf16.mxu0 0
  %1599 = vmatpush1.bf16.msra.mxu0 0
  %1600 = vmatprep.mubr.bf16.mxu0 0
  %1601 = vmatmul.mubr.bf16.gmra.mrb[0].mxu0 %v1504
  %v1602 = vpop.f32.mrb[0].mxu0
  %v1603 = vadd.f32 0.0, %v1602
  %v1604 = vpop.f32.mrb[0].mxu0
  %v1605 = vpop.f32.mrb[0].mxu0
  %v1606 = vadd.f32 0.0, %v1605
  %v1607 = vpop.f32.mrb[0].mxu0
  %1608 = vmatprep.mubr.bf16.mxu0 0
  %1609 = vmatmul.mubr.bf16.gmra.mrb[0].mxu0 %v1505
  %v1610 = vpop.f32.mrb[0].mxu0
  %v1611 = vadd.f32 0.0, %v1610
  %v1612 = vpop.f32.mrb[0].mxu0
  %v1613 = vpop.f32.mrb[0].mxu0
  %v1614 = vadd.f32 0.0, %v1613
  %v1615 = vpop.f32.mrb[0].mxu0
  %1616 = vmatprep.mubr.bf16.mxu0 0
  %1617 = vmatmul.mubr.bf16.gmra.mrb[0].mxu0 %v1506
  %v1618 = vpop.f32.mrb[0].mxu0
  %v1619 = vadd.f32 0.0, %v1618
  %v1620 = vpop.f32.mrb[0].mxu0
  %v1621 = vpop.f32.mrb[0].mxu0
  %v1622 = vadd.f32 0.0, %v1621
  %v1623 = vpop.f32.mrb[0].mxu0
  %1624 = vmatprep.mubr.bf16.mxu0 0
  %1625 = vmatmul.mubr.bf16.gmra.mrb[0].mxu0 %v1507
  %v1626 = vpop.f32.mrb[0].mxu0
  %v1627 = vadd.f32 0.0, %v1626
  %v1628 = vpop.f32.mrb[0].mxu0
  %v1629 = vpop.f32.mrb[0].mxu0
  %v1630 = vadd.f32 0.0, %v1629
  %v1631 = vpop.f32.mrb[0].mxu0
  %1632 = vmatprep.mubr.bf16.mxu0 0
  %1633 = vmatmul.mubr.bf16.gmra.mrb[0].mxu0 %v1508
  %v1634 = vpop.f32.mrb[0].mxu0
  %v1635 = vadd.f32 0.0, %v1634
  %v1636 = vpop.f32.mrb[0].mxu0
  %v1637 = vpop.f32.mrb[0].mxu0
  %v1638 = vadd.f32 0.0, %v1637
  %v1639 = vpop.f32.mrb[0].mxu0
  %1640 = vmatprep.mubr.bf16.mxu0 0
  %1641 = vmatmul.mubr.bf16.gmra.mrb[0].mxu0 %v1509
  %v1642 = vpop.f32.mrb[0].mxu0
  %v1643 = vadd.f32 0.0, %v1642
  %v1644 = vpop.f32.mrb[0].mxu0
  %v1645 = vpop.f32.mrb[0].mxu0
  %v1646 = vadd.f32 0.0, %v1645
  %v1647 = vpop.f32.mrb[0].mxu0
  %1648 = vmatprep.mubr.bf16.mxu0 0
  %1649 = vmatmul.mubr.bf16.gmra.mrb[0].mxu0 %v1510
  %v1650 = vpop.f32.mrb[0].mxu0
  %v1651 = vadd.f32 0.0, %v1650
  %v1652 = vpop.f32.mrb[0].mxu0
  %v1653 = vpop.f32.mrb[0].mxu0
  %v1654 = vadd.f32 0.0, %v1653
  %v1655 = vpop.f32.mrb[0].mxu0
  %1656 = vmatprep.mubr.bf16.mxu0 0
  %1657 = vmatmul.mubr.bf16.gmra.mrb[0].mxu0 %v1511
  %v1658 = vpop.f32.mrb[0].mxu0
  %v1659 = vadd.f32 0.0, %v1658
  %v1660 = vpop.f32.mrb[0].mxu0
  %v1661 = vpop.f32.mrb[0].mxu0
  %v1662 = vadd.f32 0.0, %v1661
  %v1663 = vpop.f32.mrb[0].mxu0
  %1664 = vdwg.mxu0
  %v1665 = vadd.f32 %v1422, %v1603
  %v1666 = vadd.f32 %v1423, %v1606
  %v1667 = vadd.f32 %v1424, %v1611
  %v1668 = vadd.f32 %v1425, %v1614
  %v1669 = vadd.f32 %v1426, %v1619
  %v1670 = vadd.f32 %v1427, %v1622
  %v1671 = vadd.f32 %v1428, %v1627
  %v1672 = vadd.f32 %v1429, %v1630
  %v1673 = vadd.f32 %v1430, %v1635
  %v1674 = vadd.f32 %v1431, %v1638
  %v1675 = vadd.f32 %v1432, %v1643
  %v1676 = vadd.f32 %v1433, %v1646
  %v1677 = vadd.f32 %v1434, %v1651
  %v1678 = vadd.f32 %v1435, %v1654
  %v1679 = vadd.f32 %v1436, %v1659
  %v1680 = vadd.f32 %v1437, %v1662
  %s1681 = scalar_lea.vmem %s0, 448
  %v1682 = vld [vmem:[%s1681] sm:$0xf]
  %v1683 = vld [vmem:[%s1681 + $0x4] sm:$0xf]
  %v1684 = vld [vmem:[%s1681 + $0x8] sm:$0xf]
  %v1685 = vld [vmem:[%s1681 + $0xc] sm:$0xf]
  %v1686 = vld [vmem:[%s1681 + $0x10] sm:$0xf]
  %v1687 = vld [vmem:[%s1681 + $0x14] sm:$0xf]
  %v1688 = vld [vmem:[%s1681 + $0x18] sm:$0xf]
  %v1689 = vld [vmem:[%s1681 + $0x1c] sm:$0xf]
  %v1690 = vld [vmem:[%s1681 + $0x20] sm:$0xf]
  %v1691 = vld [vmem:[%s1681 + $0x24] sm:$0xf]
  %v1692 = vld [vmem:[%s1681 + $0x28] sm:$0xf]
  %v1693 = vld [vmem:[%s1681 + $0x2c] sm:$0xf]
  %v1694 = vld [vmem:[%s1681 + $0x30] sm:$0xf]
  %v1695 = vld [vmem:[%s1681 + $0x34] sm:$0xf]
  %v1696 = vld [vmem:[%s1681 + $0x38] sm:$0xf]
  %v1697 = vld [vmem:[%s1681 + $0x3c] sm:$0xf]
  %s1698 = scalar_lea.vmem %s1, 448
  %v1699 = vld [vmem:[%s1698] sm:$0xf]
  %v1700 = vld [vmem:[%s1698 + $0x4] sm:$0xf]
  %v1701 = vld [vmem:[%s1698 + $0x8] sm:$0xf]
  %v1702 = vld [vmem:[%s1698 + $0xc] sm:$0xf]
  %v1703 = vld [vmem:[%s1698 + $0x10] sm:$0xf]
  %v1704 = vld [vmem:[%s1698 + $0x14] sm:$0xf]
  %v1705 = vld [vmem:[%s1698 + $0x18] sm:$0xf]
  %v1706 = vld [vmem:[%s1698 + $0x1c] sm:$0xf]
  %v1707 = vld [vmem:[%s1698 + $0x20] sm:$0xf]
  %v1708 = vld [vmem:[%s1698 + $0x24] sm:$0xf]
  %v1709 = vld [vmem:[%s1698 + $0x28] sm:$0xf]
  %v1710 = vld [vmem:[%s1698 + $0x2c] sm:$0xf]
  %v1711 = vld [vmem:[%s1698 + $0x30] sm:$0xf]
  %v1712 = vld [vmem:[%s1698 + $0x34] sm:$0xf]
  %v1713 = vld [vmem:[%s1698 + $0x38] sm:$0xf]
  %v1714 = vld [vmem:[%s1698 + $0x3c] sm:$0xf]
  %v1731 = vunpack.c.l.b16 %v1682
  %v1732 = vunpack.c.l.b16 %v1683
  %v1733 = vunpack.c.l.b16 %v1684
  %v1734 = vunpack.c.l.b16 %v1685
  %v1735 = vunpack.c.l.b16 %v1686
  %v1736 = vunpack.c.l.b16 %v1687
  %v1737 = vunpack.c.l.b16 %v1688
  %v1738 = vunpack.c.l.b16 %v1689
  %v1739 = vunpack.c.l.b16 %v1690
  %v1740 = vunpack.c.l.b16 %v1691
  %v1741 = vunpack.c.l.b16 %v1692
  %v1742 = vunpack.c.l.b16 %v1693
  %v1743 = vunpack.c.l.b16 %v1694
  %v1744 = vunpack.c.l.b16 %v1695
  %v1745 = vunpack.c.l.b16 %v1696
  %v1746 = vunpack.c.l.b16 %v1697
  %v1747 = vpack.c.b16 %v1732, %v1731
  %v1748 = vpack.c.b16 %v1734, %v1733
  %v1749 = vpack.c.b16 %v1736, %v1735
  %v1750 = vpack.c.b16 %v1738, %v1737
  %v1751 = vpack.c.b16 %v1740, %v1739
  %v1752 = vpack.c.b16 %v1742, %v1741
  %v1753 = vpack.c.b16 %v1744, %v1743
  %v1754 = vpack.c.b16 %v1746, %v1745
  %v1779 = vunpack.c.l.b16 %v1699
  %v1780 = vunpack.c.l.b16 %v1700
  %v1781 = vunpack.c.l.b16 %v1701
  %v1782 = vunpack.c.l.b16 %v1702
  %v1783 = vunpack.c.l.b16 %v1703
  %v1784 = vunpack.c.l.b16 %v1704
  %v1785 = vunpack.c.l.b16 %v1705
  %v1786 = vunpack.c.l.b16 %v1706
  %v1787 = vunpack.c.l.b16 %v1707
  %v1788 = vunpack.c.l.b16 %v1708
  %v1789 = vunpack.c.l.b16 %v1709
  %v1790 = vunpack.c.l.b16 %v1710
  %v1791 = vunpack.c.l.b16 %v1711
  %v1792 = vunpack.c.l.b16 %v1712
  %v1793 = vunpack.c.l.b16 %v1713
  %v1794 = vunpack.c.l.b16 %v1714
  %v1795 = vpack.c.b16 %v1780, %v1779
  %v1796 = vpack.c.b16 %v1782, %v1781
  %v1797 = vpack.c.b16 %v1784, %v1783
  %v1798 = vpack.c.b16 %v1786, %v1785
  %v1799 = vpack.c.b16 %v1788, %v1787
  %v1800 = vpack.c.b16 %v1790, %v1789
  %v1801 = vpack.c.b16 %v1792, %v1791
  %v1802 = vpack.c.b16 %v1794, %v1793
  %1811 = vmatprep.subr.bf16.mxu0 0
  %1812 = vmatpush1.bf16.msra.mxu0 %v1795
  %1813 = vmatprep.subr.bf16.mxu0 0
  %1814 = vmatpush1.bf16.msra.mxu0 %v1796
  %1815 = vmatprep.subr.bf16.mxu0 0
  %1816 = vmatpush1.bf16.msra.mxu0 %v1797
  %1817 = vmatprep.subr.bf16.mxu0 0
  %1818 = vmatpush1.bf16.msra.mxu0 %v1798
  %1819 = vmatprep.subr.bf16.mxu0 0
  %1820 = vmatpush1.bf16.msra.mxu0 %v1799
  %1821 = vmatprep.subr.bf16.mxu0 0
  %1822 = vmatpush1.bf16.msra.mxu0 %v1800
  %1823 = vmatprep.subr.bf16.mxu0 0
  %1824 = vmatpush1.bf16.msra.mxu0 %v1801
  %1825 = vmatprep.subr.bf16.mxu0 0
  %1826 = vmatpush1.bf16.msra.mxu0 %v1802
  %1827 = vmatprep.subr.bf16.mxu0 0
  %1828 = vmatpush1.bf16.msra.mxu0 0
  %1829 = vmatprep.subr.bf16.mxu0 0
  %1830 = vmatpush1.bf16.msra.mxu0 0
  %1831 = vmatprep.subr.bf16.mxu0 0
  %1832 = vmatpush1.bf16.msra.mxu0 0
  %1833 = vmatprep.subr.bf16.mxu0 0
  %1834 = vmatpush1.bf16.msra.mxu0 0
  %1835 = vmatprep.subr.bf16.mxu0 0
  %1836 = vmatpush1.bf16.msra.mxu0 0
  %1837 = vmatprep.subr.bf16.mxu0 0
  %1838 = vmatpush1.bf16.msra.mxu0 0
  %1839 = vmatprep.subr.bf16.mxu0 0
  %1840 = vmatpush1.bf16.msra.mxu0 0
  %1841 = vmatprep.subr.bf16.mxu0 0
  %1842 = vmatpush1.bf16.msra.mxu0 0
  %1843 = vmatprep.mubr.bf16.mxu0 0
  %1844 = vmatmul.mubr.bf16.gmra.mrb[0].mxu0 %v1747
  %v1845 = vpop.f32.mrb[0].mxu0
  %v1846 = vadd.f32 0.0, %v1845
  %v1847 = vpop.f32.mrb[0].mxu0
  %v1848 = vpop.f32.mrb[0].mxu0
  %v1849 = vadd.f32 0.0, %v1848
  %v1850 = vpop.f32.mrb[0].mxu0
  %1851 = vmatprep.mubr.bf16.mxu0 0
  %1852 = vmatmul.mubr.bf16.gmra.mrb[0].mxu0 %v1748
  %v1853 = vpop.f32.mrb[0].mxu0
  %v1854 = vadd.f32 0.0, %v1853
  %v1855 = vpop.f32.mrb[0].mxu0
  %v1856 = vpop.f32.mrb[0].mxu0
  %v1857 = vadd.f32 0.0, %v1856
  %v1858 = vpop.f32.mrb[0].mxu0
  %1859 = vmatprep.mubr.bf16.mxu0 0
  %1860 = vmatmul.mubr.bf16.gmra.mrb[0].mxu0 %v1749
  %v1861 = vpop.f32.mrb[0].mxu0
  %v1862 = vadd.f32 0.0, %v1861
  %v1863 = vpop.f32.mrb[0].mxu0
  %v1864 = vpop.f32.mrb[0].mxu0
  %v1865 = vadd.f32 0.0, %v1864
  %v1866 = vpop.f32.mrb[0].mxu0
  %1867 = vmatprep.mubr.bf16.mxu0 0
  %1868 = vmatmul.mubr.bf16.gmra.mrb[0].mxu0 %v1750
  %v1869 = vpop.f32.mrb[0].mxu0
  %v1870 = vadd.f32 0.0, %v1869
  %v1871 = vpop.f32.mrb[0].mxu0
  %v1872 = vpop.f32.mrb[0].mxu0
  %v1873 = vadd.f32 0.0, %v1872
  %v1874 = vpop.f32.mrb[0].mxu0
  %1875 = vmatprep.mubr.bf16.mxu0 0
  %1876 = vmatmul.mubr.bf16.gmra.mrb[0].mxu0 %v1751
  %v1877 = vpop.f32.mrb[0].mxu0
  %v1878 = vadd.f32 0.0, %v1877
  %v1879 = vpop.f32.mrb[0].mxu0
  %v1880 = vpop.f32.mrb[0].mxu0
  %v1881 = vadd.f32 0.0, %v1880
  %v1882 = vpop.f32.mrb[0].mxu0
  %1883 = vmatprep.mubr.bf16.mxu0 0
  %1884 = vmatmul.mubr.bf16.gmra.mrb[0].mxu0 %v1752
  %v1885 = vpop.f32.mrb[0].mxu0
  %v1886 = vadd.f32 0.0, %v1885
  %v1887 = vpop.f32.mrb[0].mxu0
  %v1888 = vpop.f32.mrb[0].mxu0
  %v1889 = vadd.f32 0.0, %v1888
  %v1890 = vpop.f32.mrb[0].mxu0
  %1891 = vmatprep.mubr.bf16.mxu0 0
  %1892 = vmatmul.mubr.bf16.gmra.mrb[0].mxu0 %v1753
  %v1893 = vpop.f32.mrb[0].mxu0
  %v1894 = vadd.f32 0.0, %v1893
  %v1895 = vpop.f32.mrb[0].mxu0
  %v1896 = vpop.f32.mrb[0].mxu0
  %v1897 = vadd.f32 0.0, %v1896
  %v1898 = vpop.f32.mrb[0].mxu0
  %1899 = vmatprep.mubr.bf16.mxu0 0
  %1900 = vmatmul.mubr.bf16.gmra.mrb[0].mxu0 %v1754
  %v1901 = vpop.f32.mrb[0].mxu0
  %v1902 = vadd.f32 0.0, %v1901
  %v1903 = vpop.f32.mrb[0].mxu0
  %v1904 = vpop.f32.mrb[0].mxu0
  %v1905 = vadd.f32 0.0, %v1904
  %v1906 = vpop.f32.mrb[0].mxu0
  %1907 = vdwg.mxu0
  %v1908 = vadd.f32 %v1665, %v1846
  %v1909 = vadd.f32 %v1666, %v1849
  %v1910 = vadd.f32 %v1667, %v1854
  %v1911 = vadd.f32 %v1668, %v1857
  %v1912 = vadd.f32 %v1669, %v1862
  %v1913 = vadd.f32 %v1670, %v1865
  %v1914 = vadd.f32 %v1671, %v1870
  %v1915 = vadd.f32 %v1672, %v1873
  %v1916 = vadd.f32 %v1673, %v1878
  %v1917 = vadd.f32 %v1674, %v1881
  %v1918 = vadd.f32 %v1675, %v1886
  %v1919 = vadd.f32 %v1676, %v1889
  %v1920 = vadd.f32 %v1677, %v1894
  %v1921 = vadd.f32 %v1678, %v1897
  %v1922 = vadd.f32 %v1679, %v1902
  %v1923 = vadd.f32 %v1680, %v1905
  %s1924 = scalar_lea.vmem %s0, 512
  %v1925 = vld [vmem:[%s1924] sm:$0xf]
  %v1926 = vld [vmem:[%s1924 + $0x4] sm:$0xf]
  %v1927 = vld [vmem:[%s1924 + $0x8] sm:$0xf]
  %v1928 = vld [vmem:[%s1924 + $0xc] sm:$0xf]
  %v1929 = vld [vmem:[%s1924 + $0x10] sm:$0xf]
  %v1930 = vld [vmem:[%s1924 + $0x14] sm:$0xf]
  %v1931 = vld [vmem:[%s1924 + $0x18] sm:$0xf]
  %v1932 = vld [vmem:[%s1924 + $0x1c] sm:$0xf]
  %v1933 = vld [vmem:[%s1924 + $0x20] sm:$0xf]
  %v1934 = vld [vmem:[%s1924 + $0x24] sm:$0xf]
  %v1935 = vld [vmem:[%s1924 + $0x28] sm:$0xf]
  %v1936 = vld [vmem:[%s1924 + $0x2c] sm:$0xf]
  %v1937 = vld [vmem:[%s1924 + $0x30] sm:$0xf]
  %v1938 = vld [vmem:[%s1924 + $0x34] sm:$0xf]
  %v1939 = vld [vmem:[%s1924 + $0x38] sm:$0xf]
  %v1940 = vld [vmem:[%s1924 + $0x3c] sm:$0xf]
  %s1941 = scalar_lea.vmem %s1, 512
  %v1942 = vld [vmem:[%s1941] sm:$0xf]
  %v1943 = vld [vmem:[%s1941 + $0x4] sm:$0xf]
  %v1944 = vld [vmem:[%s1941 + $0x8] sm:$0xf]
  %v1945 = vld [vmem:[%s1941 + $0xc] sm:$0xf]
  %v1946 = vld [vmem:[%s1941 + $0x10] sm:$0xf]
  %v1947 = vld [vmem:[%s1941 + $0x14] sm:$0xf]
  %v1948 = vld [vmem:[%s1941 + $0x18] sm:$0xf]
  %v1949 = vld [vmem:[%s1941 + $0x1c] sm:$0xf]
  %v1950 = vld [vmem:[%s1941 + $0x20] sm:$0xf]
  %v1951 = vld [vmem:[%s1941 + $0x24] sm:$0xf]
  %v1952 = vld [vmem:[%s1941 + $0x28] sm:$0xf]
  %v1953 = vld [vmem:[%s1941 + $0x2c] sm:$0xf]
  %v1954 = vld [vmem:[%s1941 + $0x30] sm:$0xf]
  %v1955 = vld [vmem:[%s1941 + $0x34] sm:$0xf]
  %v1956 = vld [vmem:[%s1941 + $0x38] sm:$0xf]
  %v1957 = vld [vmem:[%s1941 + $0x3c] sm:$0xf]
  %v1974 = vunpack.c.l.b16 %v1925
  %v1975 = vunpack.c.l.b16 %v1926
  %v1976 = vunpack.c.l.b16 %v1927
  %v1977 = vunpack.c.l.b16 %v1928
  %v1978 = vunpack.c.l.b16 %v1929
  %v1979 = vunpack.c.l.b16 %v1930
  %v1980 = vunpack.c.l.b16 %v1931
  %v1981 = vunpack.c.l.b16 %v1932
  %v1982 = vunpack.c.l.b16 %v1933
  %v1983 = vunpack.c.l.b16 %v1934
  %v1984 = vunpack.c.l.b16 %v1935
  %v1985 = vunpack.c.l.b16 %v1936
  %v1986 = vunpack.c.l.b16 %v1937
  %v1987 = vunpack.c.l.b16 %v1938
  %v1988 = vunpack.c.l.b16 %v1939
  %v1989 = vunpack.c.l.b16 %v1940
  %v1990 = vpack.c.b16 %v1975, %v1974
  %v1991 = vpack.c.b16 %v1977, %v1976
  %v1992 = vpack.c.b16 %v1979, %v1978
  %v1993 = vpack.c.b16 %v1981, %v1980
  %v1994 = vpack.c.b16 %v1983, %v1982
  %v1995 = vpack.c.b16 %v1985, %v1984
  %v1996 = vpack.c.b16 %v1987, %v1986
  %v1997 = vpack.c.b16 %v1989, %v1988
  %v2022 = vunpack.c.l.b16 %v1942
  %v2023 = vunpack.c.l.b16 %v1943
  %v2024 = vunpack.c.l.b16 %v1944
  %v2025 = vunpack.c.l.b16 %v1945
  %v2026 = vunpack.c.l.b16 %v1946
  %v2027 = vunpack.c.l.b16 %v1947
  %v2028 = vunpack.c.l.b16 %v1948
  %v2029 = vunpack.c.l.b16 %v1949
  %v2030 = vunpack.c.l.b16 %v1950
  %v2031 = vunpack.c.l.b16 %v1951
  %v2032 = vunpack.c.l.b16 %v1952
  %v2033 = vunpack.c.l.b16 %v1953
  %v2034 = vunpack.c.l.b16 %v1954
  %v2035 = vunpack.c.l.b16 %v1955
  %v2036 = vunpack.c.l.b16 %v1956
  %v2037 = vunpack.c.l.b16 %v1957
  %v2038 = vpack.c.b16 %v2023, %v2022
  %v2039 = vpack.c.b16 %v2025, %v2024
  %v2040 = vpack.c.b16 %v2027, %v2026
  %v2041 = vpack.c.b16 %v2029, %v2028
  %v2042 = vpack.c.b16 %v2031, %v2030
  %v2043 = vpack.c.b16 %v2033, %v2032
  %v2044 = vpack.c.b16 %v2035, %v2034
  %v2045 = vpack.c.b16 %v2037, %v2036
  %2054 = vmatprep.subr.bf16.mxu0 0
  %2055 = vmatpush1.bf16.msra.mxu0 %v2038
  %2056 = vmatprep.subr.bf16.mxu0 0
  %2057 = vmatpush1.bf16.msra.mxu0 %v2039
  %2058 = vmatprep.subr.bf16.mxu0 0
  %2059 = vmatpush1.bf16.msra.mxu0 %v2040
  %2060 = vmatprep.subr.bf16.mxu0 0
  %2061 = vmatpush1.bf16.msra.mxu0 %v2041
  %2062 = vmatprep.subr.bf16.mxu0 0
  %2063 = vmatpush1.bf16.msra.mxu0 %v2042
  %2064 = vmatprep.subr.bf16.mxu0 0
  %2065 = vmatpush1.bf16.msra.mxu0 %v2043
  %2066 = vmatprep.subr.bf16.mxu0 0
  %2067 = vmatpush1.bf16.msra.mxu0 %v2044
  %2068 = vmatprep.subr.bf16.mxu0 0
  %2069 = vmatpush1.bf16.msra.mxu0 %v2045
  %2070 = vmatprep.subr.bf16.mxu0 0
  %2071 = vmatpush1.bf16.msra.mxu0 0
  %2072 = vmatprep.subr.bf16.mxu0 0
  %2073 = vmatpush1.bf16.msra.mxu0 0
  %2074 = vmatprep.subr.bf16.mxu0 0
  %2075 = vmatpush1.bf16.msra.mxu0 0
  %2076 = vmatprep.subr.bf16.mxu0 0
  %2077 = vmatpush1.bf16.msra.mxu0 0
  %2078 = vmatprep.subr.bf16.mxu0 0
  %2079 = vmatpush1.bf16.msra.mxu0 0
  %2080 = vmatprep.subr.bf16.mxu0 0
  %2081 = vmatpush1.bf16.msra.mxu0 0
  %2082 = vmatprep.subr.bf16.mxu0 0
  %2083 = vmatpush1.bf16.msra.mxu0 0
  %2084 = vmatprep.subr.bf16.mxu0 0
  %2085 = vmatpush1.bf16.msra.mxu0 0
  %2086 = vmatprep.mubr.bf16.mxu0 0
  %2087 = vmatmul.mubr.bf16.gmra.mrb[0].mxu0 %v1990
  %v2088 = vpop.f32.mrb[0].mxu0
  %v2089 = vadd.f32 0.0, %v2088
  %v2090 = vpop.f32.mrb[0].mxu0
  %v2091 = vpop.f32.mrb[0].mxu0
  %v2092 = vadd.f32 0.0, %v2091
  %v2093 = vpop.f32.mrb[0].mxu0
  %2094 = vmatprep.mubr.bf16.mxu0 0
  %2095 = vmatmul.mubr.bf16.gmra.mrb[0].mxu0 %v1991
  %v2096 = vpop.f32.mrb[0].mxu0
  %v2097 = vadd.f32 0.0, %v2096
  %v2098 = vpop.f32.mrb[0].mxu0
  %v2099 = vpop.f32.mrb[0].mxu0
  %v2100 = vadd.f32 0.0, %v2099
  %v2101 = vpop.f32.mrb[0].mxu0
  %2102 = vmatprep.mubr.bf16.mxu0 0
  %2103 = vmatmul.mubr.bf16.gmra.mrb[0].mxu0 %v1992
  %v2104 = vpop.f32.mrb[0].mxu0
  %v2105 = vadd.f32 0.0, %v2104
  %v2106 = vpop.f32.mrb[0].mxu0
  %v2107 = vpop.f32.mrb[0].mxu0
  %v2108 = vadd.f32 0.0, %v2107
  %v2109 = vpop.f32.mrb[0].mxu0
  %2110 = vmatprep.mubr.bf16.mxu0 0
  %2111 = vmatmul.mubr.bf16.gmra.mrb[0].mxu0 %v1993
  %v2112 = vpop.f32.mrb[0].mxu0
  %v2113 = vadd.f32 0.0, %v2112
  %v2114 = vpop.f32.mrb[0].mxu0
  %v2115 = vpop.f32.mrb[0].mxu0
  %v2116 = vadd.f32 0.0, %v2115
  %v2117 = vpop.f32.mrb[0].mxu0
  %2118 = vmatprep.mubr.bf16.mxu0 0
  %2119 = vmatmul.mubr.bf16.gmra.mrb[0].mxu0 %v1994
  %v2120 = vpop.f32.mrb[0].mxu0
  %v2121 = vadd.f32 0.0, %v2120
  %v2122 = vpop.f32.mrb[0].mxu0
  %v2123 = vpop.f32.mrb[0].mxu0
  %v2124 = vadd.f32 0.0, %v2123
  %v2125 = vpop.f32.mrb[0].mxu0
  %2126 = vmatprep.mubr.bf16.mxu0 0
  %2127 = vmatmul.mubr.bf16.gmra.mrb[0].mxu0 %v1995
  %v2128 = vpop.f32.mrb[0].mxu0
  %v2129 = vadd.f32 0.0, %v2128
  %v2130 = vpop.f32.mrb[0].mxu0
  %v2131 = vpop.f32.mrb[0].mxu0
  %v2132 = vadd.f32 0.0, %v2131
  %v2133 = vpop.f32.mrb[0].mxu0
  %2134 = vmatprep.mubr.bf16.mxu0 0
  %2135 = vmatmul.mubr.bf16.gmra.mrb[0].mxu0 %v1996
  %v2136 = vpop.f32.mrb[0].mxu0
  %v2137 = vadd.f32 0.0, %v2136
  %v2138 = vpop.f32.mrb[0].mxu0
  %v2139 = vpop.f32.mrb[0].mxu0
  %v2140 = vadd.f32 0.0, %v2139
  %v2141 = vpop.f32.mrb[0].mxu0
  %2142 = vmatprep.mubr.bf16.mxu0 0
  %2143 = vmatmul.mubr.bf16.gmra.mrb[0].mxu0 %v1997
  %v2144 = vpop.f32.mrb[0].mxu0
  %v2145 = vadd.f32 0.0, %v2144
  %v2146 = vpop.f32.mrb[0].mxu0
  %v2147 = vpop.f32.mrb[0].mxu0
  %v2148 = vadd.f32 0.0, %v2147
  %v2149 = vpop.f32.mrb[0].mxu0
  %2150 = vdwg.mxu0
  %v2151 = vadd.f32 %v1908, %v2089
  %v2152 = vadd.f32 %v1909, %v2092
  %v2153 = vadd.f32 %v1910, %v2097
  %v2154 = vadd.f32 %v1911, %v2100
  %v2155 = vadd.f32 %v1912, %v2105
  %v2156 = vadd.f32 %v1913, %v2108
  %v2157 = vadd.f32 %v1914, %v2113
  %v2158 = vadd.f32 %v1915, %v2116
  %v2159 = vadd.f32 %v1916, %v2121
  %v2160 = vadd.f32 %v1917, %v2124
  %v2161 = vadd.f32 %v1918, %v2129
  %v2162 = vadd.f32 %v1919, %v2132
  %v2163 = vadd.f32 %v1920, %v2137
  %v2164 = vadd.f32 %v1921, %v2140
  %v2165 = vadd.f32 %v1922, %v2145
  %v2166 = vadd.f32 %v1923, %v2148
  %2167 = vst [vmem:[%s2] sm:$0xff] %v2151
  %2168 = vst [vmem:[%s2 + $0x8] sm:$0xff] %v2152
  %2169 = vst [vmem:[%s2 + $0x10] sm:$0xff] %v2153
  %2170 = vst [vmem:[%s2 + $0x18] sm:$0xff] %v2154
  %2171 = vst [vmem:[%s2 + $0x20] sm:$0xff] %v2155
  %2172 = vst [vmem:[%s2 + $0x28] sm:$0xff] %v2156
  %2173 = vst [vmem:[%s2 + $0x30] sm:$0xff] %v2157
  %2174 = vst [vmem:[%s2 + $0x38] sm:$0xff] %v2158
  %2175 = vst [vmem:[%s2 + $0x40] sm:$0xff] %v2159
  %2176 = vst [vmem:[%s2 + $0x48] sm:$0xff] %v2160
  %2177 = vst [vmem:[%s2 + $0x50] sm:$0xff] %v2161
  %2178 = vst [vmem:[%s2 + $0x58] sm:$0xff] %v2162
  %2179 = vst [vmem:[%s2 + $0x60] sm:$0xff] %v2163
  %2180 = vst [vmem:[%s2 + $0x68] sm:$0xff] %v2164
  %2181 = vst [vmem:[%s2 + $0x70] sm:$0xff] %v2165
  %2182 = vst [vmem:[%s2 + $0x78] sm:$0xff] %v2166
  %v2183 = vadd.f32 %v2151, %v2152
  %v2184 = vadd.f32 %v2183, %v2153
  %v2185 = vadd.f32 %v2184, %v2154
  %v2186 = vadd.f32 %v2185, %v2155
  %v2187 = vadd.f32 %v2186, %v2156
  %v2188 = vadd.f32 %v2187, %v2157
  %v2189 = vadd.f32 %v2188, %v2158
  %v2190 = vadd.f32 %v2189, %v2159
  %v2191 = vadd.f32 %v2190, %v2160
  %v2192 = vadd.f32 %v2191, %v2161
  %v2193 = vadd.f32 %v2192, %v2162
  %v2194 = vadd.f32 %v2193, %v2163
  %v2195 = vadd.f32 %v2194, %v2164
  %v2196 = vadd.f32 %v2195, %v2165
  %v2197 = vadd.f32 %v2196, %v2166
  %v2198 = vrot.slane %v2197, 4
  %v2199 = vadd.f32 %v2197, %v2198
  %v2200 = vrot.slane %v2199, 2
  %v2201 = vadd.f32 %v2199, %v2200
  %v2202 = vrot.slane %v2201, 1
  %v2203 = vadd.f32 %v2201, %v2202
  %2204 = vst [vmem:[%s3] sm:$0x1] %v2203
  %v2205 = vmul.f32 %v2151, %v2151
  %v2206 = vmul.f32 %v2152, %v2152
  %v2207 = vmul.f32 %v2153, %v2153
  %v2208 = vmul.f32 %v2154, %v2154
  %v2209 = vmul.f32 %v2155, %v2155
  %v2210 = vmul.f32 %v2156, %v2156
  %v2211 = vmul.f32 %v2157, %v2157
  %v2212 = vmul.f32 %v2158, %v2158
  %v2213 = vmul.f32 %v2159, %v2159
  %v2214 = vmul.f32 %v2160, %v2160
  %v2215 = vmul.f32 %v2161, %v2161
  %v2216 = vmul.f32 %v2162, %v2162
  %v2217 = vmul.f32 %v2163, %v2163
  %v2218 = vmul.f32 %v2164, %v2164
  %v2219 = vmul.f32 %v2165, %v2165
  %v2220 = vmul.f32 %v2166, %v2166
  %v2221 = vadd.f32 %v2205, %v2206
  %v2222 = vadd.f32 %v2221, %v2207
  %v2223 = vadd.f32 %v2222, %v2208
  %v2224 = vadd.f32 %v2223, %v2209
  %v2225 = vadd.f32 %v2224, %v2210
  %v2226 = vadd.f32 %v2225, %v2211
  %v2227 = vadd.f32 %v2226, %v2212
  %v2228 = vadd.f32 %v2227, %v2213
  %v2229 = vadd.f32 %v2228, %v2214
  %v2230 = vadd.f32 %v2229, %v2215
  %v2231 = vadd.f32 %v2230, %v2216
  %v2232 = vadd.f32 %v2231, %v2217
  %v2233 = vadd.f32 %v2232, %v2218
  %v2234 = vadd.f32 %v2233, %v2219
  %v2235 = vadd.f32 %v2234, %v2220
  %v2236 = vrot.slane %v2235, 4
  %v2237 = vadd.f32 %v2235, %v2236
  %v2238 = vrot.slane %v2237, 2
  %v2239 = vadd.f32 %v2237, %v2238
  %v2240 = vrot.slane %v2239, 1
  %v2241 = vadd.f32 %v2239, %v2240
  %2242 = vst [vmem:[%s3 + $0x1] sm:$0x1] %v2241
  // Predicated region
  $region10: #{resnet_unit_forward.8} parent=0 // pred_check
    _
  $region11: #{resnet_unit_forward.8} parent=0 // pred_check_branch
    %2244 = sbr.rel (0) target = $region13
  $region12: #{resnet_unit_forward.8} parent=0 // pred_region
    _
  $region13: #{resnet_unit_forward.8} parent=0 // pred_fallthru
    _
  // Predicated region
  $region14: #{resnet_unit_forward.8} parent=0 // pred_check
    _
  $region15: #{resnet_unit_forward.8} parent=0 // pred_check_branch
    %2246 = sbr.rel (0) target = $region17
  $region16: #{resnet_unit_forward.8} parent=0 // pred_region
    _
  $region17: #{resnet_unit_forward.8} parent=0 // pred_fallthru
    _
  // Predicated region
  $region18: #{resnet_unit_forward.8} parent=0 // pred_check
    _
  $region19: #{resnet_unit_forward.8} parent=0 // pred_check_branch
    %2248 = sbr.rel (0) target = $region21
  $region20: #{resnet_unit_forward.8} parent=0 // pred_region
    _
  $region21: #{resnet_unit_forward.8} parent=0 // pred_fallthru
    _
  // Predicated region
  $region22: #{resnet_unit_forward.8} parent=0 // pred_check
    _
  $region23: #{resnet_unit_forward.8} parent=0 // pred_check_branch
    %2250 = sbr.rel (0) target = $region25
  $region24: #{resnet_unit_forward.8} parent=0 // pred_region
    _
  $region25: #{resnet_unit_forward.8} parent=0 // pred_fallthru
    _

// kernel: resnet_unit_forward.10
$region0: #{resnet_unit_forward.10}
  #allocation0 [shape = 'u32[]', space=smem, size = 0x4, offset = 0x4, fixed_abs, tag = 'smem constant byte address 0x4 - core index']
  #allocation1 [shape = 'u32[144,128]{1,0:T(1,128)}', space=vmem, size = 0x12000, scoped, tag = 'internal scratch']
  %s0 = inlined_call_operand.vmem [shape: bf16[128,128], index: 0, kind: input, shape index: {}]
  %s1 = inlined_call_operand.vmem [shape: f32[1,128], index: 1, kind: input, shape index: {}]
  %s2 = inlined_call_operand.vmem [shape: f32[1,128], index: 2, kind: input, shape index: {}]
  %s3 = inlined_call_operand.vmem [shape: bf16[128,128], index: 3, kind: input, shape index: {}]
  %s4 = inlined_call_operand.vmem [shape: f32[128,128], index: 4, kind: output, shape index: {0}]
  %s5 = inlined_call_operand.vmem [shape: f32[1,2,128], index: 5, kind: output, shape index: {1}]
  %6 = xla_tuple %s4, %s5
  %s7 = sld [smem:[#allocation0]]
  $region34: #{resnet_unit_forward.10} parent=0
    _
  %s9 = ssub.s32 1, %s7
  %s10 = scalar_select 0, %s9, %s7
  // Predicated region
  $region2: #{resnet_unit_forward.10} parent=0 // pred_check
    _
  $region3: #{resnet_unit_forward.10} parent=0 // pred_check_branch
    %12 = sbr.rel (0) target = $region5
  $region4: #{resnet_unit_forward.10} parent=0 // pred_region
    _
  $region5: #{resnet_unit_forward.10} parent=0 // pred_fallthru
    _
  // Predicated region
  $region6: #{resnet_unit_forward.10} parent=0 // pred_check
    _
  $region7: #{resnet_unit_forward.10} parent=0 // pred_check_branch
    %14 = sbr.rel (0) target = $region9
  $region8: #{resnet_unit_forward.10} parent=0 // pred_region
    _
  $region9: #{resnet_unit_forward.10} parent=0 // pred_fallthru
    _
  // Predicated region
  $region10: #{resnet_unit_forward.10} parent=0 // pred_check
    _
  $region11: #{resnet_unit_forward.10} parent=0 // pred_check_branch
    %16 = sbr.rel (0) target = $region13
  $region12: #{resnet_unit_forward.10} parent=0 // pred_region
    _
  $region13: #{resnet_unit_forward.10} parent=0 // pred_fallthru
    _
  // Predicated region
  $region14: #{resnet_unit_forward.10} parent=0 // pred_check
    _
  $region15: #{resnet_unit_forward.10} parent=0 // pred_check_branch
    %18 = sbr.rel (0) target = $region17
  $region16: #{resnet_unit_forward.10} parent=0 // pred_region
    _
  $region17: #{resnet_unit_forward.10} parent=0 // pred_fallthru
    _
  %v20 = vld [vmem:[%s0] sm:$0xf]
  %v21 = vld [vmem:[%s0 + $0x4] sm:$0xf]
  %v22 = vld [vmem:[%s0 + $0x8] sm:$0xf]
  %v23 = vld [vmem:[%s0 + $0xc] sm:$0xf]
  %v24 = vld [vmem:[%s0 + $0x10] sm:$0xf]
  %v25 = vld [vmem:[%s0 + $0x14] sm:$0xf]
  %v26 = vld [vmem:[%s0 + $0x18] sm:$0xf]
  %v27 = vld [vmem:[%s0 + $0x1c] sm:$0xf]
  %v28 = vld [vmem:[%s0 + $0x20] sm:$0xf]
  %v29 = vld [vmem:[%s0 + $0x24] sm:$0xf]
  %v30 = vld [vmem:[%s0 + $0x28] sm:$0xf]
  %v31 = vld [vmem:[%s0 + $0x2c] sm:$0xf]
  %v32 = vld [vmem:[%s0 + $0x30] sm:$0xf]
  %v33 = vld [vmem:[%s0 + $0x34] sm:$0xf]
  %v34 = vld [vmem:[%s0 + $0x38] sm:$0xf]
  %v35 = vld [vmem:[%s0 + $0x3c] sm:$0xf]
  %v36 = vld [vmem:[%s3] sm:$0xf]
  %v37 = vld [vmem:[%s3 + $0x4] sm:$0xf]
  %v38 = vld [vmem:[%s3 + $0x8] sm:$0xf]
  %v39 = vld [vmem:[%s3 + $0xc] sm:$0xf]
  %v40 = vld [vmem:[%s3 + $0x10] sm:$0xf]
  %v41 = vld [vmem:[%s3 + $0x14] sm:$0xf]
  %v42 = vld [vmem:[%s3 + $0x18] sm:$0xf]
  %v43 = vld [vmem:[%s3 + $0x1c] sm:$0xf]
  %v44 = vld [vmem:[%s3 + $0x20] sm:$0xf]
  %v45 = vld [vmem:[%s3 + $0x24] sm:$0xf]
  %v46 = vld [vmem:[%s3 + $0x28] sm:$0xf]
  %v47 = vld [vmem:[%s3 + $0x2c] sm:$0xf]
  %v48 = vld [vmem:[%s3 + $0x30] sm:$0xf]
  %v49 = vld [vmem:[%s3 + $0x34] sm:$0xf]
  %v50 = vld [vmem:[%s3 + $0x38] sm:$0xf]
  %v51 = vld [vmem:[%s3 + $0x3c] sm:$0xf]
  %v68 = vunpack.c.l.b16 %v20
  %v69 = vunpack.c.l.b16 %v21
  %v70 = vunpack.c.l.b16 %v22
  %v71 = vunpack.c.l.b16 %v23
  %v72 = vunpack.c.l.b16 %v24
  %v73 = vunpack.c.l.b16 %v25
  %v74 = vunpack.c.l.b16 %v26
  %v75 = vunpack.c.l.b16 %v27
  %v76 = vunpack.c.l.b16 %v28
  %v77 = vunpack.c.l.b16 %v29
  %v78 = vunpack.c.l.b16 %v30
  %v79 = vunpack.c.l.b16 %v31
  %v80 = vunpack.c.l.b16 %v32
  %v81 = vunpack.c.l.b16 %v33
  %v82 = vunpack.c.l.b16 %v34
  %v83 = vunpack.c.l.b16 %v35
  %v84 = vpack.c.b16 %v69, %v68
  %v85 = vpack.c.b16 %v71, %v70
  %v86 = vpack.c.b16 %v73, %v72
  %v87 = vpack.c.b16 %v75, %v74
  %v88 = vpack.c.b16 %v77, %v76
  %v89 = vpack.c.b16 %v79, %v78
  %v90 = vpack.c.b16 %v81, %v80
  %v91 = vpack.c.b16 %v83, %v82
  %v116 = vunpack.c.l.b16 %v36
  %v117 = vunpack.c.l.b16 %v37
  %v118 = vunpack.c.l.b16 %v38
  %v119 = vunpack.c.l.b16 %v39
  %v120 = vunpack.c.l.b16 %v40
  %v121 = vunpack.c.l.b16 %v41
  %v122 = vunpack.c.l.b16 %v42
  %v123 = vunpack.c.l.b16 %v43
  %v124 = vunpack.c.l.b16 %v44
  %v125 = vunpack.c.l.b16 %v45
  %v126 = vunpack.c.l.b16 %v46
  %v127 = vunpack.c.l.b16 %v47
  %v128 = vunpack.c.l.b16 %v48
  %v129 = vunpack.c.l.b16 %v49
  %v130 = vunpack.c.l.b16 %v50
  %v131 = vunpack.c.l.b16 %v51
  %v132 = vpack.c.b16 %v117, %v116
  %v133 = vpack.c.b16 %v119, %v118
  %v134 = vpack.c.b16 %v121, %v120
  %v135 = vpack.c.b16 %v123, %v122
  %v136 = vpack.c.b16 %v125, %v124
  %v137 = vpack.c.b16 %v127, %v126
  %v138 = vpack.c.b16 %v129, %v128
  %v139 = vpack.c.b16 %v131, %v130
  %148 = vmatprep.subr.bf16.mxu0 0
  %149 = vmatpush1.bf16.msra.mxu0 %v132
  %150 = vmatprep.subr.bf16.mxu0 0
  %151 = vmatpush1.bf16.msra.mxu0 %v133
  %152 = vmatprep.subr.bf16.mxu0 0
  %153 = vmatpush1.bf16.msra.mxu0 %v134
  %154 = vmatprep.subr.bf16.mxu0 0
  %155 = vmatpush1.bf16.msra.mxu0 %v135
  %156 = vmatprep.subr.bf16.mxu0 0
  %157 = vmatpush1.bf16.msra.mxu0 %v136
  %158 = vmatprep.subr.bf16.mxu0 0
  %159 = vmatpush1.bf16.msra.mxu0 %v137
  %160 = vmatprep.subr.bf16.mxu0 0
  %161 = vmatpush1.bf16.msra.mxu0 %v138
  %162 = vmatprep.subr.bf16.mxu0 0
  %163 = vmatpush1.bf16.msra.mxu0 %v139
  %164 = vmatprep.subr.bf16.mxu0 0
  %165 = vmatpush1.bf16.msra.mxu0 0
  %166 = vmatprep.subr.bf16.mxu0 0
  %167 = vmatpush1.bf16.msra.mxu0 0
  %168 = vmatprep.subr.bf16.mxu0 0
  %169 = vmatpush1.bf16.msra.mxu0 0
  %170 = vmatprep.subr.bf16.mxu0 0
  %171 = vmatpush1.bf16.msra.mxu0 0
  %172 = vmatprep.subr.bf16.mxu0 0
  %173 = vmatpush1.bf16.msra.mxu0 0
  %174 = vmatprep.subr.bf16.mxu0 0
  %175 = vmatpush1.bf16.msra.mxu0 0
  %176 = vmatprep.subr.bf16.mxu0 0
  %177 = vmatpush1.bf16.msra.mxu0 0
  %178 = vmatprep.subr.bf16.mxu0 0
  %179 = vmatpush1.bf16.msra.mxu0 0
  %180 = vmatprep.mubr.bf16.mxu0 0
  %181 = vmatmul.mubr.bf16.gmra.mrb[0].mxu0 %v84
  %v182 = vpop.f32.mrb[0].mxu0
  %v183 = vadd.f32 0.0, %v182
  %v184 = vpop.f32.mrb[0].mxu0
  %v185 = vpop.f32.mrb[0].mxu0
  %v186 = vadd.f32 0.0, %v185
  %v187 = vpop.f32.mrb[0].mxu0
  %188 = vmatprep.mubr.bf16.mxu0 0
  %189 = vmatmul.mubr.bf16.gmra.mrb[0].mxu0 %v85
  %v190 = vpop.f32.mrb[0].mxu0
  %v191 = vadd.f32 0.0, %v190
  %v192 = vpop.f32.mrb[0].mxu0
  %v193 = vpop.f32.mrb[0].mxu0
  %v194 = vadd.f32 0.0, %v193
  %v195 = vpop.f32.mrb[0].mxu0
  %196 = vmatprep.mubr.bf16.mxu0 0
  %197 = vmatmul.mubr.bf16.gmra.mrb[0].mxu0 %v86
  %v198 = vpop.f32.mrb[0].mxu0
  %v199 = vadd.f32 0.0, %v198
  %v200 = vpop.f32.mrb[0].mxu0
  %v201 = vpop.f32.mrb[0].mxu0
  %v202 = vadd.f32 0.0, %v201
  %v203 = vpop.f32.mrb[0].mxu0
  %204 = vmatprep.mubr.bf16.mxu0 0
  %205 = vmatmul.mubr.bf16.gmra.mrb[0].mxu0 %v87
  %v206 = vpop.f32.mrb[0].mxu0
  %v207 = vadd.f32 0.0, %v206
  %v208 = vpop.f32.mrb[0].mxu0
  %v209 = vpop.f32.mrb[0].mxu0
  %v210 = vadd.f32 0.0, %v209
  %v211 = vpop.f32.mrb[0].mxu0
  %212 = vmatprep.mubr.bf16.mxu0 0
  %213 = vmatmul.mubr.bf16.gmra.mrb[0].mxu0 %v88
  %v214 = vpop.f32.mrb[0].mxu0
  %v215 = vadd.f32 0.0, %v214
  %v216 = vpop.f32.mrb[0].mxu0
  %v217 = vpop.f32.mrb[0].mxu0
  %v218 = vadd.f32 0.0, %v217
  %v219 = vpop.f32.mrb[0].mxu0
  %220 = vmatprep.mubr.bf16.mxu0 0
  %221 = vmatmul.mubr.bf16.gmra.mrb[0].mxu0 %v89
  %v222 = vpop.f32.mrb[0].mxu0
  %v223 = vadd.f32 0.0, %v222
  %v224 = vpop.f32.mrb[0].mxu0
  %v225 = vpop.f32.mrb[0].mxu0
  %v226 = vadd.f32 0.0, %v225
  %v227 = vpop.f32.mrb[0].mxu0
  %228 = vmatprep.mubr.bf16.mxu0 0
  %229 = vmatmul.mubr.bf16.gmra.mrb[0].mxu0 %v90
  %v230 = vpop.f32.mrb[0].mxu0
  %v231 = vadd.f32 0.0, %v230
  %v232 = vpop.f32.mrb[0].mxu0
  %v233 = vpop.f32.mrb[0].mxu0
  %v234 = vadd.f32 0.0, %v233
  %v235 = vpop.f32.mrb[0].mxu0
  %236 = vmatprep.mubr.bf16.mxu0 0
  %237 = vmatmul.mubr.bf16.gmra.mrb[0].mxu0 %v91
  %v238 = vpop.f32.mrb[0].mxu0
  %v239 = vadd.f32 0.0, %v238
  %v240 = vpop.f32.mrb[0].mxu0
  %v241 = vpop.f32.mrb[0].mxu0
  %v242 = vadd.f32 0.0, %v241
  %v243 = vpop.f32.mrb[0].mxu0
  %244 = vdwg.mxu0
  %245 = vst [vmem:[%s4] sm:$0xff] %v183
  %246 = vst [vmem:[%s4 + $0x8] sm:$0xff] %v186
  %247 = vst [vmem:[%s4 + $0x10] sm:$0xff] %v191
  %248 = vst [vmem:[%s4 + $0x18] sm:$0xff] %v194
  %249 = vst [vmem:[%s4 + $0x20] sm:$0xff] %v199
  %250 = vst [vmem:[%s4 + $0x28] sm:$0xff] %v202
  %251 = vst [vmem:[%s4 + $0x30] sm:$0xff] %v207
  %252 = vst [vmem:[%s4 + $0x38] sm:$0xff] %v210
  %253 = vst [vmem:[%s4 + $0x40] sm:$0xff] %v215
  %254 = vst [vmem:[%s4 + $0x48] sm:$0xff] %v218
  %255 = vst [vmem:[%s4 + $0x50] sm:$0xff] %v223
  %256 = vst [vmem:[%s4 + $0x58] sm:$0xff] %v226
  %257 = vst [vmem:[%s4 + $0x60] sm:$0xff] %v231
  %258 = vst [vmem:[%s4 + $0x68] sm:$0xff] %v234
  %259 = vst [vmem:[%s4 + $0x70] sm:$0xff] %v239
  %260 = vst [vmem:[%s4 + $0x78] sm:$0xff] %v242
  %v261 = vadd.f32 %v183, %v186
  %v262 = vadd.f32 %v261, %v191
  %v263 = vadd.f32 %v262, %v194
  %v264 = vadd.f32 %v263, %v199
  %v265 = vadd.f32 %v264, %v202
  %v266 = vadd.f32 %v265, %v207
  %v267 = vadd.f32 %v266, %v210
  %v268 = vadd.f32 %v267, %v215
  %v269 = vadd.f32 %v268, %v218
  %v270 = vadd.f32 %v269, %v223
  %v271 = vadd.f32 %v270, %v226
  %v272 = vadd.f32 %v271, %v231
  %v273 = vadd.f32 %v272, %v234
  %v274 = vadd.f32 %v273, %v239
  %v275 = vadd.f32 %v274, %v242
  %v276 = vrot.slane %v275, 4
  %v277 = vadd.f32 %v275, %v276
  %v278 = vrot.slane %v277, 2
  %v279 = vadd.f32 %v277, %v278
  %v280 = vrot.slane %v279, 1
  %v281 = vadd.f32 %v279, %v280
  %282 = vst [vmem:[%s5] sm:$0x1] %v281
  %v283 = vmul.f32 %v183, %v183
  %v284 = vmul.f32 %v186, %v186
  %v285 = vmul.f32 %v191, %v191
  %v286 = vmul.f32 %v194, %v194
  %v287 = vmul.f32 %v199, %v199
  %v288 = vmul.f32 %v202, %v202
  %v289 = vmul.f32 %v207, %v207
  %v290 = vmul.f32 %v210, %v210
  %v291 = vmul.f32 %v215, %v215
  %v292 = vmul.f32 %v218, %v218
  %v293 = vmul.f32 %v223, %v223
  %v294 = vmul.f32 %v226, %v226
  %v295 = vmul.f32 %v231, %v231
  %v296 = vmul.f32 %v234, %v234
  %v297 = vmul.f32 %v239, %v239
  %v298 = vmul.f32 %v242, %v242
  %v299 = vadd.f32 %v283, %v284
  %v300 = vadd.f32 %v299, %v285
  %v301 = vadd.f32 %v300, %v286
  %v302 = vadd.f32 %v301, %v287
  %v303 = vadd.f32 %v302, %v288
  %v304 = vadd.f32 %v303, %v289
  %v305 = vadd.f32 %v304, %v290
  %v306 = vadd.f32 %v305, %v291
  %v307 = vadd.f32 %v306, %v292
  %v308 = vadd.f32 %v307, %v293
  %v309 = vadd.f32 %v308, %v294
  %v310 = vadd.f32 %v309, %v295
  %v311 = vadd.f32 %v310, %v296
  %v312 = vadd.f32 %v311, %v297
  %v313 = vadd.f32 %v312, %v298
  %v314 = vrot.slane %v313, 4
  %v315 = vadd.f32 %v313, %v314
  %v316 = vrot.slane %v315, 2
  %v317 = vadd.f32 %v315, %v316
  %v318 = vrot.slane %v317, 1
  %v319 = vadd.f32 %v317, %v318
  %320 = vst [vmem:[%s5 + $0x1] sm:$0x1] %v319
  // Predicated region
  $region18: #{resnet_unit_forward.10} parent=0 // pred_check
    _
  $region19: #{resnet_unit_forward.10} parent=0 // pred_check_branch
    %322 = sbr.rel (0) target = $region21
  $region20: #{resnet_unit_forward.10} parent=0 // pred_region
    _
  $region21: #{resnet_unit_forward.10} parent=0 // pred_fallthru
    _
  // Predicated region
  $region22: #{resnet_unit_forward.10} parent=0 // pred_check
    _
  $region23: #{resnet_unit_forward.10} parent=0 // pred_check_branch
    %324 = sbr.rel (0) target = $region25
  $region24: #{resnet_unit_forward.10} parent=0 // pred_region
    _
  $region25: #{resnet_unit_forward.10} parent=0 // pred_fallthru
    _
  // Predicated region
  $region26: #{resnet_unit_forward.10} parent=0 // pred_check
    _
  $region27: #{resnet_unit_forward.10} parent=0 // pred_check_branch
    %326 = sbr.rel (0) target = $region29
  $region28: #{resnet_unit_forward.10} parent=0 // pred_region
    _
  $region29: #{resnet_unit_forward.10} parent=0 // pred_fallthru
    _
  // Predicated region
  $region30: #{resnet_unit_forward.10} parent=0 // pred_check
    _
  $region31: #{resnet_unit_forward.10} parent=0 // pred_check_branch
    %328 = sbr.rel (0) target = $region33
  $region32: #{resnet_unit_forward.10} parent=0 // pred_region
    _
  $region33: #{resnet_unit_forward.10} parent=0 // pred_fallthru
    _

// kernel: resnet_unit_forward.11
$region0: #{resnet_unit_forward.11}
  #allocation0 [shape = 'u32[]', space=smem, size = 0x4, offset = 0x4, fixed_abs, tag = 'smem constant byte address 0x4 - core index']
  #allocation1 [shape = 'u32[144,128]{1,0:T(1,128)}', space=vmem, size = 0x12000, scoped, tag = 'internal scratch']
  %s0 = inlined_call_operand.vmem [shape: f32[128,128], index: 0, kind: input, shape index: {}]
  %s1 = inlined_call_operand.vmem [shape: f32[1,128], index: 1, kind: input, shape index: {}]
  %s2 = inlined_call_operand.vmem [shape: f32[1,128], index: 2, kind: input, shape index: {}]
  %s3 = inlined_call_operand.vmem [shape: f32[128,128], index: 3, kind: input, shape index: {}]
  %s4 = inlined_call_operand.vmem [shape: f32[1,128], index: 4, kind: input, shape index: {}]
  %s5 = inlined_call_operand.vmem [shape: f32[1,128], index: 5, kind: input, shape index: {}]
  %s6 = inlined_call_operand.hbm [shape: f32[128,128], index: 6, kind: output, shape index: {}]
  %s7 = sld [smem:[#allocation0]]
  $region34: #{resnet_unit_forward.11} parent=0
    _
  %s9 = ssub.s32 1, %s7
  %s10 = scalar_select 0, %s9, %s7
  $region1: #{resnet_unit_forward.11} parent=0
    #allocation2 [shape = 'u8[65536]{0}', space=vmem, size = 0x10000, scoped, tag = 'output window, operand 0, single buffered']
    #allocation3 [shape = 's32[1]{0}', space=sflag, size = 0x4, scoped, tag = 'scoped memory for resnet_unit_forward.11']
    %11 = vsyncpa [#allocation3], 0
    // Predicated region
    $region2: #{resnet_unit_forward.11} parent=1 // pred_check
      _
    $region3: #{resnet_unit_forward.11} parent=1 // pred_check_branch
      %13 = sbr.rel (0) target = $region5
    $region4: #{resnet_unit_forward.11} parent=1 // pred_region
      _
    $region5: #{resnet_unit_forward.11} parent=1 // pred_fallthru
      _
    // Predicated region
    $region6: #{resnet_unit_forward.11} parent=1 // pred_check
      _
    $region7: #{resnet_unit_forward.11} parent=1 // pred_check_branch
      %15 = sbr.rel (0) target = $region9
    $region8: #{resnet_unit_forward.11} parent=1 // pred_region
      _
    $region9: #{resnet_unit_forward.11} parent=1 // pred_fallthru
      _
    // Predicated region
    $region10: #{resnet_unit_forward.11} parent=1 // pred_check
      _
    $region11: #{resnet_unit_forward.11} parent=1 // pred_check_branch
      %17 = sbr.rel (0) target = $region13
    $region12: #{resnet_unit_forward.11} parent=1 // pred_region
      _
    $region13: #{resnet_unit_forward.11} parent=1 // pred_fallthru
      _
    // Predicated region
    $region14: #{resnet_unit_forward.11} parent=1 // pred_check
      _
    $region15: #{resnet_unit_forward.11} parent=1 // pred_check_branch
      %19 = sbr.rel (0) target = $region17
    $region16: #{resnet_unit_forward.11} parent=1 // pred_region
      _
    $region17: #{resnet_unit_forward.11} parent=1 // pred_fallthru
      _
    // Predicated region
    $region18: #{resnet_unit_forward.11} parent=1 // pred_check
      _
    $region19: #{resnet_unit_forward.11} parent=1 // pred_check_branch
      %21 = sbr.rel (0) target = $region21
    $region20: #{resnet_unit_forward.11} parent=1 // pred_region
      _
    $region21: #{resnet_unit_forward.11} parent=1 // pred_fallthru
      _
    // Predicated region
    $region22: #{resnet_unit_forward.11} parent=1 // pred_check
      _
    $region23: #{resnet_unit_forward.11} parent=1 // pred_check_branch
      %23 = sbr.rel (0) target = $region25
    $region24: #{resnet_unit_forward.11} parent=1 // pred_region
      _
    $region25: #{resnet_unit_forward.11} parent=1 // pred_fallthru
      _
    %v24 = vld [vmem:[%s0] sm:$0xff]
    %v25 = vld [vmem:[%s0 + $0x8] sm:$0xff]
    %v26 = vld [vmem:[%s0 + $0x10] sm:$0xff]
    %v27 = vld [vmem:[%s0 + $0x18] sm:$0xff]
    %v28 = vld [vmem:[%s0 + $0x20] sm:$0xff]
    %v29 = vld [vmem:[%s0 + $0x28] sm:$0xff]
    %v30 = vld [vmem:[%s0 + $0x30] sm:$0xff]
    %v31 = vld [vmem:[%s0 + $0x38] sm:$0xff]
    %v32 = vld [vmem:[%s0 + $0x40] sm:$0xff]
    %v33 = vld [vmem:[%s0 + $0x48] sm:$0xff]
    %v34 = vld [vmem:[%s0 + $0x50] sm:$0xff]
    %v35 = vld [vmem:[%s0 + $0x58] sm:$0xff]
    %v36 = vld [vmem:[%s0 + $0x60] sm:$0xff]
    %v37 = vld [vmem:[%s0 + $0x68] sm:$0xff]
    %v38 = vld [vmem:[%s0 + $0x70] sm:$0xff]
    %v39 = vld [vmem:[%s0 + $0x78] sm:$0xff]
    %v40 = vld [vmem:[%s1] sm:$0x1]
    %v42 = vlaneseq
    %v43 = vshrl.u32 %v42, 7
    %v44 = vsub.s32 0, %v43
    %v45 = vrot.slane %v40, %v44
    %v47 = vmul.f32 %v24, %v45
    %v48 = vmul.f32 %v25, %v45
    %v49 = vmul.f32 %v26, %v45
    %v50 = vmul.f32 %v27, %v45
    %v51 = vmul.f32 %v28, %v45
    %v52 = vmul.f32 %v29, %v45
    %v53 = vmul.f32 %v30, %v45
    %v54 = vmul.f32 %v31, %v45
    %v55 = vmul.f32 %v32, %v45
    %v56 = vmul.f32 %v33, %v45
    %v57 = vmul.f32 %v34, %v45
    %v58 = vmul.f32 %v35, %v45
    %v59 = vmul.f32 %v36, %v45
    %v60 = vmul.f32 %v37, %v45
    %v61 = vmul.f32 %v38, %v45
    %v62 = vmul.f32 %v39, %v45
    %v63 = vld [vmem:[%s2] sm:$0x1]
    %v65 = vlaneseq
    %v66 = vshrl.u32 %v65, 7
    %v67 = vsub.s32 0, %v66
    %v68 = vrot.slane %v63, %v67
    %v70 = vadd.f32 %v47, %v68
    %v71 = vadd.f32 %v48, %v68
    %v72 = vadd.f32 %v49, %v68
    %v73 = vadd.f32 %v50, %v68
    %v74 = vadd.f32 %v51, %v68
    %v75 = vadd.f32 %v52, %v68
    %v76 = vadd.f32 %v53, %v68
    %v77 = vadd.f32 %v54, %v68
    %v78 = vadd.f32 %v55, %v68
    %v79 = vadd.f32 %v56, %v68
    %v80 = vadd.f32 %v57, %v68
    %v81 = vadd.f32 %v58, %v68
    %v82 = vadd.f32 %v59, %v68
    %v83 = vadd.f32 %v60, %v68
    %v84 = vadd.f32 %v61, %v68
    %v85 = vadd.f32 %v62, %v68
    %v86 = vld [vmem:[%s3] sm:$0xff]
    %v87 = vld [vmem:[%s3 + $0x8] sm:$0xff]
    %v88 = vld [vmem:[%s3 + $0x10] sm:$0xff]
    %v89 = vld [vmem:[%s3 + $0x18] sm:$0xff]
    %v90 = vld [vmem:[%s3 + $0x20] sm:$0xff]
    %v91 = vld [vmem:[%s3 + $0x28] sm:$0xff]
    %v92 = vld [vmem:[%s3 + $0x30] sm:$0xff]
    %v93 = vld [vmem:[%s3 + $0x38] sm:$0xff]
    %v94 = vld [vmem:[%s3 + $0x40] sm:$0xff]
    %v95 = vld [vmem:[%s3 + $0x48] sm:$0xff]
    %v96 = vld [vmem:[%s3 + $0x50] sm:$0xff]
    %v97 = vld [vmem:[%s3 + $0x58] sm:$0xff]
    %v98 = vld [vmem:[%s3 + $0x60] sm:$0xff]
    %v99 = vld [vmem:[%s3 + $0x68] sm:$0xff]
    %v100 = vld [vmem:[%s3 + $0x70] sm:$0xff]
    %v101 = vld [vmem:[%s3 + $0x78] sm:$0xff]
    %v102 = vld [vmem:[%s4] sm:$0x1]
    %v104 = vlaneseq
    %v105 = vshrl.u32 %v104, 7
    %v106 = vsub.s32 0, %v105
    %v107 = vrot.slane %v102, %v106
    %v109 = vmul.f32 %v86, %v107
    %v110 = vmul.f32 %v87, %v107
    %v111 = vmul.f32 %v88, %v107
    %v112 = vmul.f32 %v89, %v107
    %v113 = vmul.f32 %v90, %v107
    %v114 = vmul.f32 %v91, %v107
    %v115 = vmul.f32 %v92, %v107
    %v116 = vmul.f32 %v93, %v107
    %v117 = vmul.f32 %v94, %v107
    %v118 = vmul.f32 %v95, %v107
    %v119 = vmul.f32 %v96, %v107
    %v120 = vmul.f32 %v97, %v107
    %v121 = vmul.f32 %v98, %v107
    %v122 = vmul.f32 %v99, %v107
    %v123 = vmul.f32 %v100, %v107
    %v124 = vmul.f32 %v101, %v107
    %v125 = vld [vmem:[%s5] sm:$0x1]
    %v127 = vlaneseq
    %v128 = vshrl.u32 %v127, 7
    %v129 = vsub.s32 0, %v128
    %v130 = vrot.slane %v125, %v129
    %v132 = vadd.f32 %v109, %v130
    %v133 = vadd.f32 %v110, %v130
    %v134 = vadd.f32 %v111, %v130
    %v135 = vadd.f32 %v112, %v130
    %v136 = vadd.f32 %v113, %v130
    %v137 = vadd.f32 %v114, %v130
    %v138 = vadd.f32 %v115, %v130
    %v139 = vadd.f32 %v116, %v130
    %v140 = vadd.f32 %v117, %v130
    %v141 = vadd.f32 %v118, %v130
    %v142 = vadd.f32 %v119, %v130
    %v143 = vadd.f32 %v120, %v130
    %v144 = vadd.f32 %v121, %v130
    %v145 = vadd.f32 %v122, %v130
    %v146 = vadd.f32 %v123, %v130
    %v147 = vadd.f32 %v124, %v130
    %v148 = vadd.f32 %v70, %v132
    %v149 = vadd.f32 %v71, %v133
    %v150 = vadd.f32 %v72, %v134
    %v151 = vadd.f32 %v73, %v135
    %v152 = vadd.f32 %v74, %v136
    %v153 = vadd.f32 %v75, %v137
    %v154 = vadd.f32 %v76, %v138
    %v155 = vadd.f32 %v77, %v139
    %v156 = vadd.f32 %v78, %v140
    %v157 = vadd.f32 %v79, %v141
    %v158 = vadd.f32 %v80, %v142
    %v159 = vadd.f32 %v81, %v143
    %v160 = vadd.f32 %v82, %v144
    %v161 = vadd.f32 %v83, %v145
    %v162 = vadd.f32 %v84, %v146
    %v163 = vadd.f32 %v85, %v147
    %v164 = vmax.f32 %v148, 0.0
    %v165 = vmax.f32 %v149, 0.0
    %v166 = vmax.f32 %v150, 0.0
    %v167 = vmax.f32 %v151, 0.0
    %v168 = vmax.f32 %v152, 0.0
    %v169 = vmax.f32 %v153, 0.0
    %v170 = vmax.f32 %v154, 0.0
    %v171 = vmax.f32 %v155, 0.0
    %v172 = vmax.f32 %v156, 0.0
    %v173 = vmax.f32 %v157, 0.0
    %v174 = vmax.f32 %v158, 0.0
    %v175 = vmax.f32 %v159, 0.0
    %v176 = vmax.f32 %v160, 0.0
    %v177 = vmax.f32 %v161, 0.0
    %v178 = vmax.f32 %v162, 0.0
    %v179 = vmax.f32 %v163, 0.0
    %180 = vst [vmem:[#allocation2] sm:$0xff] %v164
    %181 = vst [vmem:[#allocation2 + $0x8] sm:$0xff] %v165
    %182 = vst [vmem:[#allocation2 + $0x10] sm:$0xff] %v166
    %183 = vst [vmem:[#allocation2 + $0x18] sm:$0xff] %v167
    %184 = vst [vmem:[#allocation2 + $0x20] sm:$0xff] %v168
    %185 = vst [vmem:[#allocation2 + $0x28] sm:$0xff] %v169
    %186 = vst [vmem:[#allocation2 + $0x30] sm:$0xff] %v170
    %187 = vst [vmem:[#allocation2 + $0x38] sm:$0xff] %v171
    %188 = vst [vmem:[#allocation2 + $0x40] sm:$0xff] %v172
    %189 = vst [vmem:[#allocation2 + $0x48] sm:$0xff] %v173
    %190 = vst [vmem:[#allocation2 + $0x50] sm:$0xff] %v174
    %191 = vst [vmem:[#allocation2 + $0x58] sm:$0xff] %v175
    %192 = vst [vmem:[#allocation2 + $0x60] sm:$0xff] %v176
    %193 = vst [vmem:[#allocation2 + $0x68] sm:$0xff] %v177
    %194 = vst [vmem:[#allocation2 + $0x70] sm:$0xff] %v178
    %195 = vst [vmem:[#allocation2 + $0x78] sm:$0xff] %v179
    // Predicated region
    $region26: #{resnet_unit_forward.11} parent=1 // pred_check
      _
    $region27: #{resnet_unit_forward.11} parent=1 // pred_check_branch
      %197 = sbr.rel (0) target = $region29
    $region28: #{resnet_unit_forward.11} parent=1 // pred_region
      %s199 = ssub.s32 2048, 2048
      %200 = vsyncadd [#allocation3], %s199
      %s201 = sshll.u32 [#allocation2], 4
      %s202 = int_to_ptr.vmem [resolvable:$true] %s201
      %207 = dma.vmem_to_hbm [thread:$0]  %s202, 2048, %s6, [#allocation3], 128, 128, 8
    $region29: #{resnet_unit_forward.11} parent=1 // pred_fallthru
      _
    // Predicated region
    $region30: #{resnet_unit_forward.11} parent=1 // pred_check
      _
    $region31: #{resnet_unit_forward.11} parent=1 // pred_check_branch
      %209 = sbr.rel (0) target = $region33
    $region32: #{resnet_unit_forward.11} parent=1 // pred_region
      %210 = dma.done [#allocation3], 2048
    $region33: #{resnet_unit_forward.11} parent=1 // pred_fallthru
      _
    %211 = vsyncpa [#allocation3], 1

</llo_original>
